<compile_context>
chip_gen: v6e
topology: v6e:2x2x1
jax: 0.10.0
libtpu: 0.0.40
codegen_flags: <defaults>
</compile_context>

<pallas_src>
import jax
import jax.numpy as jnp
from jax import lax
from jax.experimental import pallas as pl
from jax.experimental.pallas import tpu as pltpu

# ----------------------------- config (small, consistent with the module) ----
LEAK_VALUE = 0.1
NUM_ATOM_TYPES = 8
BN_EPS = 1e-5

LATENT_SIZE = 32
DEC_LAT_FC_SIZE = 32
ATOM_EMBED_SIZE = 16
ATOM_ENC_SIZE = 32
DEC_FINAL_ENC_SIZE = 32
NUM_GRU_LAYERS = 2       # cfg.num_gru_layers (kernel below is specialized to 2)
NUM_GRU_DIRECTIONS = 1   # cfg.num_gru_directions (unidirectional)

BATCH = 2
MAX_ATOMS = 16


# ----------------------------- fused kernel ----------------------------------
def _fused_decoder_kernel(
    z_ref, oh_ref, attn_ref,
    latw_ref, latb_ref,
    enc1w_ref, enc1b_ref,
    enc2wt_ref, enc2wb_ref, enc2b_ref,
    g0_wih_ref, g0_bih_ref,
    wrec_ref, brec_ref,
    out_ref,
):
    f32 = jnp.float32
    BN = oh_ref.shape[0]
    B = z_ref.shape[0]
    N = BN // B
    H = out_ref.shape[1] // N
    H3 = 3 * H

    def leaky(v):
        return jnp.where(v > 0, v, LEAK_VALUE * v)

    # ---- lat_fc: Linear(no bias) + folded eval-mode BatchNorm + LeakyReLU ----
    lat = leaky(jnp.dot(z_ref[...], latw_ref[...], preferred_element_type=f32)
                + latb_ref[...])                                        # (B, LAT_FC)

    # Block-diagonal, row-normalized bond attention (time-major rows), built in wrapper.
    attn = attn_ref[...]                                                # (BN, BN)

    # ---- AtnFlat #1: embedding folded into enc1 weights ----------------------
    h1 = leaky(jnp.dot(oh_ref[...], enc1w_ref[...], preferred_element_type=f32)
               + enc1b_ref[...])                                        # (BN, ENC)
    enc1 = jnp.dot(attn, h1, preferred_element_type=f32) + h1           # residual

    # ---- AtnFlat #2 on concat([atom_enc, lat]) with split weights -------------
    lat_proj = jnp.dot(lat, enc2wb_ref[...], preferred_element_type=f32)  # (B, FINAL)
    # selector matmul: time-major row r belongs to batch r % B
    r_ids = lax.broadcasted_iota(jnp.int32, (BN, B), 0)
    c_ids = lax.broadcasted_iota(jnp.int32, (BN, B), 1)
    sel = ((r_ids % B) == c_ids).astype(f32)                            # (BN, B)
    lat_rows = jnp.dot(sel, lat_proj, preferred_element_type=f32)       # (BN, FINAL)
    h2 = leaky(jnp.dot(enc1, enc2wt_ref[...], preferred_element_type=f32)
               + lat_rows + enc2b_ref[...])                             # (BN, FINAL)
    final = jnp.dot(attn, h2, preferred_element_type=f32) + h2          # (BN, FINAL)

    # ---- 2-layer GRU over atoms (batch_first, h0 = 0) --------------------------
    # layer-0 input projections for ALL steps hoisted out of the recurrence;
    # rows are time-major so each step reads a contiguous (B, 3H) slice.
    gx0_all = (jnp.dot(final, g0_wih_ref[...], preferred_element_type=f32)
               + g0_bih_ref[...])                                       # (BN, 3H)

    w_rec = wrec_ref[...]                                               # (2H, 9H)
    b_rec = brec_ref[...]                                               # (1, 9H) = [bih1|bhh0|bhh1]

    def gru_cell(gx, gh, h_prev):
        # gate order along lanes: [r | z | n] (PyTorch order)
        r = jax.nn.sigmoid(gx[:, 0:H] + gh[:, 0:H])
        u = jax.nn.sigmoid(gx[:, H:2 * H] + gh[:, H:2 * H])
        n = jnp.tanh(gx[:, 2 * H:3 * H] + r * gh[:, 2 * H:3 * H])
        return (1.0 - u) * n + u * h_prev

    h_l0 = jnp.zeros((B, H), f32)
    h_l1 = jnp.zeros((B, H), f32)
    gh0 = jnp.broadcast_to(b_rec[:, H3:2 * H3], (B, H3))   # h_l0(-1) = 0 -> gh0(0) = bhh0

    for t in range(N):                       # fully unrolled: N is static & small
        gx0_t = gx0_all[t * B:(t + 1) * B, :]                           # (B, 3H)
        h_l0 = gru_cell(gx0_t, gh0, h_l0)                               # layer 0, step t
        # ONE fused matmul: [h_l0(t) | h_l1(t-1)] @ [[wih1|whh0|0],[0|0|whh1]]
        hcat = jnp.concatenate([h_l0, h_l1], axis=-1)                   # (B, 2H)
        fused = jnp.dot(hcat, w_rec, preferred_element_type=f32) + b_rec  # (B, 9H)
        gx1 = fused[:, 0:H3]                 # = h_l0(t) @ wih1 + bih1     (this step)
        gh0 = fused[:, H3:2 * H3]            # = h_l0(t) @ whh0 + bhh0     (next step)
        gh1 = fused[:, 2 * H3:3 * H3]        # = h_l1(t-1) @ whh1 + bhh1   (this step)
        h_l1 = gru_cell(gx1, gh1, h_l1)                                 # layer 1, step t
        out_ref[:, t * H:(t + 1) * H] = h_l1                            # per-step store


# ----------------------------- parameters ------------------------------------
def init_params(key):
    ks = list(jax.random.split(key, 8 + 2 * NUM_GRU_LAYERS))
    p = {
        "lat_w": jax.random.normal(ks[0], (LATENT_SIZE, DEC_LAT_FC_SIZE), jnp.float32) * 0.1,
        "lat_bn_gamma": jnp.ones((1, DEC_LAT_FC_SIZE), jnp.float32),
        "lat_bn_beta": jnp.zeros((1, DEC_LAT_FC_SIZE), jnp.float32),
        "lat_bn_mean": jnp.zeros((1, DEC_LAT_FC_SIZE), jnp.float32),
        "lat_bn_var": jnp.ones((1, DEC_LAT_FC_SIZE), jnp.float32),
        "embed": jax.random.normal(ks[1], (NUM_ATOM_TYPES, ATOM_EMBED_SIZE), jnp.float32) * 0.1,
        "enc1_w": jax.random.normal(ks[2], (ATOM_EMBED_SIZE, ATOM_ENC_SIZE), jnp.float32) * 0.1,
        "enc1_b": jnp.zeros((1, ATOM_ENC_SIZE), jnp.float32),
        "enc2_w": jax.random.normal(
            ks[3], (ATOM_ENC_SIZE + DEC_LAT_FC_SIZE, DEC_FINAL_ENC_SIZE), jnp.float32) * 0.1,
        "enc2_b": jnp.zeros((1, DEC_FINAL_ENC_SIZE), jnp.float32),
    }
    gru = []
    in_size = DEC_FINAL_ENC_SIZE
    hidden = NUM_ATOM_TYPES
    kidx = 4
    for _ in range(NUM_GRU_LAYERS):
        wih = jax.random.normal(ks[kidx], (3, in_size, hidden), jnp.float32) * 0.1
        whh = jax.random.normal(ks[kidx + 1], (3, hidden, hidden), jnp.float32) * 0.1
        bih = jnp.zeros((3, 1, hidden), jnp.float32)
        bhh = jnp.zeros((3, 1, hidden), jnp.float32)
        gru.append((wih, whh, bih, bhh))
        in_size = hidden * NUM_GRU_DIRECTIONS
        kidx += 2
    p["gru"] = gru
    return p


def prepare_params(p):
    """One-time weight prep: fold BN into lat_fc, fold embed into enc1, split enc2,
    fuse GRU gates and build the (2H, 9H) block-recurrent matrix."""
    H = NUM_ATOM_TYPES
    H3 = 3 * H
    scale = p["lat_bn_gamma"] * lax.rsqrt(p["lat_bn_var"] + BN_EPS)       # (1, LAT_FC)

    def cat_g(w):  # (3, A, H) -> (A, 3H), gate order r|z|n
        return jnp.concatenate([w[0], w[1], w[2]], axis=-1)

    (wih0, whh0, bih0, bhh0) = p["gru"][0]
    (wih1, whh1, bih1, bhh1) = p["gru"][1]
    g0_wih, g0_whh = cat_g(wih0), cat_g(whh0)     # (In, 3H), (H, 3H)
    g0_bih, g0_bhh = cat_g(bih0), cat_g(bhh0)     # (1, 3H)
    g1_wih, g1_whh = cat_g(wih1), cat_g(whh1)     # (H, 3H)
    g1_bih, g1_bhh = cat_g(bih1), cat_g(bhh1)

    zeros = jnp.zeros((H, H3), jnp.float32)
    w_rec = jnp.concatenate([
        jnp.concatenate([g1_wih, g0_whh, zeros], axis=1),   # rows for h_l0
        jnp.concatenate([zeros, zeros, g1_whh], axis=1),    # rows for h_l1
    ], axis=0)                                              # (2H, 9H)
    b_rec = jnp.concatenate([g1_bih, g0_bhh, g1_bhh], axis=1)  # (1, 9H)

    return {
        "lat_w": p["lat_w"] * scale,                                      # cols scaled by BN
        "lat_b": p["lat_bn_beta"] - p["lat_bn_mean"] * scale,
        "enc1_wf": p["embed"] @ p["enc1_w"],                              # (T, ENC) embed folded
        "enc1_b": p["enc1_b"],
        "enc2_w_top": p["enc2_w"][:ATOM_ENC_SIZE, :],                     # atom_enc part
        "enc2_w_bot": p["enc2_w"][ATOM_ENC_SIZE:, :],                     # lat part
        "enc2_b": p["enc2_b"],
        "g0_wih": g0_wih,
        "g0_bih": g0_bih,
        "w_rec": w_rec,
        "b_rec": b_rec,
    }


# ----------------------------- forward (single pallas_call) -------------------
def recur_atn_decoder_forward(fp, z, atom_types, bonds):
    # NOTE: the PyTorch `if tmol is None: return TensorMol()` branch is host-side
    # control flow (empty container); here tmol == (atom_types, bonds) is always given.
    b, n = atom_types.shape
    h = NUM_ATOM_TYPES
    bn = b * n

    # time-major (rows r = t*B + b) lane-dense one-hot of atom types
    onehot_tm = jax.nn.one_hot(jnp.transpose(atom_types).reshape(bn),
                               NUM_ATOM_TYPES, dtype=jnp.float32)          # (BN, T)

    # row-normalized fixed bond attention, assembled block-diagonal in time-major order
    denom = jnp.maximum(bonds.sum(-1, keepdims=True), 1.0)
    attn = bonds / denom                                                   # (B, N, N)
    eye_b = jnp.eye(b, dtype=jnp.float32)
    attn_tm = (jnp.transpose(attn, (1, 0, 2))[:, :, :, None]
               * eye_b[None, :, None, :]).reshape(bn, bn)                  # (BN, BN)

    vmem_spec = pl.BlockSpec(memory_space=pltpu.MemorySpace.VMEM)

    out_flat = pl.pallas_call(
        _fused_decoder_kernel,
        out_shape=jax.ShapeDtypeStruct((b, n * h), jnp.float32),
        in_specs=[vmem_spec] * 14,
        out_specs=vmem_spec,
    )(z, onehot_tm, attn_tm,
      fp["lat_w"], fp["lat_b"],
      fp["enc1_wf"], fp["enc1_b"],
      fp["enc2_w_top"], fp["enc2_w_bot"], fp["enc2_b"],
      fp["g0_wih"], fp["g0_bih"],
      fp["w_rec"], fp["b_rec"])

    return out_flat.reshape(b, n, h)


# ----------------------------- pure-JAX reference ------------------------------
def reference_forward(p, z, atom_types, bonds):
    b, n = atom_types.shape
    scale = p["lat_bn_gamma"] * lax.rsqrt(p["lat_bn_var"] + BN_EPS)
    lat = z @ p["lat_w"]
    lat = (lat - p["lat_bn_mean"]) * scale + p["lat_bn_beta"]
    lat = jnp.where(lat > 0, lat, LEAK_VALUE * lat)

    emb = p["embed"][atom_types]                                        # (B, N, E)

    denom = jnp.maximum(bonds.sum(-1, keepdims=True), 1.0)
    attn = bonds / denom

    def atn_flat(x, w, bias):
        hh = jnp.einsum("bnf,fg->bng", x, w) + bias
        hh = jnp.where(hh > 0, hh, LEAK_VALUE * hh)
        return jnp.einsum("bij,bjf->bif", attn, hh) + hh

    enc1 = atn_flat(emb, p["enc1_w"], p["enc1_b"])
    lat_b = jnp.broadcast_to(lat[:, None, :], (b, n, lat.shape[-1]))
    cat = jnp.concatenate([enc1, lat_b], axis=-1)
    x = atn_flat(cat, p["enc2_w"], p["enc2_b"])

    for (wih, whh, bih, bhh) in p["gru"]:
        def step(h_prev, x_t):
            r = jax.nn.sigmoid(x_t @ wih[0] + bih[0] + h_prev @ whh[0] + bhh[0])
            u = jax.nn.sigmoid(x_t @ wih[1] + bih[1] + h_prev @ whh[1] + bhh[1])
            ng = jnp.tanh(x_t @ wih[2] + bih[2] + r * (h_prev @ whh[2] + bhh[2]))
            h_new = (1.0 - u) * ng + u * h_prev
            return h_new, h_new
        h0 = jnp.zeros((b, NUM_ATOM_TYPES), jnp.float32)
        _, ys = lax.scan(step, h0, jnp.swapaxes(x, 0, 1))
        x = jnp.swapaxes(ys, 0, 1)
    return x


# ----------------------------- main -------------------------------------------
if __name__ == "__main__":
    key = jax.random.PRNGKey(0)
    k_param, k_z, k_at, k_bond = jax.random.split(key, 4)

    raw_params = init_params(k_param)
    fused_params = prepare_params(raw_params)

    z = jax.random.normal(k_z, (BATCH, LATENT_SIZE), jnp.float32)
    atom_types = jax.random.randint(k_at, (BATCH, MAX_ATOMS), 0, NUM_ATOM_TYPES, jnp.int32)
    # symmetric 0/1 bond adjacency (no self loops)
    raw = jax.random.uniform(k_bond, (BATCH, MAX_ATOMS, MAX_ATOMS)) < 0.2
    adj = jnp.logical_or(raw, jnp.swapaxes(raw, 1, 2)).astype(jnp.float32)
    eye = jnp.eye(MAX_ATOMS, dtype=jnp.float32)[None]
    bonds = adj * (1.0 - eye)

    fwd = jax.jit(recur_atn_decoder_forward)
    out = fwd(fused_params, z, atom_types, bonds)
    out = jax.block_until_ready(out)

    ref = reference_forward(raw_params, z, atom_types, bonds)

    assert out.shape == (BATCH, MAX_ATOMS, NUM_ATOM_TYPES)
    assert bool(jnp.all(jnp.isfinite(out)))
    max_err = float(jnp.max(jnp.abs(out - ref)))
    assert max_err < 5e-2, f"kernel mismatch vs reference: max_err={max_err}"
    print("KERNEL_OK")
</pallas_src>

<mosaic_0001>
module attributes {stable_mosaic.version = 11 : i64} {
  func.func @_fused_decoder_kernel(%arg0: memref<2x32xf32, #tpu.memory_space<vmem>>, %arg1: memref<32x8xf32, #tpu.memory_space<vmem>>, %arg2: memref<32x32xf32, #tpu.memory_space<vmem>>, %arg3: memref<32x32xf32, #tpu.memory_space<vmem>>, %arg4: memref<1x32xf32, #tpu.memory_space<vmem>>, %arg5: memref<8x32xf32, #tpu.memory_space<vmem>>, %arg6: memref<1x32xf32, #tpu.memory_space<vmem>>, %arg7: memref<32x32xf32, #tpu.memory_space<vmem>>, %arg8: memref<32x32xf32, #tpu.memory_space<vmem>>, %arg9: memref<1x32xf32, #tpu.memory_space<vmem>>, %arg10: memref<32x24xf32, #tpu.memory_space<vmem>>, %arg11: memref<1x24xf32, #tpu.memory_space<vmem>>, %arg12: memref<16x72xf32, #tpu.memory_space<vmem>>, %arg13: memref<1x72xf32, #tpu.memory_space<vmem>>, %arg14: memref<2x128xf32, #tpu.memory_space<vmem>>) attributes {dimension_semantics = [], scalar_prefetch = 0 : i64, scratch_operands = 0 : i64, tpu.core_type = #tpu.core_type<tc>} {
    %c0 = arith.constant 0 : index
    %c0_0 = arith.constant 0 : index
    %0 = vector.load %arg0[%c0, %c0_0] : memref<2x32xf32, #tpu.memory_space<vmem>>, vector<2x32xf32>
    %c0_1 = arith.constant 0 : index
    %c0_2 = arith.constant 0 : index
    %1 = vector.load %arg3[%c0_1, %c0_2] : memref<32x32xf32, #tpu.memory_space<vmem>>, vector<32x32xf32>
    %cst = arith.constant dense<0.000000e+00> : vector<2x32xf32>
    %2 = tpu.matmul %0, %1, %cst {dimension_numbers = #tpu.dot_dimension_numbers<[1], [0], [0], [1], [0, 0, 1, 1], [], []>} : vector<2x32xf32>, vector<32x32xf32>, vector<2x32xf32> -> vector<2x32xf32>
    %c0_3 = arith.constant 0 : index
    %c0_4 = arith.constant 0 : index
    %3 = vector.load %arg4[%c0_3, %c0_4] : memref<1x32xf32, #tpu.memory_space<vmem>>, vector<1x32xf32>
    %4 = vector.broadcast %3 : vector<1x32xf32> to vector<2x32xf32>
    %5 = arith.addf %2, %4 : vector<2x32xf32>
    %cst_5 = arith.constant 0.000000e+00 : f32
    %6 = vector.broadcast %cst_5 : f32 to vector<2x32xf32>
    %7 = arith.cmpf ogt, %5, %6 : vector<2x32xf32>
    %cst_6 = arith.constant 1.000000e-01 : f32
    %8 = vector.broadcast %cst_6 : f32 to vector<2x32xf32>
    %9 = arith.mulf %8, %5 : vector<2x32xf32>
    %10 = arith.select %7, %5, %9 : vector<2x32xi1>, vector<2x32xf32>
    %c0_7 = arith.constant 0 : index
    %c0_8 = arith.constant 0 : index
    %11 = vector.load %arg2[%c0_7, %c0_8] : memref<32x32xf32, #tpu.memory_space<vmem>>, vector<32x32xf32>
    %c0_9 = arith.constant 0 : index
    %c0_10 = arith.constant 0 : index
    %12 = vector.load %arg1[%c0_9, %c0_10] : memref<32x8xf32, #tpu.memory_space<vmem>>, vector<32x8xf32>
    %c0_11 = arith.constant 0 : index
    %c0_12 = arith.constant 0 : index
    %13 = vector.load %arg5[%c0_11, %c0_12] : memref<8x32xf32, #tpu.memory_space<vmem>>, vector<8x32xf32>
    %cst_13 = arith.constant dense<0.000000e+00> : vector<32x32xf32>
    %14 = tpu.matmul %12, %13, %cst_13 {dimension_numbers = #tpu.dot_dimension_numbers<[1], [0], [0], [1], [0, 0, 1, 1], [], []>} : vector<32x8xf32>, vector<8x32xf32>, vector<32x32xf32> -> vector<32x32xf32>
    %c0_14 = arith.constant 0 : index
    %c0_15 = arith.constant 0 : index
    %15 = vector.load %arg6[%c0_14, %c0_15] : memref<1x32xf32, #tpu.memory_space<vmem>>, vector<1x32xf32>
    %16 = vector.broadcast %15 : vector<1x32xf32> to vector<32x32xf32>
    %17 = arith.addf %14, %16 : vector<32x32xf32>
    %cst_16 = arith.constant 0.000000e+00 : f32
    %18 = vector.broadcast %cst_16 : f32 to vector<32x32xf32>
    %19 = arith.cmpf ogt, %17, %18 : vector<32x32xf32>
    %cst_17 = arith.constant 1.000000e-01 : f32
    %20 = vector.broadcast %cst_17 : f32 to vector<32x32xf32>
    %21 = arith.mulf %20, %17 : vector<32x32xf32>
    %22 = arith.select %19, %17, %21 : vector<32x32xi1>, vector<32x32xf32>
    %cst_18 = arith.constant dense<0.000000e+00> : vector<32x32xf32>
    %23 = tpu.matmul %11, %22, %cst_18 {dimension_numbers = #tpu.dot_dimension_numbers<[1], [0], [0], [1], [0, 0, 1, 1], [], []>} : vector<32x32xf32>, vector<32x32xf32>, vector<32x32xf32> -> vector<32x32xf32>
    %24 = arith.addf %23, %22 : vector<32x32xf32>
    %c0_19 = arith.constant 0 : index
    %c0_20 = arith.constant 0 : index
    %25 = vector.load %arg8[%c0_19, %c0_20] : memref<32x32xf32, #tpu.memory_space<vmem>>, vector<32x32xf32>
    %cst_21 = arith.constant dense<0.000000e+00> : vector<2x32xf32>
    %26 = tpu.matmul %10, %25, %cst_21 {dimension_numbers = #tpu.dot_dimension_numbers<[1], [0], [0], [1], [0, 0, 1, 1], [], []>} : vector<2x32xf32>, vector<32x32xf32>, vector<2x32xf32> -> vector<2x32xf32>
    %27 = tpu.iota {dimensions = array<i32: 0>} : vector<32x2xi32>
    %28 = tpu.iota {dimensions = array<i32: 1>} : vector<32x2xi32>
    %c2_i32 = arith.constant 2 : i32
    %c0_i32 = arith.constant 0 : i32
    %29 = arith.cmpi eq, %c2_i32, %c0_i32 : i32
    %c1_i32 = arith.constant 1 : i32
    %30 = arith.select %29, %c1_i32, %c2_i32 : i32
    %31 = vector.broadcast %30 : i32 to vector<32x2xi32>
    %32 = arith.remsi %27, %31 : vector<32x2xi32>
    %c0_i32_22 = arith.constant 0 : i32
    %33 = vector.broadcast %c0_i32_22 : i32 to vector<32x2xi32>
    %34 = arith.cmpi ne, %32, %33 : vector<32x2xi32>
    %c0_i32_23 = arith.constant 0 : i32
    %35 = vector.broadcast %c0_i32_23 : i32 to vector<32x2xi32>
    %36 = arith.cmpi slt, %32, %35 : vector<32x2xi32>
    %c0_i32_24 = arith.constant 0 : i32
    %37 = arith.cmpi slt, %30, %c0_i32_24 : i32
    %38 = vector.broadcast %37 : i1 to vector<32x2xi1>
    %39 = vector.broadcast %38 : vector<32x2xi1> to vector<32x2xi1>
    %40 = arith.xori %36, %39 : vector<32x2xi1>
    %41 = arith.andi %40, %34 : vector<32x2xi1>
    %42 = vector.broadcast %30 : i32 to vector<32x2xi32>
    %43 = arith.addi %32, %42 : vector<32x2xi32>
    %44 = arith.select %41, %43, %32 : vector<32x2xi1>, vector<32x2xi32>
    %45 = arith.cmpi eq, %44, %28 : vector<32x2xi32>
    %46 = arith.extui %45 : vector<32x2xi1> to vector<32x2xi32>
    %47 = arith.sitofp %46 : vector<32x2xi32> to vector<32x2xf32>
    %cst_25 = arith.constant dense<0.000000e+00> : vector<32x32xf32>
    %48 = tpu.matmul %47, %26, %cst_25 {dimension_numbers = #tpu.dot_dimension_numbers<[1], [0], [0], [1], [0, 0, 1, 1], [], []>} : vector<32x2xf32>, vector<2x32xf32>, vector<32x32xf32> -> vector<32x32xf32>
    %c0_26 = arith.constant 0 : index
    %c0_27 = arith.constant 0 : index
    %49 = vector.load %arg7[%c0_26, %c0_27] : memref<32x32xf32, #tpu.memory_space<vmem>>, vector<32x32xf32>
    %cst_28 = arith.constant dense<0.000000e+00> : vector<32x32xf32>
    %50 = tpu.matmul %24, %49, %cst_28 {dimension_numbers = #tpu.dot_dimension_numbers<[1], [0], [0], [1], [0, 0, 1, 1], [], []>} : vector<32x32xf32>, vector<32x32xf32>, vector<32x32xf32> -> vector<32x32xf32>
    %51 = arith.addf %50, %48 : vector<32x32xf32>
    %c0_29 = arith.constant 0 : index
    %c0_30 = arith.constant 0 : index
    %52 = vector.load %arg9[%c0_29, %c0_30] : memref<1x32xf32, #tpu.memory_space<vmem>>, vector<1x32xf32>
    %53 = vector.broadcast %52 : vector<1x32xf32> to vector<32x32xf32>
    %54 = arith.addf %51, %53 : vector<32x32xf32>
    %cst_31 = arith.constant 0.000000e+00 : f32
    %55 = vector.broadcast %cst_31 : f32 to vector<32x32xf32>
    %56 = arith.cmpf ogt, %54, %55 : vector<32x32xf32>
    %cst_32 = arith.constant 1.000000e-01 : f32
    %57 = vector.broadcast %cst_32 : f32 to vector<32x32xf32>
    %58 = arith.mulf %57, %54 : vector<32x32xf32>
    %59 = arith.select %56, %54, %58 : vector<32x32xi1>, vector<32x32xf32>
    %cst_33 = arith.constant dense<0.000000e+00> : vector<32x32xf32>
    %60 = tpu.matmul %11, %59, %cst_33 {dimension_numbers = #tpu.dot_dimension_numbers<[1], [0], [0], [1], [0, 0, 1, 1], [], []>} : vector<32x32xf32>, vector<32x32xf32>, vector<32x32xf32> -> vector<32x32xf32>
    %61 = arith.addf %60, %59 : vector<32x32xf32>
    %c0_34 = arith.constant 0 : index
    %c0_35 = arith.constant 0 : index
    %62 = vector.load %arg10[%c0_34, %c0_35] : memref<32x24xf32, #tpu.memory_space<vmem>>, vector<32x24xf32>
    %cst_36 = arith.constant dense<0.000000e+00> : vector<32x24xf32>
    %63 = tpu.matmul %61, %62, %cst_36 {dimension_numbers = #tpu.dot_dimension_numbers<[1], [0], [0], [1], [0, 0, 1, 1], [], []>} : vector<32x32xf32>, vector<32x24xf32>, vector<32x24xf32> -> vector<32x24xf32>
    %c0_37 = arith.constant 0 : index
    %c0_38 = arith.constant 0 : index
    %64 = vector.load %arg11[%c0_37, %c0_38] : memref<1x24xf32, #tpu.memory_space<vmem>>, vector<1x24xf32>
    %65 = vector.broadcast %64 : vector<1x24xf32> to vector<32x24xf32>
    %66 = arith.addf %63, %65 : vector<32x24xf32>
    %c0_39 = arith.constant 0 : index
    %c0_40 = arith.constant 0 : index
    %67 = vector.load %arg12[%c0_39, %c0_40] : memref<16x72xf32, #tpu.memory_space<vmem>>, vector<16x72xf32>
    %c0_41 = arith.constant 0 : index
    %c0_42 = arith.constant 0 : index
    %68 = vector.load %arg13[%c0_41, %c0_42] : memref<1x72xf32, #tpu.memory_space<vmem>>, vector<1x72xf32>
    %cst_43 = arith.constant 0.000000e+00 : f32
    %69 = vector.broadcast %cst_43 : f32 to vector<2x8xf32>
    %cst_44 = arith.constant 0.000000e+00 : f32
    %70 = vector.broadcast %cst_44 : f32 to vector<2x8xf32>
    %71 = vector.extract_strided_slice %68 {offsets = [0, 24], sizes = [1, 24], strides = [1, 1]} : vector<1x72xf32> to vector<1x24xf32>
    %72 = vector.shape_cast %71 : vector<1x24xf32> to vector<1x24xf32>
    %73 = vector.broadcast %72 : vector<1x24xf32> to vector<2x24xf32>
    %74 = vector.extract_strided_slice %66 {offsets = [0, 0], sizes = [2, 24], strides = [1, 1]} : vector<32x24xf32> to vector<2x24xf32>
    %75 = vector.extract_strided_slice %74 {offsets = [0, 0], sizes = [2, 8], strides = [1, 1]} : vector<2x24xf32> to vector<2x8xf32>
    %76 = vector.extract_strided_slice %73 {offsets = [0, 0], sizes = [2, 8], strides = [1, 1]} : vector<2x24xf32> to vector<2x8xf32>
    %77 = arith.addf %75, %76 : vector<2x8xf32>
    %78 = arith.negf %77 : vector<2x8xf32>
    %79 = math.exp %78 : vector<2x8xf32>
    %cst_45 = arith.constant 1.000000e+00 : f32
    %80 = vector.broadcast %cst_45 : f32 to vector<2x8xf32>
    %81 = arith.addf %80, %79 : vector<2x8xf32>
    %82 = arith.divf %80, %81 : vector<2x8xf32>
    %83 = vector.extract_strided_slice %74 {offsets = [0, 8], sizes = [2, 8], strides = [1, 1]} : vector<2x24xf32> to vector<2x8xf32>
    %84 = vector.extract_strided_slice %73 {offsets = [0, 8], sizes = [2, 8], strides = [1, 1]} : vector<2x24xf32> to vector<2x8xf32>
    %85 = arith.addf %83, %84 : vector<2x8xf32>
    %86 = arith.negf %85 : vector<2x8xf32>
    %87 = math.exp %86 : vector<2x8xf32>
    %cst_46 = arith.constant 1.000000e+00 : f32
    %88 = vector.broadcast %cst_46 : f32 to vector<2x8xf32>
    %89 = arith.addf %88, %87 : vector<2x8xf32>
    %90 = arith.divf %88, %89 : vector<2x8xf32>
    %91 = vector.extract_strided_slice %74 {offsets = [0, 16], sizes = [2, 8], strides = [1, 1]} : vector<2x24xf32> to vector<2x8xf32>
    %92 = vector.extract_strided_slice %73 {offsets = [0, 16], sizes = [2, 8], strides = [1, 1]} : vector<2x24xf32> to vector<2x8xf32>
    %93 = arith.mulf %82, %92 : vector<2x8xf32>
    %94 = arith.addf %91, %93 : vector<2x8xf32>
    %95 = math.tanh %94 : vector<2x8xf32>
    %cst_47 = arith.constant 1.000000e+00 : f32
    %96 = vector.broadcast %cst_47 : f32 to vector<2x8xf32>
    %97 = arith.subf %96, %90 : vector<2x8xf32>
    %98 = arith.mulf %97, %95 : vector<2x8xf32>
    %99 = arith.mulf %90, %69 : vector<2x8xf32>
    %100 = arith.addf %98, %99 : vector<2x8xf32>
    %101 = tpu.concatenate %100, %70 in 1 : vector<2x8xf32>, vector<2x8xf32> -> vector<2x16xf32>
    %cst_48 = arith.constant dense<0.000000e+00> : vector<2x72xf32>
    %102 = tpu.matmul %101, %67, %cst_48 {dimension_numbers = #tpu.dot_dimension_numbers<[1], [0], [0], [1], [0, 0, 1, 1], [], []>} : vector<2x16xf32>, vector<16x72xf32>, vector<2x72xf32> -> vector<2x72xf32>
    %103 = vector.broadcast %68 : vector<1x72xf32> to vector<2x72xf32>
    %104 = arith.addf %102, %103 : vector<2x72xf32>
    %105 = vector.extract_strided_slice %104 {offsets = [0, 0], sizes = [2, 24], strides = [1, 1]} : vector<2x72xf32> to vector<2x24xf32>
    %106 = vector.extract_strided_slice %104 {offsets = [0, 24], sizes = [2, 24], strides = [1, 1]} : vector<2x72xf32> to vector<2x24xf32>
    %107 = vector.extract_strided_slice %104 {offsets = [0, 48], sizes = [2, 24], strides = [1, 1]} : vector<2x72xf32> to vector<2x24xf32>
    %108 = vector.extract_strided_slice %105 {offsets = [0, 0], sizes = [2, 8], strides = [1, 1]} : vector<2x24xf32> to vector<2x8xf32>
    %109 = vector.extract_strided_slice %107 {offsets = [0, 0], sizes = [2, 8], strides = [1, 1]} : vector<2x24xf32> to vector<2x8xf32>
    %110 = arith.addf %108, %109 : vector<2x8xf32>
    %111 = arith.negf %110 : vector<2x8xf32>
    %112 = math.exp %111 : vector<2x8xf32>
    %cst_49 = arith.constant 1.000000e+00 : f32
    %113 = vector.broadcast %cst_49 : f32 to vector<2x8xf32>
    %114 = arith.addf %113, %112 : vector<2x8xf32>
    %115 = arith.divf %113, %114 : vector<2x8xf32>
    %116 = vector.extract_strided_slice %105 {offsets = [0, 8], sizes = [2, 8], strides = [1, 1]} : vector<2x24xf32> to vector<2x8xf32>
    %117 = vector.extract_strided_slice %107 {offsets = [0, 8], sizes = [2, 8], strides = [1, 1]} : vector<2x24xf32> to vector<2x8xf32>
    %118 = arith.addf %116, %117 : vector<2x8xf32>
    %119 = arith.negf %118 : vector<2x8xf32>
    %120 = math.exp %119 : vector<2x8xf32>
    %cst_50 = arith.constant 1.000000e+00 : f32
    %121 = vector.broadcast %cst_50 : f32 to vector<2x8xf32>
    %122 = arith.addf %121, %120 : vector<2x8xf32>
    %123 = arith.divf %121, %122 : vector<2x8xf32>
    %124 = vector.extract_strided_slice %105 {offsets = [0, 16], sizes = [2, 8], strides = [1, 1]} : vector<2x24xf32> to vector<2x8xf32>
    %125 = vector.extract_strided_slice %107 {offsets = [0, 16], sizes = [2, 8], strides = [1, 1]} : vector<2x24xf32> to vector<2x8xf32>
    %126 = arith.mulf %115, %125 : vector<2x8xf32>
    %127 = arith.addf %124, %126 : vector<2x8xf32>
    %128 = math.tanh %127 : vector<2x8xf32>
    %cst_51 = arith.constant 1.000000e+00 : f32
    %129 = vector.broadcast %cst_51 : f32 to vector<2x8xf32>
    %130 = arith.subf %129, %123 : vector<2x8xf32>
    %131 = arith.mulf %130, %128 : vector<2x8xf32>
    %132 = arith.mulf %123, %70 : vector<2x8xf32>
    %133 = arith.addf %131, %132 : vector<2x8xf32>
    %c0_52 = arith.constant 0 : index
    %c0_53 = arith.constant 0 : index
    %134 = vector.load %arg14[%c0_52, %c0_53] : memref<2x128xf32, #tpu.memory_space<vmem>>, vector<2x8xf32>
    tpu.vector_store %arg14[%c0_52, %c0_53], %133 {strides = array<i32>} : memref<2x128xf32, #tpu.memory_space<vmem>>, vector<2x8xf32>,
    %135 = vector.extract_strided_slice %66 {offsets = [2, 0], sizes = [2, 24], strides = [1, 1]} : vector<32x24xf32> to vector<2x24xf32>
    %136 = vector.extract_strided_slice %135 {offsets = [0, 0], sizes = [2, 8], strides = [1, 1]} : vector<2x24xf32> to vector<2x8xf32>
    %137 = vector.extract_strided_slice %106 {offsets = [0, 0], sizes = [2, 8], strides = [1, 1]} : vector<2x24xf32> to vector<2x8xf32>
    %138 = arith.addf %136, %137 : vector<2x8xf32>
    %139 = arith.negf %138 : vector<2x8xf32>
    %140 = math.exp %139 : vector<2x8xf32>
    %cst_54 = arith.constant 1.000000e+00 : f32
    %141 = vector.broadcast %cst_54 : f32 to vector<2x8xf32>
    %142 = arith.addf %141, %140 : vector<2x8xf32>
    %143 = arith.divf %141, %142 : vector<2x8xf32>
    %144 = vector.extract_strided_slice %135 {offsets = [0, 8], sizes = [2, 8], strides = [1, 1]} : vector<2x24xf32> to vector<2x8xf32>
    %145 = vector.extract_strided_slice %106 {offsets = [0, 8], sizes = [2, 8], strides = [1, 1]} : vector<2x24xf32> to vector<2x8xf32>
    %146 = arith.addf %144, %145 : vector<2x8xf32>
    %147 = arith.negf %146 : vector<2x8xf32>
    %148 = math.exp %147 : vector<2x8xf32>
    %cst_55 = arith.constant 1.000000e+00 : f32
    %149 = vector.broadcast %cst_55 : f32 to vector<2x8xf32>
    %150 = arith.addf %149, %148 : vector<2x8xf32>
    %151 = arith.divf %149, %150 : vector<2x8xf32>
    %152 = vector.extract_strided_slice %135 {offsets = [0, 16], sizes = [2, 8], strides = [1, 1]} : vector<2x24xf32> to vector<2x8xf32>
    %153 = vector.extract_strided_slice %106 {offsets = [0, 16], sizes = [2, 8], strides = [1, 1]} : vector<2x24xf32> to vector<2x8xf32>
    %154 = arith.mulf %143, %153 : vector<2x8xf32>
    %155 = arith.addf %152, %154 : vector<2x8xf32>
    %156 = math.tanh %155 : vector<2x8xf32>
    %cst_56 = arith.constant 1.000000e+00 : f32
    %157 = vector.broadcast %cst_56 : f32 to vector<2x8xf32>
    %158 = arith.subf %157, %151 : vector<2x8xf32>
    %159 = arith.mulf %158, %156 : vector<2x8xf32>
    %160 = arith.mulf %151, %100 : vector<2x8xf32>
    %161 = arith.addf %159, %160 : vector<2x8xf32>
    %162 = tpu.concatenate %161, %133 in 1 : vector<2x8xf32>, vector<2x8xf32> -> vector<2x16xf32>
    %cst_57 = arith.constant dense<0.000000e+00> : vector<2x72xf32>
    %163 = tpu.matmul %162, %67, %cst_57 {dimension_numbers = #tpu.dot_dimension_numbers<[1], [0], [0], [1], [0, 0, 1, 1], [], []>} : vector<2x16xf32>, vector<16x72xf32>, vector<2x72xf32> -> vector<2x72xf32>
    %164 = vector.broadcast %68 : vector<1x72xf32> to vector<2x72xf32>
    %165 = arith.addf %163, %164 : vector<2x72xf32>
    %166 = vector.extract_strided_slice %165 {offsets = [0, 0], sizes = [2, 24], strides = [1, 1]} : vector<2x72xf32> to vector<2x24xf32>
    %167 = vector.extract_strided_slice %165 {offsets = [0, 24], sizes = [2, 24], strides = [1, 1]} : vector<2x72xf32> to vector<2x24xf32>
    %168 = vector.extract_strided_slice %165 {offsets = [0, 48], sizes = [2, 24], strides = [1, 1]} : vector<2x72xf32> to vector<2x24xf32>
    %169 = vector.extract_strided_slice %166 {offsets = [0, 0], sizes = [2, 8], strides = [1, 1]} : vector<2x24xf32> to vector<2x8xf32>
    %170 = vector.extract_strided_slice %168 {offsets = [0, 0], sizes = [2, 8], strides = [1, 1]} : vector<2x24xf32> to vector<2x8xf32>
    %171 = arith.addf %169, %170 : vector<2x8xf32>
    %172 = arith.negf %171 : vector<2x8xf32>
    %173 = math.exp %172 : vector<2x8xf32>
    %cst_58 = arith.constant 1.000000e+00 : f32
    %174 = vector.broadcast %cst_58 : f32 to vector<2x8xf32>
    %175 = arith.addf %174, %173 : vector<2x8xf32>
    %176 = arith.divf %174, %175 : vector<2x8xf32>
    %177 = vector.extract_strided_slice %166 {offsets = [0, 8], sizes = [2, 8], strides = [1, 1]} : vector<2x24xf32> to vector<2x8xf32>
    %178 = vector.extract_strided_slice %168 {offsets = [0, 8], sizes = [2, 8], strides = [1, 1]} : vector<2x24xf32> to vector<2x8xf32>
    %179 = arith.addf %177, %178 : vector<2x8xf32>
    %180 = arith.negf %179 : vector<2x8xf32>
    %181 = math.exp %180 : vector<2x8xf32>
    %cst_59 = arith.constant 1.000000e+00 : f32
    %182 = vector.broadcast %cst_59 : f32 to vector<2x8xf32>
    %183 = arith.addf %182, %181 : vector<2x8xf32>
    %184 = arith.divf %182, %183 : vector<2x8xf32>
    %185 = vector.extract_strided_slice %166 {offsets = [0, 16], sizes = [2, 8], strides = [1, 1]} : vector<2x24xf32> to vector<2x8xf32>
    %186 = vector.extract_strided_slice %168 {offsets = [0, 16], sizes = [2, 8], strides = [1, 1]} : vector<2x24xf32> to vector<2x8xf32>
    %187 = arith.mulf %176, %186 : vector<2x8xf32>
    %188 = arith.addf %185, %187 : vector<2x8xf32>
    %189 = math.tanh %188 : vector<2x8xf32>
    %cst_60 = arith.constant 1.000000e+00 : f32
    %190 = vector.broadcast %cst_60 : f32 to vector<2x8xf32>
    %191 = arith.subf %190, %184 : vector<2x8xf32>
    %192 = arith.mulf %191, %189 : vector<2x8xf32>
    %193 = arith.mulf %184, %133 : vector<2x8xf32>
    %194 = arith.addf %192, %193 : vector<2x8xf32>
    %c0_61 = arith.constant 0 : index
    %c8 = arith.constant 8 : index
    %195 = vector.load %arg14[%c0_61, %c8] : memref<2x128xf32, #tpu.memory_space<vmem>>, vector<2x8xf32>
    tpu.vector_store %arg14[%c0_61, %c8], %194 {strides = array<i32>} : memref<2x128xf32, #tpu.memory_space<vmem>>, vector<2x8xf32>,
    %196 = vector.extract_strided_slice %66 {offsets = [4, 0], sizes = [2, 24], strides = [1, 1]} : vector<32x24xf32> to vector<2x24xf32>
    %197 = vector.extract_strided_slice %196 {offsets = [0, 0], sizes = [2, 8], strides = [1, 1]} : vector<2x24xf32> to vector<2x8xf32>
    %198 = vector.extract_strided_slice %167 {offsets = [0, 0], sizes = [2, 8], strides = [1, 1]} : vector<2x24xf32> to vector<2x8xf32>
    %199 = arith.addf %197, %198 : vector<2x8xf32>
    %200 = arith.negf %199 : vector<2x8xf32>
    %201 = math.exp %200 : vector<2x8xf32>
    %cst_62 = arith.constant 1.000000e+00 : f32
    %202 = vector.broadcast %cst_62 : f32 to vector<2x8xf32>
    %203 = arith.addf %202, %201 : vector<2x8xf32>
    %204 = arith.divf %202, %203 : vector<2x8xf32>
    %205 = vector.extract_strided_slice %196 {offsets = [0, 8], sizes = [2, 8], strides = [1, 1]} : vector<2x24xf32> to vector<2x8xf32>
    %206 = vector.extract_strided_slice %167 {offsets = [0, 8], sizes = [2, 8], strides = [1, 1]} : vector<2x24xf32> to vector<2x8xf32>
    %207 = arith.addf %205, %206 : vector<2x8xf32>
    %208 = arith.negf %207 : vector<2x8xf32>
    %209 = math.exp %208 : vector<2x8xf32>
    %cst_63 = arith.constant 1.000000e+00 : f32
    %210 = vector.broadcast %cst_63 : f32 to vector<2x8xf32>
    %211 = arith.addf %210, %209 : vector<2x8xf32>
    %212 = arith.divf %210, %211 : vector<2x8xf32>
    %213 = vector.extract_strided_slice %196 {offsets = [0, 16], sizes = [2, 8], strides = [1, 1]} : vector<2x24xf32> to vector<2x8xf32>
    %214 = vector.extract_strided_slice %167 {offsets = [0, 16], sizes = [2, 8], strides = [1, 1]} : vector<2x24xf32> to vector<2x8xf32>
    %215 = arith.mulf %204, %214 : vector<2x8xf32>
    %216 = arith.addf %213, %215 : vector<2x8xf32>
    %217 = math.tanh %216 : vector<2x8xf32>
    %cst_64 = arith.constant 1.000000e+00 : f32
    %218 = vector.broadcast %cst_64 : f32 to vector<2x8xf32>
    %219 = arith.subf %218, %212 : vector<2x8xf32>
    %220 = arith.mulf %219, %217 : vector<2x8xf32>
    %221 = arith.mulf %212, %161 : vector<2x8xf32>
    %222 = arith.addf %220, %221 : vector<2x8xf32>
    %223 = tpu.concatenate %222, %194 in 1 : vector<2x8xf32>, vector<2x8xf32> -> vector<2x16xf32>
    %cst_65 = arith.constant dense<0.000000e+00> : vector<2x72xf32>
    %224 = tpu.matmul %223, %67, %cst_65 {dimension_numbers = #tpu.dot_dimension_numbers<[1], [0], [0], [1], [0, 0, 1, 1], [], []>} : vector<2x16xf32>, vector<16x72xf32>, vector<2x72xf32> -> vector<2x72xf32>
    %225 = vector.broadcast %68 : vector<1x72xf32> to vector<2x72xf32>
    %226 = arith.addf %224, %225 : vector<2x72xf32>
    %227 = vector.extract_strided_slice %226 {offsets = [0, 0], sizes = [2, 24], strides = [1, 1]} : vector<2x72xf32> to vector<2x24xf32>
    %228 = vector.extract_strided_slice %226 {offsets = [0, 24], sizes = [2, 24], strides = [1, 1]} : vector<2x72xf32> to vector<2x24xf32>
    %229 = vector.extract_strided_slice %226 {offsets = [0, 48], sizes = [2, 24], strides = [1, 1]} : vector<2x72xf32> to vector<2x24xf32>
    %230 = vector.extract_strided_slice %227 {offsets = [0, 0], sizes = [2, 8], strides = [1, 1]} : vector<2x24xf32> to vector<2x8xf32>
    %231 = vector.extract_strided_slice %229 {offsets = [0, 0], sizes = [2, 8], strides = [1, 1]} : vector<2x24xf32> to vector<2x8xf32>
    %232 = arith.addf %230, %231 : vector<2x8xf32>
    %233 = arith.negf %232 : vector<2x8xf32>
    %234 = math.exp %233 : vector<2x8xf32>
    %cst_66 = arith.constant 1.000000e+00 : f32
    %235 = vector.broadcast %cst_66 : f32 to vector<2x8xf32>
    %236 = arith.addf %235, %234 : vector<2x8xf32>
    %237 = arith.divf %235, %236 : vector<2x8xf32>
    %238 = vector.extract_strided_slice %227 {offsets = [0, 8], sizes = [2, 8], strides = [1, 1]} : vector<2x24xf32> to vector<2x8xf32>
    %239 = vector.extract_strided_slice %229 {offsets = [0, 8], sizes = [2, 8], strides = [1, 1]} : vector<2x24xf32> to vector<2x8xf32>
    %240 = arith.addf %238, %239 : vector<2x8xf32>
    %241 = arith.negf %240 : vector<2x8xf32>
    %242 = math.exp %241 : vector<2x8xf32>
    %cst_67 = arith.constant 1.000000e+00 : f32
    %243 = vector.broadcast %cst_67 : f32 to vector<2x8xf32>
    %244 = arith.addf %243, %242 : vector<2x8xf32>
    %245 = arith.divf %243, %244 : vector<2x8xf32>
    %246 = vector.extract_strided_slice %227 {offsets = [0, 16], sizes = [2, 8], strides = [1, 1]} : vector<2x24xf32> to vector<2x8xf32>
    %247 = vector.extract_strided_slice %229 {offsets = [0, 16], sizes = [2, 8], strides = [1, 1]} : vector<2x24xf32> to vector<2x8xf32>
    %248 = arith.mulf %237, %247 : vector<2x8xf32>
    %249 = arith.addf %246, %248 : vector<2x8xf32>
    %250 = math.tanh %249 : vector<2x8xf32>
    %cst_68 = arith.constant 1.000000e+00 : f32
    %251 = vector.broadcast %cst_68 : f32 to vector<2x8xf32>
    %252 = arith.subf %251, %245 : vector<2x8xf32>
    %253 = arith.mulf %252, %250 : vector<2x8xf32>
    %254 = arith.mulf %245, %194 : vector<2x8xf32>
    %255 = arith.addf %253, %254 : vector<2x8xf32>
    %c0_69 = arith.constant 0 : index
    %c16 = arith.constant 16 : index
    %256 = vector.load %arg14[%c0_69, %c16] : memref<2x128xf32, #tpu.memory_space<vmem>>, vector<2x8xf32>
    tpu.vector_store %arg14[%c0_69, %c16], %255 {strides = array<i32>} : memref<2x128xf32, #tpu.memory_space<vmem>>, vector<2x8xf32>,
    %257 = vector.extract_strided_slice %66 {offsets = [6, 0], sizes = [2, 24], strides = [1, 1]} : vector<32x24xf32> to vector<2x24xf32>
    %258 = vector.extract_strided_slice %257 {offsets = [0, 0], sizes = [2, 8], strides = [1, 1]} : vector<2x24xf32> to vector<2x8xf32>
    %259 = vector.extract_strided_slice %228 {offsets = [0, 0], sizes = [2, 8], strides = [1, 1]} : vector<2x24xf32> to vector<2x8xf32>
    %260 = arith.addf %258, %259 : vector<2x8xf32>
    %261 = arith.negf %260 : vector<2x8xf32>
    %262 = math.exp %261 : vector<2x8xf32>
    %cst_70 = arith.constant 1.000000e+00 : f32
    %263 = vector.broadcast %cst_70 : f32 to vector<2x8xf32>
    %264 = arith.addf %263, %262 : vector<2x8xf32>
    %265 = arith.divf %263, %264 : vector<2x8xf32>
    %266 = vector.extract_strided_slice %257 {offsets = [0, 8], sizes = [2, 8], strides = [1, 1]} : vector<2x24xf32> to vector<2x8xf32>
    %267 = vector.extract_strided_slice %228 {offsets = [0, 8], sizes = [2, 8], strides = [1, 1]} : vector<2x24xf32> to vector<2x8xf32>
    %268 = arith.addf %266, %267 : vector<2x8xf32>
    %269 = arith.negf %268 : vector<2x8xf32>
    %270 = math.exp %269 : vector<2x8xf32>
    %cst_71 = arith.constant 1.000000e+00 : f32
    %271 = vector.broadcast %cst_71 : f32 to vector<2x8xf32>
    %272 = arith.addf %271, %270 : vector<2x8xf32>
    %273 = arith.divf %271, %272 : vector<2x8xf32>
    %274 = vector.extract_strided_slice %257 {offsets = [0, 16], sizes = [2, 8], strides = [1, 1]} : vector<2x24xf32> to vector<2x8xf32>
    %275 = vector.extract_strided_slice %228 {offsets = [0, 16], sizes = [2, 8], strides = [1, 1]} : vector<2x24xf32> to vector<2x8xf32>
    %276 = arith.mulf %265, %275 : vector<2x8xf32>
    %277 = arith.addf %274, %276 : vector<2x8xf32>
    %278 = math.tanh %277 : vector<2x8xf32>
    %cst_72 = arith.constant 1.000000e+00 : f32
    %279 = vector.broadcast %cst_72 : f32 to vector<2x8xf32>
    %280 = arith.subf %279, %273 : vector<2x8xf32>
    %281 = arith.mulf %280, %278 : vector<2x8xf32>
    %282 = arith.mulf %273, %222 : vector<2x8xf32>
    %283 = arith.addf %281, %282 : vector<2x8xf32>
    %284 = tpu.concatenate %283, %255 in 1 : vector<2x8xf32>, vector<2x8xf32> -> vector<2x16xf32>
    %cst_73 = arith.constant dense<0.000000e+00> : vector<2x72xf32>
    %285 = tpu.matmul %284, %67, %cst_73 {dimension_numbers = #tpu.dot_dimension_numbers<[1], [0], [0], [1], [0, 0, 1, 1], [], []>} : vector<2x16xf32>, vector<16x72xf32>, vector<2x72xf32> -> vector<2x72xf32>
    %286 = vector.broadcast %68 : vector<1x72xf32> to vector<2x72xf32>
    %287 = arith.addf %285, %286 : vector<2x72xf32>
    %288 = vector.extract_strided_slice %287 {offsets = [0, 0], sizes = [2, 24], strides = [1, 1]} : vector<2x72xf32> to vector<2x24xf32>
    %289 = vector.extract_strided_slice %287 {offsets = [0, 24], sizes = [2, 24], strides = [1, 1]} : vector<2x72xf32> to vector<2x24xf32>
    %290 = vector.extract_strided_slice %287 {offsets = [0, 48], sizes = [2, 24], strides = [1, 1]} : vector<2x72xf32> to vector<2x24xf32>
    %291 = vector.extract_strided_slice %288 {offsets = [0, 0], sizes = [2, 8], strides = [1, 1]} : vector<2x24xf32> to vector<2x8xf32>
    %292 = vector.extract_strided_slice %290 {offsets = [0, 0], sizes = [2, 8], strides = [1, 1]} : vector<2x24xf32> to vector<2x8xf32>
    %293 = arith.addf %291, %292 : vector<2x8xf32>
    %294 = arith.negf %293 : vector<2x8xf32>
    %295 = math.exp %294 : vector<2x8xf32>
    %cst_74 = arith.constant 1.000000e+00 : f32
    %296 = vector.broadcast %cst_74 : f32 to vector<2x8xf32>
    %297 = arith.addf %296, %295 : vector<2x8xf32>
    %298 = arith.divf %296, %297 : vector<2x8xf32>
    %299 = vector.extract_strided_slice %288 {offsets = [0, 8], sizes = [2, 8], strides = [1, 1]} : vector<2x24xf32> to vector<2x8xf32>
    %300 = vector.extract_strided_slice %290 {offsets = [0, 8], sizes = [2, 8], strides = [1, 1]} : vector<2x24xf32> to vector<2x8xf32>
    %301 = arith.addf %299, %300 : vector<2x8xf32>
    %302 = arith.negf %301 : vector<2x8xf32>
    %303 = math.exp %302 : vector<2x8xf32>
    %cst_75 = arith.constant 1.000000e+00 : f32
    %304 = vector.broadcast %cst_75 : f32 to vector<2x8xf32>
    %305 = arith.addf %304, %303 : vector<2x8xf32>
    %306 = arith.divf %304, %305 : vector<2x8xf32>
    %307 = vector.extract_strided_slice %288 {offsets = [0, 16], sizes = [2, 8], strides = [1, 1]} : vector<2x24xf32> to vector<2x8xf32>
    %308 = vector.extract_strided_slice %290 {offsets = [0, 16], sizes = [2, 8], strides = [1, 1]} : vector<2x24xf32> to vector<2x8xf32>
    %309 = arith.mulf %298, %308 : vector<2x8xf32>
    %310 = arith.addf %307, %309 : vector<2x8xf32>
    %311 = math.tanh %310 : vector<2x8xf32>
    %cst_76 = arith.constant 1.000000e+00 : f32
    %312 = vector.broadcast %cst_76 : f32 to vector<2x8xf32>
    %313 = arith.subf %312, %306 : vector<2x8xf32>
    %314 = arith.mulf %313, %311 : vector<2x8xf32>
    %315 = arith.mulf %306, %255 : vector<2x8xf32>
    %316 = arith.addf %314, %315 : vector<2x8xf32>
    %c0_77 = arith.constant 0 : index
    %c24 = arith.constant 24 : index
    %317 = vector.load %arg14[%c0_77, %c24] : memref<2x128xf32, #tpu.memory_space<vmem>>, vector<2x8xf32>
    tpu.vector_store %arg14[%c0_77, %c24], %316 {strides = array<i32>} : memref<2x128xf32, #tpu.memory_space<vmem>>, vector<2x8xf32>,
    %318 = vector.extract_strided_slice %66 {offsets = [8, 0], sizes = [2, 24], strides = [1, 1]} : vector<32x24xf32> to vector<2x24xf32>
    %319 = vector.extract_strided_slice %318 {offsets = [0, 0], sizes = [2, 8], strides = [1, 1]} : vector<2x24xf32> to vector<2x8xf32>
    %320 = vector.extract_strided_slice %289 {offsets = [0, 0], sizes = [2, 8], strides = [1, 1]} : vector<2x24xf32> to vector<2x8xf32>
    %321 = arith.addf %319, %320 : vector<2x8xf32>
    %322 = arith.negf %321 : vector<2x8xf32>
    %323 = math.exp %322 : vector<2x8xf32>
    %cst_78 = arith.constant 1.000000e+00 : f32
    %324 = vector.broadcast %cst_78 : f32 to vector<2x8xf32>
    %325 = arith.addf %324, %323 : vector<2x8xf32>
    %326 = arith.divf %324, %325 : vector<2x8xf32>
    %327 = vector.extract_strided_slice %318 {offsets = [0, 8], sizes = [2, 8], strides = [1, 1]} : vector<2x24xf32> to vector<2x8xf32>
    %328 = vector.extract_strided_slice %289 {offsets = [0, 8], sizes = [2, 8], strides = [1, 1]} : vector<2x24xf32> to vector<2x8xf32>
    %329 = arith.addf %327, %328 : vector<2x8xf32>
    %330 = arith.negf %329 : vector<2x8xf32>
    %331 = math.exp %330 : vector<2x8xf32>
    %cst_79 = arith.constant 1.000000e+00 : f32
    %332 = vector.broadcast %cst_79 : f32 to vector<2x8xf32>
    %333 = arith.addf %332, %331 : vector<2x8xf32>
    %334 = arith.divf %332, %333 : vector<2x8xf32>
    %335 = vector.extract_strided_slice %318 {offsets = [0, 16], sizes = [2, 8], strides = [1, 1]} : vector<2x24xf32> to vector<2x8xf32>
    %336 = vector.extract_strided_slice %289 {offsets = [0, 16], sizes = [2, 8], strides = [1, 1]} : vector<2x24xf32> to vector<2x8xf32>
    %337 = arith.mulf %326, %336 : vector<2x8xf32>
    %338 = arith.addf %335, %337 : vector<2x8xf32>
    %339 = math.tanh %338 : vector<2x8xf32>
    %cst_80 = arith.constant 1.000000e+00 : f32
    %340 = vector.broadcast %cst_80 : f32 to vector<2x8xf32>
    %341 = arith.subf %340, %334 : vector<2x8xf32>
    %342 = arith.mulf %341, %339 : vector<2x8xf32>
    %343 = arith.mulf %334, %283 : vector<2x8xf32>
    %344 = arith.addf %342, %343 : vector<2x8xf32>
    %345 = tpu.concatenate %344, %316 in 1 : vector<2x8xf32>, vector<2x8xf32> -> vector<2x16xf32>
    %cst_81 = arith.constant dense<0.000000e+00> : vector<2x72xf32>
    %346 = tpu.matmul %345, %67, %cst_81 {dimension_numbers = #tpu.dot_dimension_numbers<[1], [0], [0], [1], [0, 0, 1, 1], [], []>} : vector<2x16xf32>, vector<16x72xf32>, vector<2x72xf32> -> vector<2x72xf32>
    %347 = vector.broadcast %68 : vector<1x72xf32> to vector<2x72xf32>
    %348 = arith.addf %346, %347 : vector<2x72xf32>
    %349 = vector.extract_strided_slice %348 {offsets = [0, 0], sizes = [2, 24], strides = [1, 1]} : vector<2x72xf32> to vector<2x24xf32>
    %350 = vector.extract_strided_slice %348 {offsets = [0, 24], sizes = [2, 24], strides = [1, 1]} : vector<2x72xf32> to vector<2x24xf32>
    %351 = vector.extract_strided_slice %348 {offsets = [0, 48], sizes = [2, 24], strides = [1, 1]} : vector<2x72xf32> to vector<2x24xf32>
    %352 = vector.extract_strided_slice %349 {offsets = [0, 0], sizes = [2, 8], strides = [1, 1]} : vector<2x24xf32> to vector<2x8xf32>
    %353 = vector.extract_strided_slice %351 {offsets = [0, 0], sizes = [2, 8], strides = [1, 1]} : vector<2x24xf32> to vector<2x8xf32>
    %354 = arith.addf %352, %353 : vector<2x8xf32>
    %355 = arith.negf %354 : vector<2x8xf32>
    %356 = math.exp %355 : vector<2x8xf32>
    %cst_82 = arith.constant 1.000000e+00 : f32
    %357 = vector.broadcast %cst_82 : f32 to vector<2x8xf32>
    %358 = arith.addf %357, %356 : vector<2x8xf32>
    %359 = arith.divf %357, %358 : vector<2x8xf32>
    %360 = vector.extract_strided_slice %349 {offsets = [0, 8], sizes = [2, 8], strides = [1, 1]} : vector<2x24xf32> to vector<2x8xf32>
    %361 = vector.extract_strided_slice %351 {offsets = [0, 8], sizes = [2, 8], strides = [1, 1]} : vector<2x24xf32> to vector<2x8xf32>
    %362 = arith.addf %360, %361 : vector<2x8xf32>
    %363 = arith.negf %362 : vector<2x8xf32>
    %364 = math.exp %363 : vector<2x8xf32>
    %cst_83 = arith.constant 1.000000e+00 : f32
    %365 = vector.broadcast %cst_83 : f32 to vector<2x8xf32>
    %366 = arith.addf %365, %364 : vector<2x8xf32>
    %367 = arith.divf %365, %366 : vector<2x8xf32>
    %368 = vector.extract_strided_slice %349 {offsets = [0, 16], sizes = [2, 8], strides = [1, 1]} : vector<2x24xf32> to vector<2x8xf32>
    %369 = vector.extract_strided_slice %351 {offsets = [0, 16], sizes = [2, 8], strides = [1, 1]} : vector<2x24xf32> to vector<2x8xf32>
    %370 = arith.mulf %359, %369 : vector<2x8xf32>
    %371 = arith.addf %368, %370 : vector<2x8xf32>
    %372 = math.tanh %371 : vector<2x8xf32>
    %cst_84 = arith.constant 1.000000e+00 : f32
    %373 = vector.broadcast %cst_84 : f32 to vector<2x8xf32>
    %374 = arith.subf %373, %367 : vector<2x8xf32>
    %375 = arith.mulf %374, %372 : vector<2x8xf32>
    %376 = arith.mulf %367, %316 : vector<2x8xf32>
    %377 = arith.addf %375, %376 : vector<2x8xf32>
    %c0_85 = arith.constant 0 : index
    %c32 = arith.constant 32 : index
    %378 = vector.load %arg14[%c0_85, %c32] : memref<2x128xf32, #tpu.memory_space<vmem>>, vector<2x8xf32>
    tpu.vector_store %arg14[%c0_85, %c32], %377 {strides = array<i32>} : memref<2x128xf32, #tpu.memory_space<vmem>>, vector<2x8xf32>,
    %379 = vector.extract_strided_slice %66 {offsets = [10, 0], sizes = [2, 24], strides = [1, 1]} : vector<32x24xf32> to vector<2x24xf32>
    %380 = vector.extract_strided_slice %379 {offsets = [0, 0], sizes = [2, 8], strides = [1, 1]} : vector<2x24xf32> to vector<2x8xf32>
    %381 = vector.extract_strided_slice %350 {offsets = [0, 0], sizes = [2, 8], strides = [1, 1]} : vector<2x24xf32> to vector<2x8xf32>
    %382 = arith.addf %380, %381 : vector<2x8xf32>
    %383 = arith.negf %382 : vector<2x8xf32>
    %384 = math.exp %383 : vector<2x8xf32>
    %cst_86 = arith.constant 1.000000e+00 : f32
    %385 = vector.broadcast %cst_86 : f32 to vector<2x8xf32>
    %386 = arith.addf %385, %384 : vector<2x8xf32>
    %387 = arith.divf %385, %386 : vector<2x8xf32>
    %388 = vector.extract_strided_slice %379 {offsets = [0, 8], sizes = [2, 8], strides = [1, 1]} : vector<2x24xf32> to vector<2x8xf32>
    %389 = vector.extract_strided_slice %350 {offsets = [0, 8], sizes = [2, 8], strides = [1, 1]} : vector<2x24xf32> to vector<2x8xf32>
    %390 = arith.addf %388, %389 : vector<2x8xf32>
    %391 = arith.negf %390 : vector<2x8xf32>
    %392 = math.exp %391 : vector<2x8xf32>
    %cst_87 = arith.constant 1.000000e+00 : f32
    %393 = vector.broadcast %cst_87 : f32 to vector<2x8xf32>
    %394 = arith.addf %393, %392 : vector<2x8xf32>
    %395 = arith.divf %393, %394 : vector<2x8xf32>
    %396 = vector.extract_strided_slice %379 {offsets = [0, 16], sizes = [2, 8], strides = [1, 1]} : vector<2x24xf32> to vector<2x8xf32>
    %397 = vector.extract_strided_slice %350 {offsets = [0, 16], sizes = [2, 8], strides = [1, 1]} : vector<2x24xf32> to vector<2x8xf32>
    %398 = arith.mulf %387, %397 : vector<2x8xf32>
    %399 = arith.addf %396, %398 : vector<2x8xf32>
    %400 = math.tanh %399 : vector<2x8xf32>
    %cst_88 = arith.constant 1.000000e+00 : f32
    %401 = vector.broadcast %cst_88 : f32 to vector<2x8xf32>
    %402 = arith.subf %401, %395 : vector<2x8xf32>
    %403 = arith.mulf %402, %400 : vector<2x8xf32>
    %404 = arith.mulf %395, %344 : vector<2x8xf32>
    %405 = arith.addf %403, %404 : vector<2x8xf32>
    %406 = tpu.concatenate %405, %377 in 1 : vector<2x8xf32>, vector<2x8xf32> -> vector<2x16xf32>
    %cst_89 = arith.constant dense<0.000000e+00> : vector<2x72xf32>
    %407 = tpu.matmul %406, %67, %cst_89 {dimension_numbers = #tpu.dot_dimension_numbers<[1], [0], [0], [1], [0, 0, 1, 1], [], []>} : vector<2x16xf32>, vector<16x72xf32>, vector<2x72xf32> -> vector<2x72xf32>
    %408 = vector.broadcast %68 : vector<1x72xf32> to vector<2x72xf32>
    %409 = arith.addf %407, %408 : vector<2x72xf32>
    %410 = vector.extract_strided_slice %409 {offsets = [0, 0], sizes = [2, 24], strides = [1, 1]} : vector<2x72xf32> to vector<2x24xf32>
    %411 = vector.extract_strided_slice %409 {offsets = [0, 24], sizes = [2, 24], strides = [1, 1]} : vector<2x72xf32> to vector<2x24xf32>
    %412 = vector.extract_strided_slice %409 {offsets = [0, 48], sizes = [2, 24], strides = [1, 1]} : vector<2x72xf32> to vector<2x24xf32>
    %413 = vector.extract_strided_slice %410 {offsets = [0, 0], sizes = [2, 8], strides = [1, 1]} : vector<2x24xf32> to vector<2x8xf32>
    %414 = vector.extract_strided_slice %412 {offsets = [0, 0], sizes = [2, 8], strides = [1, 1]} : vector<2x24xf32> to vector<2x8xf32>
    %415 = arith.addf %413, %414 : vector<2x8xf32>
    %416 = arith.negf %415 : vector<2x8xf32>
    %417 = math.exp %416 : vector<2x8xf32>
    %cst_90 = arith.constant 1.000000e+00 : f32
    %418 = vector.broadcast %cst_90 : f32 to vector<2x8xf32>
    %419 = arith.addf %418, %417 : vector<2x8xf32>
    %420 = arith.divf %418, %419 : vector<2x8xf32>
    %421 = vector.extract_strided_slice %410 {offsets = [0, 8], sizes = [2, 8], strides = [1, 1]} : vector<2x24xf32> to vector<2x8xf32>
    %422 = vector.extract_strided_slice %412 {offsets = [0, 8], sizes = [2, 8], strides = [1, 1]} : vector<2x24xf32> to vector<2x8xf32>
    %423 = arith.addf %421, %422 : vector<2x8xf32>
    %424 = arith.negf %423 : vector<2x8xf32>
    %425 = math.exp %424 : vector<2x8xf32>
    %cst_91 = arith.constant 1.000000e+00 : f32
    %426 = vector.broadcast %cst_91 : f32 to vector<2x8xf32>
    %427 = arith.addf %426, %425 : vector<2x8xf32>
    %428 = arith.divf %426, %427 : vector<2x8xf32>
    %429 = vector.extract_strided_slice %410 {offsets = [0, 16], sizes = [2, 8], strides = [1, 1]} : vector<2x24xf32> to vector<2x8xf32>
    %430 = vector.extract_strided_slice %412 {offsets = [0, 16], sizes = [2, 8], strides = [1, 1]} : vector<2x24xf32> to vector<2x8xf32>
    %431 = arith.mulf %420, %430 : vector<2x8xf32>
    %432 = arith.addf %429, %431 : vector<2x8xf32>
    %433 = math.tanh %432 : vector<2x8xf32>
    %cst_92 = arith.constant 1.000000e+00 : f32
    %434 = vector.broadcast %cst_92 : f32 to vector<2x8xf32>
    %435 = arith.subf %434, %428 : vector<2x8xf32>
    %436 = arith.mulf %435, %433 : vector<2x8xf32>
    %437 = arith.mulf %428, %377 : vector<2x8xf32>
    %438 = arith.addf %436, %437 : vector<2x8xf32>
    %c0_93 = arith.constant 0 : index
    %c40 = arith.constant 40 : index
    %439 = vector.load %arg14[%c0_93, %c40] : memref<2x128xf32, #tpu.memory_space<vmem>>, vector<2x8xf32>
    tpu.vector_store %arg14[%c0_93, %c40], %438 {strides = array<i32>} : memref<2x128xf32, #tpu.memory_space<vmem>>, vector<2x8xf32>,
    %440 = vector.extract_strided_slice %66 {offsets = [12, 0], sizes = [2, 24], strides = [1, 1]} : vector<32x24xf32> to vector<2x24xf32>
    %441 = vector.extract_strided_slice %440 {offsets = [0, 0], sizes = [2, 8], strides = [1, 1]} : vector<2x24xf32> to vector<2x8xf32>
    %442 = vector.extract_strided_slice %411 {offsets = [0, 0], sizes = [2, 8], strides = [1, 1]} : vector<2x24xf32> to vector<2x8xf32>
    %443 = arith.addf %441, %442 : vector<2x8xf32>
    %444 = arith.negf %443 : vector<2x8xf32>
    %445 = math.exp %444 : vector<2x8xf32>
    %cst_94 = arith.constant 1.000000e+00 : f32
    %446 = vector.broadcast %cst_94 : f32 to vector<2x8xf32>
    %447 = arith.addf %446, %445 : vector<2x8xf32>
    %448 = arith.divf %446, %447 : vector<2x8xf32>
    %449 = vector.extract_strided_slice %440 {offsets = [0, 8], sizes = [2, 8], strides = [1, 1]} : vector<2x24xf32> to vector<2x8xf32>
    %450 = vector.extract_strided_slice %411 {offsets = [0, 8], sizes = [2, 8], strides = [1, 1]} : vector<2x24xf32> to vector<2x8xf32>
    %451 = arith.addf %449, %450 : vector<2x8xf32>
    %452 = arith.negf %451 : vector<2x8xf32>
    %453 = math.exp %452 : vector<2x8xf32>
    %cst_95 = arith.constant 1.000000e+00 : f32
    %454 = vector.broadcast %cst_95 : f32 to vector<2x8xf32>
    %455 = arith.addf %454, %453 : vector<2x8xf32>
    %456 = arith.divf %454, %455 : vector<2x8xf32>
    %457 = vector.extract_strided_slice %440 {offsets = [0, 16], sizes = [2, 8], strides = [1, 1]} : vector<2x24xf32> to vector<2x8xf32>
    %458 = vector.extract_strided_slice %411 {offsets = [0, 16], sizes = [2, 8], strides = [1, 1]} : vector<2x24xf32> to vector<2x8xf32>
    %459 = arith.mulf %448, %458 : vector<2x8xf32>
    %460 = arith.addf %457, %459 : vector<2x8xf32>
    %461 = math.tanh %460 : vector<2x8xf32>
    %cst_96 = arith.constant 1.000000e+00 : f32
    %462 = vector.broadcast %cst_96 : f32 to vector<2x8xf32>
    %463 = arith.subf %462, %456 : vector<2x8xf32>
    %464 = arith.mulf %463, %461 : vector<2x8xf32>
    %465 = arith.mulf %456, %405 : vector<2x8xf32>
    %466 = arith.addf %464, %465 : vector<2x8xf32>
    %467 = tpu.concatenate %466, %438 in 1 : vector<2x8xf32>, vector<2x8xf32> -> vector<2x16xf32>
    %cst_97 = arith.constant dense<0.000000e+00> : vector<2x72xf32>
    %468 = tpu.matmul %467, %67, %cst_97 {dimension_numbers = #tpu.dot_dimension_numbers<[1], [0], [0], [1], [0, 0, 1, 1], [], []>} : vector<2x16xf32>, vector<16x72xf32>, vector<2x72xf32> -> vector<2x72xf32>
    %469 = vector.broadcast %68 : vector<1x72xf32> to vector<2x72xf32>
    %470 = arith.addf %468, %469 : vector<2x72xf32>
    %471 = vector.extract_strided_slice %470 {offsets = [0, 0], sizes = [2, 24], strides = [1, 1]} : vector<2x72xf32> to vector<2x24xf32>
    %472 = vector.extract_strided_slice %470 {offsets = [0, 24], sizes = [2, 24], strides = [1, 1]} : vector<2x72xf32> to vector<2x24xf32>
    %473 = vector.extract_strided_slice %470 {offsets = [0, 48], sizes = [2, 24], strides = [1, 1]} : vector<2x72xf32> to vector<2x24xf32>
    %474 = vector.extract_strided_slice %471 {offsets = [0, 0], sizes = [2, 8], strides = [1, 1]} : vector<2x24xf32> to vector<2x8xf32>
    %475 = vector.extract_strided_slice %473 {offsets = [0, 0], sizes = [2, 8], strides = [1, 1]} : vector<2x24xf32> to vector<2x8xf32>
    %476 = arith.addf %474, %475 : vector<2x8xf32>
    %477 = arith.negf %476 : vector<2x8xf32>
    %478 = math.exp %477 : vector<2x8xf32>
    %cst_98 = arith.constant 1.000000e+00 : f32
    %479 = vector.broadcast %cst_98 : f32 to vector<2x8xf32>
    %480 = arith.addf %479, %478 : vector<2x8xf32>
    %481 = arith.divf %479, %480 : vector<2x8xf32>
    %482 = vector.extract_strided_slice %471 {offsets = [0, 8], sizes = [2, 8], strides = [1, 1]} : vector<2x24xf32> to vector<2x8xf32>
    %483 = vector.extract_strided_slice %473 {offsets = [0, 8], sizes = [2, 8], strides = [1, 1]} : vector<2x24xf32> to vector<2x8xf32>
    %484 = arith.addf %482, %483 : vector<2x8xf32>
    %485 = arith.negf %484 : vector<2x8xf32>
    %486 = math.exp %485 : vector<2x8xf32>
    %cst_99 = arith.constant 1.000000e+00 : f32
    %487 = vector.broadcast %cst_99 : f32 to vector<2x8xf32>
    %488 = arith.addf %487, %486 : vector<2x8xf32>
    %489 = arith.divf %487, %488 : vector<2x8xf32>
    %490 = vector.extract_strided_slice %471 {offsets = [0, 16], sizes = [2, 8], strides = [1, 1]} : vector<2x24xf32> to vector<2x8xf32>
    %491 = vector.extract_strided_slice %473 {offsets = [0, 16], sizes = [2, 8], strides = [1, 1]} : vector<2x24xf32> to vector<2x8xf32>
    %492 = arith.mulf %481, %491 : vector<2x8xf32>
    %493 = arith.addf %490, %492 : vector<2x8xf32>
    %494 = math.tanh %493 : vector<2x8xf32>
    %cst_100 = arith.constant 1.000000e+00 : f32
    %495 = vector.broadcast %cst_100 : f32 to vector<2x8xf32>
    %496 = arith.subf %495, %489 : vector<2x8xf32>
    %497 = arith.mulf %496, %494 : vector<2x8xf32>
    %498 = arith.mulf %489, %438 : vector<2x8xf32>
    %499 = arith.addf %497, %498 : vector<2x8xf32>
    %c0_101 = arith.constant 0 : index
    %c48 = arith.constant 48 : index
    %500 = vector.load %arg14[%c0_101, %c48] : memref<2x128xf32, #tpu.memory_space<vmem>>, vector<2x8xf32>
    tpu.vector_store %arg14[%c0_101, %c48], %499 {strides = array<i32>} : memref<2x128xf32, #tpu.memory_space<vmem>>, vector<2x8xf32>,
    %501 = vector.extract_strided_slice %66 {offsets = [14, 0], sizes = [2, 24], strides = [1, 1]} : vector<32x24xf32> to vector<2x24xf32>
    %502 = vector.extract_strided_slice %501 {offsets = [0, 0], sizes = [2, 8], strides = [1, 1]} : vector<2x24xf32> to vector<2x8xf32>
    %503 = vector.extract_strided_slice %472 {offsets = [0, 0], sizes = [2, 8], strides = [1, 1]} : vector<2x24xf32> to vector<2x8xf32>
    %504 = arith.addf %502, %503 : vector<2x8xf32>
    %505 = arith.negf %504 : vector<2x8xf32>
    %506 = math.exp %505 : vector<2x8xf32>
    %cst_102 = arith.constant 1.000000e+00 : f32
    %507 = vector.broadcast %cst_102 : f32 to vector<2x8xf32>
    %508 = arith.addf %507, %506 : vector<2x8xf32>
    %509 = arith.divf %507, %508 : vector<2x8xf32>
    %510 = vector.extract_strided_slice %501 {offsets = [0, 8], sizes = [2, 8], strides = [1, 1]} : vector<2x24xf32> to vector<2x8xf32>
    %511 = vector.extract_strided_slice %472 {offsets = [0, 8], sizes = [2, 8], strides = [1, 1]} : vector<2x24xf32> to vector<2x8xf32>
    %512 = arith.addf %510, %511 : vector<2x8xf32>
    %513 = arith.negf %512 : vector<2x8xf32>
    %514 = math.exp %513 : vector<2x8xf32>
    %cst_103 = arith.constant 1.000000e+00 : f32
    %515 = vector.broadcast %cst_103 : f32 to vector<2x8xf32>
    %516 = arith.addf %515, %514 : vector<2x8xf32>
    %517 = arith.divf %515, %516 : vector<2x8xf32>
    %518 = vector.extract_strided_slice %501 {offsets = [0, 16], sizes = [2, 8], strides = [1, 1]} : vector<2x24xf32> to vector<2x8xf32>
    %519 = vector.extract_strided_slice %472 {offsets = [0, 16], sizes = [2, 8], strides = [1, 1]} : vector<2x24xf32> to vector<2x8xf32>
    %520 = arith.mulf %509, %519 : vector<2x8xf32>
    %521 = arith.addf %518, %520 : vector<2x8xf32>
    %522 = math.tanh %521 : vector<2x8xf32>
    %cst_104 = arith.constant 1.000000e+00 : f32
    %523 = vector.broadcast %cst_104 : f32 to vector<2x8xf32>
    %524 = arith.subf %523, %517 : vector<2x8xf32>
    %525 = arith.mulf %524, %522 : vector<2x8xf32>
    %526 = arith.mulf %517, %466 : vector<2x8xf32>
    %527 = arith.addf %525, %526 : vector<2x8xf32>
    %528 = tpu.concatenate %527, %499 in 1 : vector<2x8xf32>, vector<2x8xf32> -> vector<2x16xf32>
    %cst_105 = arith.constant dense<0.000000e+00> : vector<2x72xf32>
    %529 = tpu.matmul %528, %67, %cst_105 {dimension_numbers = #tpu.dot_dimension_numbers<[1], [0], [0], [1], [0, 0, 1, 1], [], []>} : vector<2x16xf32>, vector<16x72xf32>, vector<2x72xf32> -> vector<2x72xf32>
    %530 = vector.broadcast %68 : vector<1x72xf32> to vector<2x72xf32>
    %531 = arith.addf %529, %530 : vector<2x72xf32>
    %532 = vector.extract_strided_slice %531 {offsets = [0, 0], sizes = [2, 24], strides = [1, 1]} : vector<2x72xf32> to vector<2x24xf32>
    %533 = vector.extract_strided_slice %531 {offsets = [0, 24], sizes = [2, 24], strides = [1, 1]} : vector<2x72xf32> to vector<2x24xf32>
    %534 = vector.extract_strided_slice %531 {offsets = [0, 48], sizes = [2, 24], strides = [1, 1]} : vector<2x72xf32> to vector<2x24xf32>
    %535 = vector.extract_strided_slice %532 {offsets = [0, 0], sizes = [2, 8], strides = [1, 1]} : vector<2x24xf32> to vector<2x8xf32>
    %536 = vector.extract_strided_slice %534 {offsets = [0, 0], sizes = [2, 8], strides = [1, 1]} : vector<2x24xf32> to vector<2x8xf32>
    %537 = arith.addf %535, %536 : vector<2x8xf32>
    %538 = arith.negf %537 : vector<2x8xf32>
    %539 = math.exp %538 : vector<2x8xf32>
    %cst_106 = arith.constant 1.000000e+00 : f32
    %540 = vector.broadcast %cst_106 : f32 to vector<2x8xf32>
    %541 = arith.addf %540, %539 : vector<2x8xf32>
    %542 = arith.divf %540, %541 : vector<2x8xf32>
    %543 = vector.extract_strided_slice %532 {offsets = [0, 8], sizes = [2, 8], strides = [1, 1]} : vector<2x24xf32> to vector<2x8xf32>
    %544 = vector.extract_strided_slice %534 {offsets = [0, 8], sizes = [2, 8], strides = [1, 1]} : vector<2x24xf32> to vector<2x8xf32>
    %545 = arith.addf %543, %544 : vector<2x8xf32>
    %546 = arith.negf %545 : vector<2x8xf32>
    %547 = math.exp %546 : vector<2x8xf32>
    %cst_107 = arith.constant 1.000000e+00 : f32
    %548 = vector.broadcast %cst_107 : f32 to vector<2x8xf32>
    %549 = arith.addf %548, %547 : vector<2x8xf32>
    %550 = arith.divf %548, %549 : vector<2x8xf32>
    %551 = vector.extract_strided_slice %532 {offsets = [0, 16], sizes = [2, 8], strides = [1, 1]} : vector<2x24xf32> to vector<2x8xf32>
    %552 = vector.extract_strided_slice %534 {offsets = [0, 16], sizes = [2, 8], strides = [1, 1]} : vector<2x24xf32> to vector<2x8xf32>
    %553 = arith.mulf %542, %552 : vector<2x8xf32>
    %554 = arith.addf %551, %553 : vector<2x8xf32>
    %555 = math.tanh %554 : vector<2x8xf32>
    %cst_108 = arith.constant 1.000000e+00 : f32
    %556 = vector.broadcast %cst_108 : f32 to vector<2x8xf32>
    %557 = arith.subf %556, %550 : vector<2x8xf32>
    %558 = arith.mulf %557, %555 : vector<2x8xf32>
    %559 = arith.mulf %550, %499 : vector<2x8xf32>
    %560 = arith.addf %558, %559 : vector<2x8xf32>
    %c0_109 = arith.constant 0 : index
    %c56 = arith.constant 56 : index
    %561 = vector.load %arg14[%c0_109, %c56] : memref<2x128xf32, #tpu.memory_space<vmem>>, vector<2x8xf32>
    tpu.vector_store %arg14[%c0_109, %c56], %560 {strides = array<i32>} : memref<2x128xf32, #tpu.memory_space<vmem>>, vector<2x8xf32>,
    %562 = vector.extract_strided_slice %66 {offsets = [16, 0], sizes = [2, 24], strides = [1, 1]} : vector<32x24xf32> to vector<2x24xf32>
    %563 = vector.extract_strided_slice %562 {offsets = [0, 0], sizes = [2, 8], strides = [1, 1]} : vector<2x24xf32> to vector<2x8xf32>
    %564 = vector.extract_strided_slice %533 {offsets = [0, 0], sizes = [2, 8], strides = [1, 1]} : vector<2x24xf32> to vector<2x8xf32>
    %565 = arith.addf %563, %564 : vector<2x8xf32>
    %566 = arith.negf %565 : vector<2x8xf32>
    %567 = math.exp %566 : vector<2x8xf32>
    %cst_110 = arith.constant 1.000000e+00 : f32
    %568 = vector.broadcast %cst_110 : f32 to vector<2x8xf32>
    %569 = arith.addf %568, %567 : vector<2x8xf32>
    %570 = arith.divf %568, %569 : vector<2x8xf32>
    %571 = vector.extract_strided_slice %562 {offsets = [0, 8], sizes = [2, 8], strides = [1, 1]} : vector<2x24xf32> to vector<2x8xf32>
    %572 = vector.extract_strided_slice %533 {offsets = [0, 8], sizes = [2, 8], strides = [1, 1]} : vector<2x24xf32> to vector<2x8xf32>
    %573 = arith.addf %571, %572 : vector<2x8xf32>
    %574 = arith.negf %573 : vector<2x8xf32>
    %575 = math.exp %574 : vector<2x8xf32>
    %cst_111 = arith.constant 1.000000e+00 : f32
    %576 = vector.broadcast %cst_111 : f32 to vector<2x8xf32>
    %577 = arith.addf %576, %575 : vector<2x8xf32>
    %578 = arith.divf %576, %577 : vector<2x8xf32>
    %579 = vector.extract_strided_slice %562 {offsets = [0, 16], sizes = [2, 8], strides = [1, 1]} : vector<2x24xf32> to vector<2x8xf32>
    %580 = vector.extract_strided_slice %533 {offsets = [0, 16], sizes = [2, 8], strides = [1, 1]} : vector<2x24xf32> to vector<2x8xf32>
    %581 = arith.mulf %570, %580 : vector<2x8xf32>
    %582 = arith.addf %579, %581 : vector<2x8xf32>
    %583 = math.tanh %582 : vector<2x8xf32>
    %cst_112 = arith.constant 1.000000e+00 : f32
    %584 = vector.broadcast %cst_112 : f32 to vector<2x8xf32>
    %585 = arith.subf %584, %578 : vector<2x8xf32>
    %586 = arith.mulf %585, %583 : vector<2x8xf32>
    %587 = arith.mulf %578, %527 : vector<2x8xf32>
    %588 = arith.addf %586, %587 : vector<2x8xf32>
    %589 = tpu.concatenate %588, %560 in 1 : vector<2x8xf32>, vector<2x8xf32> -> vector<2x16xf32>
    %cst_113 = arith.constant dense<0.000000e+00> : vector<2x72xf32>
    %590 = tpu.matmul %589, %67, %cst_113 {dimension_numbers = #tpu.dot_dimension_numbers<[1], [0], [0], [1], [0, 0, 1, 1], [], []>} : vector<2x16xf32>, vector<16x72xf32>, vector<2x72xf32> -> vector<2x72xf32>
    %591 = vector.broadcast %68 : vector<1x72xf32> to vector<2x72xf32>
    %592 = arith.addf %590, %591 : vector<2x72xf32>
    %593 = vector.extract_strided_slice %592 {offsets = [0, 0], sizes = [2, 24], strides = [1, 1]} : vector<2x72xf32> to vector<2x24xf32>
    %594 = vector.extract_strided_slice %592 {offsets = [0, 24], sizes = [2, 24], strides = [1, 1]} : vector<2x72xf32> to vector<2x24xf32>
    %595 = vector.extract_strided_slice %592 {offsets = [0, 48], sizes = [2, 24], strides = [1, 1]} : vector<2x72xf32> to vector<2x24xf32>
    %596 = vector.extract_strided_slice %593 {offsets = [0, 0], sizes = [2, 8], strides = [1, 1]} : vector<2x24xf32> to vector<2x8xf32>
    %597 = vector.extract_strided_slice %595 {offsets = [0, 0], sizes = [2, 8], strides = [1, 1]} : vector<2x24xf32> to vector<2x8xf32>
    %598 = arith.addf %596, %597 : vector<2x8xf32>
    %599 = arith.negf %598 : vector<2x8xf32>
    %600 = math.exp %599 : vector<2x8xf32>
    %cst_114 = arith.constant 1.000000e+00 : f32
    %601 = vector.broadcast %cst_114 : f32 to vector<2x8xf32>
    %602 = arith.addf %601, %600 : vector<2x8xf32>
    %603 = arith.divf %601, %602 : vector<2x8xf32>
    %604 = vector.extract_strided_slice %593 {offsets = [0, 8], sizes = [2, 8], strides = [1, 1]} : vector<2x24xf32> to vector<2x8xf32>
    %605 = vector.extract_strided_slice %595 {offsets = [0, 8], sizes = [2, 8], strides = [1, 1]} : vector<2x24xf32> to vector<2x8xf32>
    %606 = arith.addf %604, %605 : vector<2x8xf32>
    %607 = arith.negf %606 : vector<2x8xf32>
    %608 = math.exp %607 : vector<2x8xf32>
    %cst_115 = arith.constant 1.000000e+00 : f32
    %609 = vector.broadcast %cst_115 : f32 to vector<2x8xf32>
    %610 = arith.addf %609, %608 : vector<2x8xf32>
    %611 = arith.divf %609, %610 : vector<2x8xf32>
    %612 = vector.extract_strided_slice %593 {offsets = [0, 16], sizes = [2, 8], strides = [1, 1]} : vector<2x24xf32> to vector<2x8xf32>
    %613 = vector.extract_strided_slice %595 {offsets = [0, 16], sizes = [2, 8], strides = [1, 1]} : vector<2x24xf32> to vector<2x8xf32>
    %614 = arith.mulf %603, %613 : vector<2x8xf32>
    %615 = arith.addf %612, %614 : vector<2x8xf32>
    %616 = math.tanh %615 : vector<2x8xf32>
    %cst_116 = arith.constant 1.000000e+00 : f32
    %617 = vector.broadcast %cst_116 : f32 to vector<2x8xf32>
    %618 = arith.subf %617, %611 : vector<2x8xf32>
    %619 = arith.mulf %618, %616 : vector<2x8xf32>
    %620 = arith.mulf %611, %560 : vector<2x8xf32>
    %621 = arith.addf %619, %620 : vector<2x8xf32>
    %c0_117 = arith.constant 0 : index
    %c64 = arith.constant 64 : index
    %622 = vector.load %arg14[%c0_117, %c64] : memref<2x128xf32, #tpu.memory_space<vmem>>, vector<2x8xf32>
    tpu.vector_store %arg14[%c0_117, %c64], %621 {strides = array<i32>} : memref<2x128xf32, #tpu.memory_space<vmem>>, vector<2x8xf32>,
    %623 = vector.extract_strided_slice %66 {offsets = [18, 0], sizes = [2, 24], strides = [1, 1]} : vector<32x24xf32> to vector<2x24xf32>
    %624 = vector.extract_strided_slice %623 {offsets = [0, 0], sizes = [2, 8], strides = [1, 1]} : vector<2x24xf32> to vector<2x8xf32>
    %625 = vector.extract_strided_slice %594 {offsets = [0, 0], sizes = [2, 8], strides = [1, 1]} : vector<2x24xf32> to vector<2x8xf32>
    %626 = arith.addf %624, %625 : vector<2x8xf32>
    %627 = arith.negf %626 : vector<2x8xf32>
    %628 = math.exp %627 : vector<2x8xf32>
    %cst_118 = arith.constant 1.000000e+00 : f32
    %629 = vector.broadcast %cst_118 : f32 to vector<2x8xf32>
    %630 = arith.addf %629, %628 : vector<2x8xf32>
    %631 = arith.divf %629, %630 : vector<2x8xf32>
    %632 = vector.extract_strided_slice %623 {offsets = [0, 8], sizes = [2, 8], strides = [1, 1]} : vector<2x24xf32> to vector<2x8xf32>
    %633 = vector.extract_strided_slice %594 {offsets = [0, 8], sizes = [2, 8], strides = [1, 1]} : vector<2x24xf32> to vector<2x8xf32>
    %634 = arith.addf %632, %633 : vector<2x8xf32>
    %635 = arith.negf %634 : vector<2x8xf32>
    %636 = math.exp %635 : vector<2x8xf32>
    %cst_119 = arith.constant 1.000000e+00 : f32
    %637 = vector.broadcast %cst_119 : f32 to vector<2x8xf32>
    %638 = arith.addf %637, %636 : vector<2x8xf32>
    %639 = arith.divf %637, %638 : vector<2x8xf32>
    %640 = vector.extract_strided_slice %623 {offsets = [0, 16], sizes = [2, 8], strides = [1, 1]} : vector<2x24xf32> to vector<2x8xf32>
    %641 = vector.extract_strided_slice %594 {offsets = [0, 16], sizes = [2, 8], strides = [1, 1]} : vector<2x24xf32> to vector<2x8xf32>
    %642 = arith.mulf %631, %641 : vector<2x8xf32>
    %643 = arith.addf %640, %642 : vector<2x8xf32>
    %644 = math.tanh %643 : vector<2x8xf32>
    %cst_120 = arith.constant 1.000000e+00 : f32
    %645 = vector.broadcast %cst_120 : f32 to vector<2x8xf32>
    %646 = arith.subf %645, %639 : vector<2x8xf32>
    %647 = arith.mulf %646, %644 : vector<2x8xf32>
    %648 = arith.mulf %639, %588 : vector<2x8xf32>
    %649 = arith.addf %647, %648 : vector<2x8xf32>
    %650 = tpu.concatenate %649, %621 in 1 : vector<2x8xf32>, vector<2x8xf32> -> vector<2x16xf32>
    %cst_121 = arith.constant dense<0.000000e+00> : vector<2x72xf32>
    %651 = tpu.matmul %650, %67, %cst_121 {dimension_numbers = #tpu.dot_dimension_numbers<[1], [0], [0], [1], [0, 0, 1, 1], [], []>} : vector<2x16xf32>, vector<16x72xf32>, vector<2x72xf32> -> vector<2x72xf32>
    %652 = vector.broadcast %68 : vector<1x72xf32> to vector<2x72xf32>
    %653 = arith.addf %651, %652 : vector<2x72xf32>
    %654 = vector.extract_strided_slice %653 {offsets = [0, 0], sizes = [2, 24], strides = [1, 1]} : vector<2x72xf32> to vector<2x24xf32>
    %655 = vector.extract_strided_slice %653 {offsets = [0, 24], sizes = [2, 24], strides = [1, 1]} : vector<2x72xf32> to vector<2x24xf32>
    %656 = vector.extract_strided_slice %653 {offsets = [0, 48], sizes = [2, 24], strides = [1, 1]} : vector<2x72xf32> to vector<2x24xf32>
    %657 = vector.extract_strided_slice %654 {offsets = [0, 0], sizes = [2, 8], strides = [1, 1]} : vector<2x24xf32> to vector<2x8xf32>
    %658 = vector.extract_strided_slice %656 {offsets = [0, 0], sizes = [2, 8], strides = [1, 1]} : vector<2x24xf32> to vector<2x8xf32>
    %659 = arith.addf %657, %658 : vector<2x8xf32>
    %660 = arith.negf %659 : vector<2x8xf32>
    %661 = math.exp %660 : vector<2x8xf32>
    %cst_122 = arith.constant 1.000000e+00 : f32
    %662 = vector.broadcast %cst_122 : f32 to vector<2x8xf32>
    %663 = arith.addf %662, %661 : vector<2x8xf32>
    %664 = arith.divf %662, %663 : vector<2x8xf32>
    %665 = vector.extract_strided_slice %654 {offsets = [0, 8], sizes = [2, 8], strides = [1, 1]} : vector<2x24xf32> to vector<2x8xf32>
    %666 = vector.extract_strided_slice %656 {offsets = [0, 8], sizes = [2, 8], strides = [1, 1]} : vector<2x24xf32> to vector<2x8xf32>
    %667 = arith.addf %665, %666 : vector<2x8xf32>
    %668 = arith.negf %667 : vector<2x8xf32>
    %669 = math.exp %668 : vector<2x8xf32>
    %cst_123 = arith.constant 1.000000e+00 : f32
    %670 = vector.broadcast %cst_123 : f32 to vector<2x8xf32>
    %671 = arith.addf %670, %669 : vector<2x8xf32>
    %672 = arith.divf %670, %671 : vector<2x8xf32>
    %673 = vector.extract_strided_slice %654 {offsets = [0, 16], sizes = [2, 8], strides = [1, 1]} : vector<2x24xf32> to vector<2x8xf32>
    %674 = vector.extract_strided_slice %656 {offsets = [0, 16], sizes = [2, 8], strides = [1, 1]} : vector<2x24xf32> to vector<2x8xf32>
    %675 = arith.mulf %664, %674 : vector<2x8xf32>
    %676 = arith.addf %673, %675 : vector<2x8xf32>
    %677 = math.tanh %676 : vector<2x8xf32>
    %cst_124 = arith.constant 1.000000e+00 : f32
    %678 = vector.broadcast %cst_124 : f32 to vector<2x8xf32>
    %679 = arith.subf %678, %672 : vector<2x8xf32>
    %680 = arith.mulf %679, %677 : vector<2x8xf32>
    %681 = arith.mulf %672, %621 : vector<2x8xf32>
    %682 = arith.addf %680, %681 : vector<2x8xf32>
    %c0_125 = arith.constant 0 : index
    %c72 = arith.constant 72 : index
    %683 = vector.load %arg14[%c0_125, %c72] : memref<2x128xf32, #tpu.memory_space<vmem>>, vector<2x8xf32>
    tpu.vector_store %arg14[%c0_125, %c72], %682 {strides = array<i32>} : memref<2x128xf32, #tpu.memory_space<vmem>>, vector<2x8xf32>,
    %684 = vector.extract_strided_slice %66 {offsets = [20, 0], sizes = [2, 24], strides = [1, 1]} : vector<32x24xf32> to vector<2x24xf32>
    %685 = vector.extract_strided_slice %684 {offsets = [0, 0], sizes = [2, 8], strides = [1, 1]} : vector<2x24xf32> to vector<2x8xf32>
    %686 = vector.extract_strided_slice %655 {offsets = [0, 0], sizes = [2, 8], strides = [1, 1]} : vector<2x24xf32> to vector<2x8xf32>
    %687 = arith.addf %685, %686 : vector<2x8xf32>
    %688 = arith.negf %687 : vector<2x8xf32>
    %689 = math.exp %688 : vector<2x8xf32>
    %cst_126 = arith.constant 1.000000e+00 : f32
    %690 = vector.broadcast %cst_126 : f32 to vector<2x8xf32>
    %691 = arith.addf %690, %689 : vector<2x8xf32>
    %692 = arith.divf %690, %691 : vector<2x8xf32>
    %693 = vector.extract_strided_slice %684 {offsets = [0, 8], sizes = [2, 8], strides = [1, 1]} : vector<2x24xf32> to vector<2x8xf32>
    %694 = vector.extract_strided_slice %655 {offsets = [0, 8], sizes = [2, 8], strides = [1, 1]} : vector<2x24xf32> to vector<2x8xf32>
    %695 = arith.addf %693, %694 : vector<2x8xf32>
    %696 = arith.negf %695 : vector<2x8xf32>
    %697 = math.exp %696 : vector<2x8xf32>
    %cst_127 = arith.constant 1.000000e+00 : f32
    %698 = vector.broadcast %cst_127 : f32 to vector<2x8xf32>
    %699 = arith.addf %698, %697 : vector<2x8xf32>
    %700 = arith.divf %698, %699 : vector<2x8xf32>
    %701 = vector.extract_strided_slice %684 {offsets = [0, 16], sizes = [2, 8], strides = [1, 1]} : vector<2x24xf32> to vector<2x8xf32>
    %702 = vector.extract_strided_slice %655 {offsets = [0, 16], sizes = [2, 8], strides = [1, 1]} : vector<2x24xf32> to vector<2x8xf32>
    %703 = arith.mulf %692, %702 : vector<2x8xf32>
    %704 = arith.addf %701, %703 : vector<2x8xf32>
    %705 = math.tanh %704 : vector<2x8xf32>
    %cst_128 = arith.constant 1.000000e+00 : f32
    %706 = vector.broadcast %cst_128 : f32 to vector<2x8xf32>
    %707 = arith.subf %706, %700 : vector<2x8xf32>
    %708 = arith.mulf %707, %705 : vector<2x8xf32>
    %709 = arith.mulf %700, %649 : vector<2x8xf32>
    %710 = arith.addf %708, %709 : vector<2x8xf32>
    %711 = tpu.concatenate %710, %682 in 1 : vector<2x8xf32>, vector<2x8xf32> -> vector<2x16xf32>
    %cst_129 = arith.constant dense<0.000000e+00> : vector<2x72xf32>
    %712 = tpu.matmul %711, %67, %cst_129 {dimension_numbers = #tpu.dot_dimension_numbers<[1], [0], [0], [1], [0, 0, 1, 1], [], []>} : vector<2x16xf32>, vector<16x72xf32>, vector<2x72xf32> -> vector<2x72xf32>
    %713 = vector.broadcast %68 : vector<1x72xf32> to vector<2x72xf32>
    %714 = arith.addf %712, %713 : vector<2x72xf32>
    %715 = vector.extract_strided_slice %714 {offsets = [0, 0], sizes = [2, 24], strides = [1, 1]} : vector<2x72xf32> to vector<2x24xf32>
    %716 = vector.extract_strided_slice %714 {offsets = [0, 24], sizes = [2, 24], strides = [1, 1]} : vector<2x72xf32> to vector<2x24xf32>
    %717 = vector.extract_strided_slice %714 {offsets = [0, 48], sizes = [2, 24], strides = [1, 1]} : vector<2x72xf32> to vector<2x24xf32>
    %718 = vector.extract_strided_slice %715 {offsets = [0, 0], sizes = [2, 8], strides = [1, 1]} : vector<2x24xf32> to vector<2x8xf32>
    %719 = vector.extract_strided_slice %717 {offsets = [0, 0], sizes = [2, 8], strides = [1, 1]} : vector<2x24xf32> to vector<2x8xf32>
    %720 = arith.addf %718, %719 : vector<2x8xf32>
    %721 = arith.negf %720 : vector<2x8xf32>
    %722 = math.exp %721 : vector<2x8xf32>
    %cst_130 = arith.constant 1.000000e+00 : f32
    %723 = vector.broadcast %cst_130 : f32 to vector<2x8xf32>
    %724 = arith.addf %723, %722 : vector<2x8xf32>
    %725 = arith.divf %723, %724 : vector<2x8xf32>
    %726 = vector.extract_strided_slice %715 {offsets = [0, 8], sizes = [2, 8], strides = [1, 1]} : vector<2x24xf32> to vector<2x8xf32>
    %727 = vector.extract_strided_slice %717 {offsets = [0, 8], sizes = [2, 8], strides = [1, 1]} : vector<2x24xf32> to vector<2x8xf32>
    %728 = arith.addf %726, %727 : vector<2x8xf32>
    %729 = arith.negf %728 : vector<2x8xf32>
    %730 = math.exp %729 : vector<2x8xf32>
    %cst_131 = arith.constant 1.000000e+00 : f32
    %731 = vector.broadcast %cst_131 : f32 to vector<2x8xf32>
    %732 = arith.addf %731, %730 : vector<2x8xf32>
    %733 = arith.divf %731, %732 : vector<2x8xf32>
    %734 = vector.extract_strided_slice %715 {offsets = [0, 16], sizes = [2, 8], strides = [1, 1]} : vector<2x24xf32> to vector<2x8xf32>
    %735 = vector.extract_strided_slice %717 {offsets = [0, 16], sizes = [2, 8], strides = [1, 1]} : vector<2x24xf32> to vector<2x8xf32>
    %736 = arith.mulf %725, %735 : vector<2x8xf32>
    %737 = arith.addf %734, %736 : vector<2x8xf32>
    %738 = math.tanh %737 : vector<2x8xf32>
    %cst_132 = arith.constant 1.000000e+00 : f32
    %739 = vector.broadcast %cst_132 : f32 to vector<2x8xf32>
    %740 = arith.subf %739, %733 : vector<2x8xf32>
    %741 = arith.mulf %740, %738 : vector<2x8xf32>
    %742 = arith.mulf %733, %682 : vector<2x8xf32>
    %743 = arith.addf %741, %742 : vector<2x8xf32>
    %c0_133 = arith.constant 0 : index
    %c80 = arith.constant 80 : index
    %744 = vector.load %arg14[%c0_133, %c80] : memref<2x128xf32, #tpu.memory_space<vmem>>, vector<2x8xf32>
    tpu.vector_store %arg14[%c0_133, %c80], %743 {strides = array<i32>} : memref<2x128xf32, #tpu.memory_space<vmem>>, vector<2x8xf32>,
    %745 = vector.extract_strided_slice %66 {offsets = [22, 0], sizes = [2, 24], strides = [1, 1]} : vector<32x24xf32> to vector<2x24xf32>
    %746 = vector.extract_strided_slice %745 {offsets = [0, 0], sizes = [2, 8], strides = [1, 1]} : vector<2x24xf32> to vector<2x8xf32>
    %747 = vector.extract_strided_slice %716 {offsets = [0, 0], sizes = [2, 8], strides = [1, 1]} : vector<2x24xf32> to vector<2x8xf32>
    %748 = arith.addf %746, %747 : vector<2x8xf32>
    %749 = arith.negf %748 : vector<2x8xf32>
    %750 = math.exp %749 : vector<2x8xf32>
    %cst_134 = arith.constant 1.000000e+00 : f32
    %751 = vector.broadcast %cst_134 : f32 to vector<2x8xf32>
    %752 = arith.addf %751, %750 : vector<2x8xf32>
    %753 = arith.divf %751, %752 : vector<2x8xf32>
    %754 = vector.extract_strided_slice %745 {offsets = [0, 8], sizes = [2, 8], strides = [1, 1]} : vector<2x24xf32> to vector<2x8xf32>
    %755 = vector.extract_strided_slice %716 {offsets = [0, 8], sizes = [2, 8], strides = [1, 1]} : vector<2x24xf32> to vector<2x8xf32>
    %756 = arith.addf %754, %755 : vector<2x8xf32>
    %757 = arith.negf %756 : vector<2x8xf32>
    %758 = math.exp %757 : vector<2x8xf32>
    %cst_135 = arith.constant 1.000000e+00 : f32
    %759 = vector.broadcast %cst_135 : f32 to vector<2x8xf32>
    %760 = arith.addf %759, %758 : vector<2x8xf32>
    %761 = arith.divf %759, %760 : vector<2x8xf32>
    %762 = vector.extract_strided_slice %745 {offsets = [0, 16], sizes = [2, 8], strides = [1, 1]} : vector<2x24xf32> to vector<2x8xf32>
    %763 = vector.extract_strided_slice %716 {offsets = [0, 16], sizes = [2, 8], strides = [1, 1]} : vector<2x24xf32> to vector<2x8xf32>
    %764 = arith.mulf %753, %763 : vector<2x8xf32>
    %765 = arith.addf %762, %764 : vector<2x8xf32>
    %766 = math.tanh %765 : vector<2x8xf32>
    %cst_136 = arith.constant 1.000000e+00 : f32
    %767 = vector.broadcast %cst_136 : f32 to vector<2x8xf32>
    %768 = arith.subf %767, %761 : vector<2x8xf32>
    %769 = arith.mulf %768, %766 : vector<2x8xf32>
    %770 = arith.mulf %761, %710 : vector<2x8xf32>
    %771 = arith.addf %769, %770 : vector<2x8xf32>
    %772 = tpu.concatenate %771, %743 in 1 : vector<2x8xf32>, vector<2x8xf32> -> vector<2x16xf32>
    %cst_137 = arith.constant dense<0.000000e+00> : vector<2x72xf32>
    %773 = tpu.matmul %772, %67, %cst_137 {dimension_numbers = #tpu.dot_dimension_numbers<[1], [0], [0], [1], [0, 0, 1, 1], [], []>} : vector<2x16xf32>, vector<16x72xf32>, vector<2x72xf32> -> vector<2x72xf32>
    %774 = vector.broadcast %68 : vector<1x72xf32> to vector<2x72xf32>
    %775 = arith.addf %773, %774 : vector<2x72xf32>
    %776 = vector.extract_strided_slice %775 {offsets = [0, 0], sizes = [2, 24], strides = [1, 1]} : vector<2x72xf32> to vector<2x24xf32>
    %777 = vector.extract_strided_slice %775 {offsets = [0, 24], sizes = [2, 24], strides = [1, 1]} : vector<2x72xf32> to vector<2x24xf32>
    %778 = vector.extract_strided_slice %775 {offsets = [0, 48], sizes = [2, 24], strides = [1, 1]} : vector<2x72xf32> to vector<2x24xf32>
    %779 = vector.extract_strided_slice %776 {offsets = [0, 0], sizes = [2, 8], strides = [1, 1]} : vector<2x24xf32> to vector<2x8xf32>
    %780 = vector.extract_strided_slice %778 {offsets = [0, 0], sizes = [2, 8], strides = [1, 1]} : vector<2x24xf32> to vector<2x8xf32>
    %781 = arith.addf %779, %780 : vector<2x8xf32>
    %782 = arith.negf %781 : vector<2x8xf32>
    %783 = math.exp %782 : vector<2x8xf32>
    %cst_138 = arith.constant 1.000000e+00 : f32
    %784 = vector.broadcast %cst_138 : f32 to vector<2x8xf32>
    %785 = arith.addf %784, %783 : vector<2x8xf32>
    %786 = arith.divf %784, %785 : vector<2x8xf32>
    %787 = vector.extract_strided_slice %776 {offsets = [0, 8], sizes = [2, 8], strides = [1, 1]} : vector<2x24xf32> to vector<2x8xf32>
    %788 = vector.extract_strided_slice %778 {offsets = [0, 8], sizes = [2, 8], strides = [1, 1]} : vector<2x24xf32> to vector<2x8xf32>
    %789 = arith.addf %787, %788 : vector<2x8xf32>
    %790 = arith.negf %789 : vector<2x8xf32>
    %791 = math.exp %790 : vector<2x8xf32>
    %cst_139 = arith.constant 1.000000e+00 : f32
    %792 = vector.broadcast %cst_139 : f32 to vector<2x8xf32>
    %793 = arith.addf %792, %791 : vector<2x8xf32>
    %794 = arith.divf %792, %793 : vector<2x8xf32>
    %795 = vector.extract_strided_slice %776 {offsets = [0, 16], sizes = [2, 8], strides = [1, 1]} : vector<2x24xf32> to vector<2x8xf32>
    %796 = vector.extract_strided_slice %778 {offsets = [0, 16], sizes = [2, 8], strides = [1, 1]} : vector<2x24xf32> to vector<2x8xf32>
    %797 = arith.mulf %786, %796 : vector<2x8xf32>
    %798 = arith.addf %795, %797 : vector<2x8xf32>
    %799 = math.tanh %798 : vector<2x8xf32>
    %cst_140 = arith.constant 1.000000e+00 : f32
    %800 = vector.broadcast %cst_140 : f32 to vector<2x8xf32>
    %801 = arith.subf %800, %794 : vector<2x8xf32>
    %802 = arith.mulf %801, %799 : vector<2x8xf32>
    %803 = arith.mulf %794, %743 : vector<2x8xf32>
    %804 = arith.addf %802, %803 : vector<2x8xf32>
    %c0_141 = arith.constant 0 : index
    %c88 = arith.constant 88 : index
    %805 = vector.load %arg14[%c0_141, %c88] : memref<2x128xf32, #tpu.memory_space<vmem>>, vector<2x8xf32>
    tpu.vector_store %arg14[%c0_141, %c88], %804 {strides = array<i32>} : memref<2x128xf32, #tpu.memory_space<vmem>>, vector<2x8xf32>,
    %806 = vector.extract_strided_slice %66 {offsets = [24, 0], sizes = [2, 24], strides = [1, 1]} : vector<32x24xf32> to vector<2x24xf32>
    %807 = vector.extract_strided_slice %806 {offsets = [0, 0], sizes = [2, 8], strides = [1, 1]} : vector<2x24xf32> to vector<2x8xf32>
    %808 = vector.extract_strided_slice %777 {offsets = [0, 0], sizes = [2, 8], strides = [1, 1]} : vector<2x24xf32> to vector<2x8xf32>
    %809 = arith.addf %807, %808 : vector<2x8xf32>
    %810 = arith.negf %809 : vector<2x8xf32>
    %811 = math.exp %810 : vector<2x8xf32>
    %cst_142 = arith.constant 1.000000e+00 : f32
    %812 = vector.broadcast %cst_142 : f32 to vector<2x8xf32>
    %813 = arith.addf %812, %811 : vector<2x8xf32>
    %814 = arith.divf %812, %813 : vector<2x8xf32>
    %815 = vector.extract_strided_slice %806 {offsets = [0, 8], sizes = [2, 8], strides = [1, 1]} : vector<2x24xf32> to vector<2x8xf32>
    %816 = vector.extract_strided_slice %777 {offsets = [0, 8], sizes = [2, 8], strides = [1, 1]} : vector<2x24xf32> to vector<2x8xf32>
    %817 = arith.addf %815, %816 : vector<2x8xf32>
    %818 = arith.negf %817 : vector<2x8xf32>
    %819 = math.exp %818 : vector<2x8xf32>
    %cst_143 = arith.constant 1.000000e+00 : f32
    %820 = vector.broadcast %cst_143 : f32 to vector<2x8xf32>
    %821 = arith.addf %820, %819 : vector<2x8xf32>
    %822 = arith.divf %820, %821 : vector<2x8xf32>
    %823 = vector.extract_strided_slice %806 {offsets = [0, 16], sizes = [2, 8], strides = [1, 1]} : vector<2x24xf32> to vector<2x8xf32>
    %824 = vector.extract_strided_slice %777 {offsets = [0, 16], sizes = [2, 8], strides = [1, 1]} : vector<2x24xf32> to vector<2x8xf32>
    %825 = arith.mulf %814, %824 : vector<2x8xf32>
    %826 = arith.addf %823, %825 : vector<2x8xf32>
    %827 = math.tanh %826 : vector<2x8xf32>
    %cst_144 = arith.constant 1.000000e+00 : f32
    %828 = vector.broadcast %cst_144 : f32 to vector<2x8xf32>
    %829 = arith.subf %828, %822 : vector<2x8xf32>
    %830 = arith.mulf %829, %827 : vector<2x8xf32>
    %831 = arith.mulf %822, %771 : vector<2x8xf32>
    %832 = arith.addf %830, %831 : vector<2x8xf32>
    %833 = tpu.concatenate %832, %804 in 1 : vector<2x8xf32>, vector<2x8xf32> -> vector<2x16xf32>
    %cst_145 = arith.constant dense<0.000000e+00> : vector<2x72xf32>
    %834 = tpu.matmul %833, %67, %cst_145 {dimension_numbers = #tpu.dot_dimension_numbers<[1], [0], [0], [1], [0, 0, 1, 1], [], []>} : vector<2x16xf32>, vector<16x72xf32>, vector<2x72xf32> -> vector<2x72xf32>
    %835 = vector.broadcast %68 : vector<1x72xf32> to vector<2x72xf32>
    %836 = arith.addf %834, %835 : vector<2x72xf32>
    %837 = vector.extract_strided_slice %836 {offsets = [0, 0], sizes = [2, 24], strides = [1, 1]} : vector<2x72xf32> to vector<2x24xf32>
    %838 = vector.extract_strided_slice %836 {offsets = [0, 24], sizes = [2, 24], strides = [1, 1]} : vector<2x72xf32> to vector<2x24xf32>
    %839 = vector.extract_strided_slice %836 {offsets = [0, 48], sizes = [2, 24], strides = [1, 1]} : vector<2x72xf32> to vector<2x24xf32>
    %840 = vector.extract_strided_slice %837 {offsets = [0, 0], sizes = [2, 8], strides = [1, 1]} : vector<2x24xf32> to vector<2x8xf32>
    %841 = vector.extract_strided_slice %839 {offsets = [0, 0], sizes = [2, 8], strides = [1, 1]} : vector<2x24xf32> to vector<2x8xf32>
    %842 = arith.addf %840, %841 : vector<2x8xf32>
    %843 = arith.negf %842 : vector<2x8xf32>
    %844 = math.exp %843 : vector<2x8xf32>
    %cst_146 = arith.constant 1.000000e+00 : f32
    %845 = vector.broadcast %cst_146 : f32 to vector<2x8xf32>
    %846 = arith.addf %845, %844 : vector<2x8xf32>
    %847 = arith.divf %845, %846 : vector<2x8xf32>
    %848 = vector.extract_strided_slice %837 {offsets = [0, 8], sizes = [2, 8], strides = [1, 1]} : vector<2x24xf32> to vector<2x8xf32>
    %849 = vector.extract_strided_slice %839 {offsets = [0, 8], sizes = [2, 8], strides = [1, 1]} : vector<2x24xf32> to vector<2x8xf32>
    %850 = arith.addf %848, %849 : vector<2x8xf32>
    %851 = arith.negf %850 : vector<2x8xf32>
    %852 = math.exp %851 : vector<2x8xf32>
    %cst_147 = arith.constant 1.000000e+00 : f32
    %853 = vector.broadcast %cst_147 : f32 to vector<2x8xf32>
    %854 = arith.addf %853, %852 : vector<2x8xf32>
    %855 = arith.divf %853, %854 : vector<2x8xf32>
    %856 = vector.extract_strided_slice %837 {offsets = [0, 16], sizes = [2, 8], strides = [1, 1]} : vector<2x24xf32> to vector<2x8xf32>
    %857 = vector.extract_strided_slice %839 {offsets = [0, 16], sizes = [2, 8], strides = [1, 1]} : vector<2x24xf32> to vector<2x8xf32>
    %858 = arith.mulf %847, %857 : vector<2x8xf32>
    %859 = arith.addf %856, %858 : vector<2x8xf32>
    %860 = math.tanh %859 : vector<2x8xf32>
    %cst_148 = arith.constant 1.000000e+00 : f32
    %861 = vector.broadcast %cst_148 : f32 to vector<2x8xf32>
    %862 = arith.subf %861, %855 : vector<2x8xf32>
    %863 = arith.mulf %862, %860 : vector<2x8xf32>
    %864 = arith.mulf %855, %804 : vector<2x8xf32>
    %865 = arith.addf %863, %864 : vector<2x8xf32>
    %c0_149 = arith.constant 0 : index
    %c96 = arith.constant 96 : index
    %866 = vector.load %arg14[%c0_149, %c96] : memref<2x128xf32, #tpu.memory_space<vmem>>, vector<2x8xf32>
    tpu.vector_store %arg14[%c0_149, %c96], %865 {strides = array<i32>} : memref<2x128xf32, #tpu.memory_space<vmem>>, vector<2x8xf32>,
    %867 = vector.extract_strided_slice %66 {offsets = [26, 0], sizes = [2, 24], strides = [1, 1]} : vector<32x24xf32> to vector<2x24xf32>
    %868 = vector.extract_strided_slice %867 {offsets = [0, 0], sizes = [2, 8], strides = [1, 1]} : vector<2x24xf32> to vector<2x8xf32>
    %869 = vector.extract_strided_slice %838 {offsets = [0, 0], sizes = [2, 8], strides = [1, 1]} : vector<2x24xf32> to vector<2x8xf32>
    %870 = arith.addf %868, %869 : vector<2x8xf32>
    %871 = arith.negf %870 : vector<2x8xf32>
    %872 = math.exp %871 : vector<2x8xf32>
    %cst_150 = arith.constant 1.000000e+00 : f32
    %873 = vector.broadcast %cst_150 : f32 to vector<2x8xf32>
    %874 = arith.addf %873, %872 : vector<2x8xf32>
    %875 = arith.divf %873, %874 : vector<2x8xf32>
    %876 = vector.extract_strided_slice %867 {offsets = [0, 8], sizes = [2, 8], strides = [1, 1]} : vector<2x24xf32> to vector<2x8xf32>
    %877 = vector.extract_strided_slice %838 {offsets = [0, 8], sizes = [2, 8], strides = [1, 1]} : vector<2x24xf32> to vector<2x8xf32>
    %878 = arith.addf %876, %877 : vector<2x8xf32>
    %879 = arith.negf %878 : vector<2x8xf32>
    %880 = math.exp %879 : vector<2x8xf32>
    %cst_151 = arith.constant 1.000000e+00 : f32
    %881 = vector.broadcast %cst_151 : f32 to vector<2x8xf32>
    %882 = arith.addf %881, %880 : vector<2x8xf32>
    %883 = arith.divf %881, %882 : vector<2x8xf32>
    %884 = vector.extract_strided_slice %867 {offsets = [0, 16], sizes = [2, 8], strides = [1, 1]} : vector<2x24xf32> to vector<2x8xf32>
    %885 = vector.extract_strided_slice %838 {offsets = [0, 16], sizes = [2, 8], strides = [1, 1]} : vector<2x24xf32> to vector<2x8xf32>
    %886 = arith.mulf %875, %885 : vector<2x8xf32>
    %887 = arith.addf %884, %886 : vector<2x8xf32>
    %888 = math.tanh %887 : vector<2x8xf32>
    %cst_152 = arith.constant 1.000000e+00 : f32
    %889 = vector.broadcast %cst_152 : f32 to vector<2x8xf32>
    %890 = arith.subf %889, %883 : vector<2x8xf32>
    %891 = arith.mulf %890, %888 : vector<2x8xf32>
    %892 = arith.mulf %883, %832 : vector<2x8xf32>
    %893 = arith.addf %891, %892 : vector<2x8xf32>
    %894 = tpu.concatenate %893, %865 in 1 : vector<2x8xf32>, vector<2x8xf32> -> vector<2x16xf32>
    %cst_153 = arith.constant dense<0.000000e+00> : vector<2x72xf32>
    %895 = tpu.matmul %894, %67, %cst_153 {dimension_numbers = #tpu.dot_dimension_numbers<[1], [0], [0], [1], [0, 0, 1, 1], [], []>} : vector<2x16xf32>, vector<16x72xf32>, vector<2x72xf32> -> vector<2x72xf32>
    %896 = vector.broadcast %68 : vector<1x72xf32> to vector<2x72xf32>
    %897 = arith.addf %895, %896 : vector<2x72xf32>
    %898 = vector.extract_strided_slice %897 {offsets = [0, 0], sizes = [2, 24], strides = [1, 1]} : vector<2x72xf32> to vector<2x24xf32>
    %899 = vector.extract_strided_slice %897 {offsets = [0, 24], sizes = [2, 24], strides = [1, 1]} : vector<2x72xf32> to vector<2x24xf32>
    %900 = vector.extract_strided_slice %897 {offsets = [0, 48], sizes = [2, 24], strides = [1, 1]} : vector<2x72xf32> to vector<2x24xf32>
    %901 = vector.extract_strided_slice %898 {offsets = [0, 0], sizes = [2, 8], strides = [1, 1]} : vector<2x24xf32> to vector<2x8xf32>
    %902 = vector.extract_strided_slice %900 {offsets = [0, 0], sizes = [2, 8], strides = [1, 1]} : vector<2x24xf32> to vector<2x8xf32>
    %903 = arith.addf %901, %902 : vector<2x8xf32>
    %904 = arith.negf %903 : vector<2x8xf32>
    %905 = math.exp %904 : vector<2x8xf32>
    %cst_154 = arith.constant 1.000000e+00 : f32
    %906 = vector.broadcast %cst_154 : f32 to vector<2x8xf32>
    %907 = arith.addf %906, %905 : vector<2x8xf32>
    %908 = arith.divf %906, %907 : vector<2x8xf32>
    %909 = vector.extract_strided_slice %898 {offsets = [0, 8], sizes = [2, 8], strides = [1, 1]} : vector<2x24xf32> to vector<2x8xf32>
    %910 = vector.extract_strided_slice %900 {offsets = [0, 8], sizes = [2, 8], strides = [1, 1]} : vector<2x24xf32> to vector<2x8xf32>
    %911 = arith.addf %909, %910 : vector<2x8xf32>
    %912 = arith.negf %911 : vector<2x8xf32>
    %913 = math.exp %912 : vector<2x8xf32>
    %cst_155 = arith.constant 1.000000e+00 : f32
    %914 = vector.broadcast %cst_155 : f32 to vector<2x8xf32>
    %915 = arith.addf %914, %913 : vector<2x8xf32>
    %916 = arith.divf %914, %915 : vector<2x8xf32>
    %917 = vector.extract_strided_slice %898 {offsets = [0, 16], sizes = [2, 8], strides = [1, 1]} : vector<2x24xf32> to vector<2x8xf32>
    %918 = vector.extract_strided_slice %900 {offsets = [0, 16], sizes = [2, 8], strides = [1, 1]} : vector<2x24xf32> to vector<2x8xf32>
    %919 = arith.mulf %908, %918 : vector<2x8xf32>
    %920 = arith.addf %917, %919 : vector<2x8xf32>
    %921 = math.tanh %920 : vector<2x8xf32>
    %cst_156 = arith.constant 1.000000e+00 : f32
    %922 = vector.broadcast %cst_156 : f32 to vector<2x8xf32>
    %923 = arith.subf %922, %916 : vector<2x8xf32>
    %924 = arith.mulf %923, %921 : vector<2x8xf32>
    %925 = arith.mulf %916, %865 : vector<2x8xf32>
    %926 = arith.addf %924, %925 : vector<2x8xf32>
    %c0_157 = arith.constant 0 : index
    %c104 = arith.constant 104 : index
    %927 = vector.load %arg14[%c0_157, %c104] : memref<2x128xf32, #tpu.memory_space<vmem>>, vector<2x8xf32>
    tpu.vector_store %arg14[%c0_157, %c104], %926 {strides = array<i32>} : memref<2x128xf32, #tpu.memory_space<vmem>>, vector<2x8xf32>,
    %928 = vector.extract_strided_slice %66 {offsets = [28, 0], sizes = [2, 24], strides = [1, 1]} : vector<32x24xf32> to vector<2x24xf32>
    %929 = vector.extract_strided_slice %928 {offsets = [0, 0], sizes = [2, 8], strides = [1, 1]} : vector<2x24xf32> to vector<2x8xf32>
    %930 = vector.extract_strided_slice %899 {offsets = [0, 0], sizes = [2, 8], strides = [1, 1]} : vector<2x24xf32> to vector<2x8xf32>
    %931 = arith.addf %929, %930 : vector<2x8xf32>
    %932 = arith.negf %931 : vector<2x8xf32>
    %933 = math.exp %932 : vector<2x8xf32>
    %cst_158 = arith.constant 1.000000e+00 : f32
    %934 = vector.broadcast %cst_158 : f32 to vector<2x8xf32>
    %935 = arith.addf %934, %933 : vector<2x8xf32>
    %936 = arith.divf %934, %935 : vector<2x8xf32>
    %937 = vector.extract_strided_slice %928 {offsets = [0, 8], sizes = [2, 8], strides = [1, 1]} : vector<2x24xf32> to vector<2x8xf32>
    %938 = vector.extract_strided_slice %899 {offsets = [0, 8], sizes = [2, 8], strides = [1, 1]} : vector<2x24xf32> to vector<2x8xf32>
    %939 = arith.addf %937, %938 : vector<2x8xf32>
    %940 = arith.negf %939 : vector<2x8xf32>
    %941 = math.exp %940 : vector<2x8xf32>
    %cst_159 = arith.constant 1.000000e+00 : f32
    %942 = vector.broadcast %cst_159 : f32 to vector<2x8xf32>
    %943 = arith.addf %942, %941 : vector<2x8xf32>
    %944 = arith.divf %942, %943 : vector<2x8xf32>
    %945 = vector.extract_strided_slice %928 {offsets = [0, 16], sizes = [2, 8], strides = [1, 1]} : vector<2x24xf32> to vector<2x8xf32>
    %946 = vector.extract_strided_slice %899 {offsets = [0, 16], sizes = [2, 8], strides = [1, 1]} : vector<2x24xf32> to vector<2x8xf32>
    %947 = arith.mulf %936, %946 : vector<2x8xf32>
    %948 = arith.addf %945, %947 : vector<2x8xf32>
    %949 = math.tanh %948 : vector<2x8xf32>
    %cst_160 = arith.constant 1.000000e+00 : f32
    %950 = vector.broadcast %cst_160 : f32 to vector<2x8xf32>
    %951 = arith.subf %950, %944 : vector<2x8xf32>
    %952 = arith.mulf %951, %949 : vector<2x8xf32>
    %953 = arith.mulf %944, %893 : vector<2x8xf32>
    %954 = arith.addf %952, %953 : vector<2x8xf32>
    %955 = tpu.concatenate %954, %926 in 1 : vector<2x8xf32>, vector<2x8xf32> -> vector<2x16xf32>
    %cst_161 = arith.constant dense<0.000000e+00> : vector<2x72xf32>
    %956 = tpu.matmul %955, %67, %cst_161 {dimension_numbers = #tpu.dot_dimension_numbers<[1], [0], [0], [1], [0, 0, 1, 1], [], []>} : vector<2x16xf32>, vector<16x72xf32>, vector<2x72xf32> -> vector<2x72xf32>
    %957 = vector.broadcast %68 : vector<1x72xf32> to vector<2x72xf32>
    %958 = arith.addf %956, %957 : vector<2x72xf32>
    %959 = vector.extract_strided_slice %958 {offsets = [0, 0], sizes = [2, 24], strides = [1, 1]} : vector<2x72xf32> to vector<2x24xf32>
    %960 = vector.extract_strided_slice %958 {offsets = [0, 24], sizes = [2, 24], strides = [1, 1]} : vector<2x72xf32> to vector<2x24xf32>
    %961 = vector.extract_strided_slice %958 {offsets = [0, 48], sizes = [2, 24], strides = [1, 1]} : vector<2x72xf32> to vector<2x24xf32>
    %962 = vector.extract_strided_slice %959 {offsets = [0, 0], sizes = [2, 8], strides = [1, 1]} : vector<2x24xf32> to vector<2x8xf32>
    %963 = vector.extract_strided_slice %961 {offsets = [0, 0], sizes = [2, 8], strides = [1, 1]} : vector<2x24xf32> to vector<2x8xf32>
    %964 = arith.addf %962, %963 : vector<2x8xf32>
    %965 = arith.negf %964 : vector<2x8xf32>
    %966 = math.exp %965 : vector<2x8xf32>
    %cst_162 = arith.constant 1.000000e+00 : f32
    %967 = vector.broadcast %cst_162 : f32 to vector<2x8xf32>
    %968 = arith.addf %967, %966 : vector<2x8xf32>
    %969 = arith.divf %967, %968 : vector<2x8xf32>
    %970 = vector.extract_strided_slice %959 {offsets = [0, 8], sizes = [2, 8], strides = [1, 1]} : vector<2x24xf32> to vector<2x8xf32>
    %971 = vector.extract_strided_slice %961 {offsets = [0, 8], sizes = [2, 8], strides = [1, 1]} : vector<2x24xf32> to vector<2x8xf32>
    %972 = arith.addf %970, %971 : vector<2x8xf32>
    %973 = arith.negf %972 : vector<2x8xf32>
    %974 = math.exp %973 : vector<2x8xf32>
    %cst_163 = arith.constant 1.000000e+00 : f32
    %975 = vector.broadcast %cst_163 : f32 to vector<2x8xf32>
    %976 = arith.addf %975, %974 : vector<2x8xf32>
    %977 = arith.divf %975, %976 : vector<2x8xf32>
    %978 = vector.extract_strided_slice %959 {offsets = [0, 16], sizes = [2, 8], strides = [1, 1]} : vector<2x24xf32> to vector<2x8xf32>
    %979 = vector.extract_strided_slice %961 {offsets = [0, 16], sizes = [2, 8], strides = [1, 1]} : vector<2x24xf32> to vector<2x8xf32>
    %980 = arith.mulf %969, %979 : vector<2x8xf32>
    %981 = arith.addf %978, %980 : vector<2x8xf32>
    %982 = math.tanh %981 : vector<2x8xf32>
    %cst_164 = arith.constant 1.000000e+00 : f32
    %983 = vector.broadcast %cst_164 : f32 to vector<2x8xf32>
    %984 = arith.subf %983, %977 : vector<2x8xf32>
    %985 = arith.mulf %984, %982 : vector<2x8xf32>
    %986 = arith.mulf %977, %926 : vector<2x8xf32>
    %987 = arith.addf %985, %986 : vector<2x8xf32>
    %c0_165 = arith.constant 0 : index
    %c112 = arith.constant 112 : index
    %988 = vector.load %arg14[%c0_165, %c112] : memref<2x128xf32, #tpu.memory_space<vmem>>, vector<2x8xf32>
    tpu.vector_store %arg14[%c0_165, %c112], %987 {strides = array<i32>} : memref<2x128xf32, #tpu.memory_space<vmem>>, vector<2x8xf32>,
    %989 = vector.extract_strided_slice %66 {offsets = [30, 0], sizes = [2, 24], strides = [1, 1]} : vector<32x24xf32> to vector<2x24xf32>
    %990 = vector.extract_strided_slice %989 {offsets = [0, 0], sizes = [2, 8], strides = [1, 1]} : vector<2x24xf32> to vector<2x8xf32>
    %991 = vector.extract_strided_slice %960 {offsets = [0, 0], sizes = [2, 8], strides = [1, 1]} : vector<2x24xf32> to vector<2x8xf32>
    %992 = arith.addf %990, %991 : vector<2x8xf32>
    %993 = arith.negf %992 : vector<2x8xf32>
    %994 = math.exp %993 : vector<2x8xf32>
    %cst_166 = arith.constant 1.000000e+00 : f32
    %995 = vector.broadcast %cst_166 : f32 to vector<2x8xf32>
    %996 = arith.addf %995, %994 : vector<2x8xf32>
    %997 = arith.divf %995, %996 : vector<2x8xf32>
    %998 = vector.extract_strided_slice %989 {offsets = [0, 8], sizes = [2, 8], strides = [1, 1]} : vector<2x24xf32> to vector<2x8xf32>
    %999 = vector.extract_strided_slice %960 {offsets = [0, 8], sizes = [2, 8], strides = [1, 1]} : vector<2x24xf32> to vector<2x8xf32>
    %1000 = arith.addf %998, %999 : vector<2x8xf32>
    %1001 = arith.negf %1000 : vector<2x8xf32>
    %1002 = math.exp %1001 : vector<2x8xf32>
    %cst_167 = arith.constant 1.000000e+00 : f32
    %1003 = vector.broadcast %cst_167 : f32 to vector<2x8xf32>
    %1004 = arith.addf %1003, %1002 : vector<2x8xf32>
    %1005 = arith.divf %1003, %1004 : vector<2x8xf32>
    %1006 = vector.extract_strided_slice %989 {offsets = [0, 16], sizes = [2, 8], strides = [1, 1]} : vector<2x24xf32> to vector<2x8xf32>
    %1007 = vector.extract_strided_slice %960 {offsets = [0, 16], sizes = [2, 8], strides = [1, 1]} : vector<2x24xf32> to vector<2x8xf32>
    %1008 = arith.mulf %997, %1007 : vector<2x8xf32>
    %1009 = arith.addf %1006, %1008 : vector<2x8xf32>
    %1010 = math.tanh %1009 : vector<2x8xf32>
    %cst_168 = arith.constant 1.000000e+00 : f32
    %1011 = vector.broadcast %cst_168 : f32 to vector<2x8xf32>
    %1012 = arith.subf %1011, %1005 : vector<2x8xf32>
    %1013 = arith.mulf %1012, %1010 : vector<2x8xf32>
    %1014 = arith.mulf %1005, %954 : vector<2x8xf32>
    %1015 = arith.addf %1013, %1014 : vector<2x8xf32>
    %1016 = tpu.concatenate %1015, %987 in 1 : vector<2x8xf32>, vector<2x8xf32> -> vector<2x16xf32>
    %cst_169 = arith.constant dense<0.000000e+00> : vector<2x72xf32>
    %1017 = tpu.matmul %1016, %67, %cst_169 {dimension_numbers = #tpu.dot_dimension_numbers<[1], [0], [0], [1], [0, 0, 1, 1], [], []>} : vector<2x16xf32>, vector<16x72xf32>, vector<2x72xf32> -> vector<2x72xf32>
    %1018 = vector.broadcast %68 : vector<1x72xf32> to vector<2x72xf32>
    %1019 = arith.addf %1017, %1018 : vector<2x72xf32>
    %1020 = vector.extract_strided_slice %1019 {offsets = [0, 0], sizes = [2, 24], strides = [1, 1]} : vector<2x72xf32> to vector<2x24xf32>
    %1021 = vector.extract_strided_slice %1019 {offsets = [0, 48], sizes = [2, 24], strides = [1, 1]} : vector<2x72xf32> to vector<2x24xf32>
    %1022 = vector.extract_strided_slice %1020 {offsets = [0, 0], sizes = [2, 8], strides = [1, 1]} : vector<2x24xf32> to vector<2x8xf32>
    %1023 = vector.extract_strided_slice %1021 {offsets = [0, 0], sizes = [2, 8], strides = [1, 1]} : vector<2x24xf32> to vector<2x8xf32>
    %1024 = arith.addf %1022, %1023 : vector<2x8xf32>
    %1025 = arith.negf %1024 : vector<2x8xf32>
    %1026 = math.exp %1025 : vector<2x8xf32>
    %cst_170 = arith.constant 1.000000e+00 : f32
    %1027 = vector.broadcast %cst_170 : f32 to vector<2x8xf32>
    %1028 = arith.addf %1027, %1026 : vector<2x8xf32>
    %1029 = arith.divf %1027, %1028 : vector<2x8xf32>
    %1030 = vector.extract_strided_slice %1020 {offsets = [0, 8], sizes = [2, 8], strides = [1, 1]} : vector<2x24xf32> to vector<2x8xf32>
    %1031 = vector.extract_strided_slice %1021 {offsets = [0, 8], sizes = [2, 8], strides = [1, 1]} : vector<2x24xf32> to vector<2x8xf32>
    %1032 = arith.addf %1030, %1031 : vector<2x8xf32>
    %1033 = arith.negf %1032 : vector<2x8xf32>
    %1034 = math.exp %1033 : vector<2x8xf32>
    %cst_171 = arith.constant 1.000000e+00 : f32
    %1035 = vector.broadcast %cst_171 : f32 to vector<2x8xf32>
    %1036 = arith.addf %1035, %1034 : vector<2x8xf32>
    %1037 = arith.divf %1035, %1036 : vector<2x8xf32>
    %1038 = vector.extract_strided_slice %1020 {offsets = [0, 16], sizes = [2, 8], strides = [1, 1]} : vector<2x24xf32> to vector<2x8xf32>
    %1039 = vector.extract_strided_slice %1021 {offsets = [0, 16], sizes = [2, 8], strides = [1, 1]} : vector<2x24xf32> to vector<2x8xf32>
    %1040 = arith.mulf %1029, %1039 : vector<2x8xf32>
    %1041 = arith.addf %1038, %1040 : vector<2x8xf32>
    %1042 = math.tanh %1041 : vector<2x8xf32>
    %cst_172 = arith.constant 1.000000e+00 : f32
    %1043 = vector.broadcast %cst_172 : f32 to vector<2x8xf32>
    %1044 = arith.subf %1043, %1037 : vector<2x8xf32>
    %1045 = arith.mulf %1044, %1042 : vector<2x8xf32>
    %1046 = arith.mulf %1037, %987 : vector<2x8xf32>
    %1047 = arith.addf %1045, %1046 : vector<2x8xf32>
    %c0_173 = arith.constant 0 : index
    %c120 = arith.constant 120 : index
    %1048 = vector.load %arg14[%c0_173, %c120] : memref<2x128xf32, #tpu.memory_space<vmem>>, vector<2x8xf32>
    tpu.vector_store %arg14[%c0_173, %c120], %1047 {strides = array<i32>} : memref<2x128xf32, #tpu.memory_space<vmem>>, vector<2x8xf32>,
    return
  }
}

</mosaic_0001>

<llo_original>
// kernel: eq.1
$region0: #{eq.1}
  %s0 = inlined_call_operand.vmem [shape: s32[16,2], index: 0, kind: input, shape index: {}]
  %s1 = inlined_call_operand.vmem [shape: s32[32], index: 1, kind: output, shape index: {}]
  $region1: #{eq.1} parent=0
    #allocation0 [shape = 'u8[4096]{0}', space=vmem, size = 0x1000, scoped, tag = 'scoped mem for output reshape']
    %v2 = vld [vmem:[%s0] sm:$0x1]
    %vm3 = vcmask 15360
    %4 = vst.msk [vmem:[#allocation0] sm:$0x1] %vm3, %v2
    %s5 = scalar_lea.vmem %s0, 15
    %v6 = vld [vmem:[%s5] sm:$0x1]
    %7 = vrot.lane.b32.xlu0 %v6, 30
    %v8 = vpop.permute.xlu0 %7
    %vm9 = vcmask 261360
    %10 = vst.msk [vmem:[#allocation0] sm:$0x1] %vm9, %v8
    %s11 = scalar_lea.vmem %s0, 14
    %v12 = vld [vmem:[%s11] sm:$0x1]
    %13 = vrot.lane.b32.xlu0 %v12, 28
    %v14 = vpop.permute.xlu0 %13
    %vm15 = vcmask 244960
    %16 = vst.msk [vmem:[#allocation0] sm:$0x1] %vm15, %v14
    %s17 = scalar_lea.vmem %s0, 13
    %v18 = vld [vmem:[%s17] sm:$0x1]
    %19 = vrot.lane.b32.xlu0 %v18, 26
    %v20 = vpop.permute.xlu0 %19
    %vm21 = vcmask 228560
    %22 = vst.msk [vmem:[#allocation0] sm:$0x1] %vm21, %v20
    %s23 = scalar_lea.vmem %s0, 12
    %v24 = vld [vmem:[%s23] sm:$0x1]
    %25 = vrot.lane.b32.xlu0 %v24, 24
    %v26 = vpop.permute.xlu0 %25
    %vm27 = vcmask 212160
    %28 = vst.msk [vmem:[#allocation0] sm:$0x1] %vm27, %v26
    %s29 = scalar_lea.vmem %s0, 11
    %v30 = vld [vmem:[%s29] sm:$0x1]
    %31 = vrot.lane.b32.xlu0 %v30, 22
    %v32 = vpop.permute.xlu0 %31
    %vm33 = vcmask 195760
    %34 = vst.msk [vmem:[#allocation0] sm:$0x1] %vm33, %v32
    %s35 = scalar_lea.vmem %s0, 10
    %v36 = vld [vmem:[%s35] sm:$0x1]
    %37 = vrot.lane.b32.xlu0 %v36, 20
    %v38 = vpop.permute.xlu0 %37
    %vm39 = vcmask 179360
    %40 = vst.msk [vmem:[#allocation0] sm:$0x1] %vm39, %v38
    %s41 = scalar_lea.vmem %s0, 9
    %v42 = vld [vmem:[%s41] sm:$0x1]
    %43 = vrot.lane.b32.xlu0 %v42, 18
    %v44 = vpop.permute.xlu0 %43
    %vm45 = vcmask 162960
    %46 = vst.msk [vmem:[#allocation0] sm:$0x1] %vm45, %v44
    %s47 = scalar_lea.vmem %s0, 8
    %v48 = vld [vmem:[%s47] sm:$0x1]
    %49 = vrot.lane.b32.xlu0 %v48, 16
    %v50 = vpop.permute.xlu0 %49
    %vm51 = vcmask 146560
    %52 = vst.msk [vmem:[#allocation0] sm:$0x1] %vm51, %v50
    %s53 = scalar_lea.vmem %s0, 7
    %v54 = vld [vmem:[%s53] sm:$0x1]
    %55 = vrot.lane.b32.xlu0 %v54, 14
    %v56 = vpop.permute.xlu0 %55
    %vm57 = vcmask 130160
    %58 = vst.msk [vmem:[#allocation0] sm:$0x1] %vm57, %v56
    %s59 = scalar_lea.vmem %s0, 6
    %v60 = vld [vmem:[%s59] sm:$0x1]
    %61 = vrot.lane.b32.xlu0 %v60, 12
    %v62 = vpop.permute.xlu0 %61
    %vm63 = vcmask 113760
    %64 = vst.msk [vmem:[#allocation0] sm:$0x1] %vm63, %v62
    %s65 = scalar_lea.vmem %s0, 5
    %v66 = vld [vmem:[%s65] sm:$0x1]
    %67 = vrot.lane.b32.xlu0 %v66, 10
    %v68 = vpop.permute.xlu0 %67
    %vm69 = vcmask 97360
    %70 = vst.msk [vmem:[#allocation0] sm:$0x1] %vm69, %v68
    %s71 = scalar_lea.vmem %s0, 4
    %v72 = vld [vmem:[%s71] sm:$0x1]
    %73 = vrot.lane.b32.xlu0 %v72, 8
    %v74 = vpop.permute.xlu0 %73
    %vm75 = vcmask 80960
    %76 = vst.msk [vmem:[#allocation0] sm:$0x1] %vm75, %v74
    %s77 = scalar_lea.vmem %s0, 3
    %v78 = vld [vmem:[%s77] sm:$0x1]
    %79 = vrot.lane.b32.xlu0 %v78, 6
    %v80 = vpop.permute.xlu0 %79
    %vm81 = vcmask 64560
    %82 = vst.msk [vmem:[#allocation0] sm:$0x1] %vm81, %v80
    %s83 = scalar_lea.vmem %s0, 2
    %v84 = vld [vmem:[%s83] sm:$0x1]
    %85 = vrot.lane.b32.xlu0 %v84, 4
    %v86 = vpop.permute.xlu0 %85
    %vm87 = vcmask 48160
    %88 = vst.msk [vmem:[#allocation0] sm:$0x1] %vm87, %v86
    %s89 = scalar_lea.vmem %s0, 1
    %v90 = vld [vmem:[%s89] sm:$0x1]
    %91 = vrot.lane.b32.xlu0 %v90, 2
    %v92 = vpop.permute.xlu0 %91
    %vm93 = vcmask 31760
    %94 = vst.msk [vmem:[#allocation0] sm:$0x1] %vm93, %v92
    %s96 = sshll.u32 1, 1
    %s97 = ssub.s32 %s96, 1
    %v99 = vld [vmem:[#allocation0] sm:%s97]
    %s100 = sshll.u32 1, 1
    %s101 = ssub.s32 %s100, 1
    %102 = vst [vmem:[%s1] sm:%s101] %v99

// kernel: recur_atn_decoder_forward.1
$region0: #{recur_atn_decoder_forward.1}
  #allocation0 [shape = 'u32[]', space=smem, size = 0x4, offset = 0x4, fixed_abs, tag = 'smem constant byte address 0x4 - core index']
  #allocation1 [shape = 'u32[144,128]{1,0:T(1,128)}', space=vmem, size = 0x12000, scoped, tag = 'internal scratch']
  %s0 = inlined_call_operand.vmem [shape: f32[2,32], index: 0, kind: input, shape index: {}]
  %s1 = inlined_call_operand.vmem [shape: f32[32,8], index: 1, kind: input, shape index: {}]
  %s2 = inlined_call_operand.vmem [shape: f32[32,32], index: 2, kind: input, shape index: {}]
  %s3 = inlined_call_operand.vmem [shape: f32[32,32], index: 3, kind: input, shape index: {}]
  %s4 = inlined_call_operand.vmem [shape: f32[1,32], index: 4, kind: input, shape index: {}]
  %s5 = inlined_call_operand.vmem [shape: f32[8,32], index: 5, kind: input, shape index: {}]
  %s6 = inlined_call_operand.vmem [shape: f32[1,32], index: 6, kind: input, shape index: {}]
  %s7 = inlined_call_operand.vmem [shape: f32[32,32], index: 7, kind: input, shape index: {}]
  %s8 = inlined_call_operand.vmem [shape: f32[32,32], index: 8, kind: input, shape index: {}]
  %s9 = inlined_call_operand.vmem [shape: f32[1,32], index: 9, kind: input, shape index: {}]
  %s10 = inlined_call_operand.vmem [shape: f32[32,24], index: 10, kind: input, shape index: {}]
  %s11 = inlined_call_operand.vmem [shape: f32[1,24], index: 11, kind: input, shape index: {}]
  %s12 = inlined_call_operand.vmem [shape: f32[16,72], index: 12, kind: input, shape index: {}]
  %s13 = inlined_call_operand.vmem [shape: f32[1,72], index: 13, kind: input, shape index: {}]
  %s14 = inlined_call_operand.vmem [shape: f32[2,128], index: 14, kind: output, shape index: {}]
  %s15 = sld [smem:[#allocation0]]
  $region66: #{recur_atn_decoder_forward.1} parent=0
    _
  %s17 = ssub.s32 1, %s15
  %s18 = scalar_select 0, %s17, %s15
  // Predicated region
  $region2: #{recur_atn_decoder_forward.1} parent=0 // pred_check
    _
  $region3: #{recur_atn_decoder_forward.1} parent=0 // pred_check_branch
    %20 = sbr.rel (0) target = $region5
  $region4: #{recur_atn_decoder_forward.1} parent=0 // pred_region
    _
  $region5: #{recur_atn_decoder_forward.1} parent=0 // pred_fallthru
    _
  // Predicated region
  $region6: #{recur_atn_decoder_forward.1} parent=0 // pred_check
    _
  $region7: #{recur_atn_decoder_forward.1} parent=0 // pred_check_branch
    %22 = sbr.rel (0) target = $region9
  $region8: #{recur_atn_decoder_forward.1} parent=0 // pred_region
    _
  $region9: #{recur_atn_decoder_forward.1} parent=0 // pred_fallthru
    _
  // Predicated region
  $region10: #{recur_atn_decoder_forward.1} parent=0 // pred_check
    _
  $region11: #{recur_atn_decoder_forward.1} parent=0 // pred_check_branch
    %24 = sbr.rel (0) target = $region13
  $region12: #{recur_atn_decoder_forward.1} parent=0 // pred_region
    _
  $region13: #{recur_atn_decoder_forward.1} parent=0 // pred_fallthru
    _
  // Predicated region
  $region14: #{recur_atn_decoder_forward.1} parent=0 // pred_check
    _
  $region15: #{recur_atn_decoder_forward.1} parent=0 // pred_check_branch
    %26 = sbr.rel (0) target = $region17
  $region16: #{recur_atn_decoder_forward.1} parent=0 // pred_region
    _
  $region17: #{recur_atn_decoder_forward.1} parent=0 // pred_fallthru
    _
  // Predicated region
  $region18: #{recur_atn_decoder_forward.1} parent=0 // pred_check
    _
  $region19: #{recur_atn_decoder_forward.1} parent=0 // pred_check_branch
    %28 = sbr.rel (0) target = $region21
  $region20: #{recur_atn_decoder_forward.1} parent=0 // pred_region
    _
  $region21: #{recur_atn_decoder_forward.1} parent=0 // pred_fallthru
    _
  // Predicated region
  $region22: #{recur_atn_decoder_forward.1} parent=0 // pred_check
    _
  $region23: #{recur_atn_decoder_forward.1} parent=0 // pred_check_branch
    %30 = sbr.rel (0) target = $region25
  $region24: #{recur_atn_decoder_forward.1} parent=0 // pred_region
    _
  $region25: #{recur_atn_decoder_forward.1} parent=0 // pred_fallthru
    _
  // Predicated region
  $region26: #{recur_atn_decoder_forward.1} parent=0 // pred_check
    _
  $region27: #{recur_atn_decoder_forward.1} parent=0 // pred_check_branch
    %32 = sbr.rel (0) target = $region29
  $region28: #{recur_atn_decoder_forward.1} parent=0 // pred_region
    _
  $region29: #{recur_atn_decoder_forward.1} parent=0 // pred_fallthru
    _
  // Predicated region
  $region30: #{recur_atn_decoder_forward.1} parent=0 // pred_check
    _
  $region31: #{recur_atn_decoder_forward.1} parent=0 // pred_check_branch
    %34 = sbr.rel (0) target = $region33
  $region32: #{recur_atn_decoder_forward.1} parent=0 // pred_region
    _
  $region33: #{recur_atn_decoder_forward.1} parent=0 // pred_fallthru
    _
  // Predicated region
  $region34: #{recur_atn_decoder_forward.1} parent=0 // pred_check
    _
  $region35: #{recur_atn_decoder_forward.1} parent=0 // pred_check_branch
    %36 = sbr.rel (0) target = $region37
  $region36: #{recur_atn_decoder_forward.1} parent=0 // pred_region
    _
  $region37: #{recur_atn_decoder_forward.1} parent=0 // pred_fallthru
    _
  // Predicated region
  $region38: #{recur_atn_decoder_forward.1} parent=0 // pred_check
    _
  $region39: #{recur_atn_decoder_forward.1} parent=0 // pred_check_branch
    %38 = sbr.rel (0) target = $region41
  $region40: #{recur_atn_decoder_forward.1} parent=0 // pred_region
    _
  $region41: #{recur_atn_decoder_forward.1} parent=0 // pred_fallthru
    _
  // Predicated region
  $region42: #{recur_atn_decoder_forward.1} parent=0 // pred_check
    _
  $region43: #{recur_atn_decoder_forward.1} parent=0 // pred_check_branch
    %40 = sbr.rel (0) target = $region45
  $region44: #{recur_atn_decoder_forward.1} parent=0 // pred_region
    _
  $region45: #{recur_atn_decoder_forward.1} parent=0 // pred_fallthru
    _
  // Predicated region
  $region46: #{recur_atn_decoder_forward.1} parent=0 // pred_check
    _
  $region47: #{recur_atn_decoder_forward.1} parent=0 // pred_check_branch
    %42 = sbr.rel (0) target = $region49
  $region48: #{recur_atn_decoder_forward.1} parent=0 // pred_region
    _
  $region49: #{recur_atn_decoder_forward.1} parent=0 // pred_fallthru
    _
  // Predicated region
  $region50: #{recur_atn_decoder_forward.1} parent=0 // pred_check
    _
  $region51: #{recur_atn_decoder_forward.1} parent=0 // pred_check_branch
    %44 = sbr.rel (0) target = $region53
  $region52: #{recur_atn_decoder_forward.1} parent=0 // pred_region
    _
  $region53: #{recur_atn_decoder_forward.1} parent=0 // pred_fallthru
    _
  // Predicated region
  $region54: #{recur_atn_decoder_forward.1} parent=0 // pred_check
    _
  $region55: #{recur_atn_decoder_forward.1} parent=0 // pred_check_branch
    %46 = sbr.rel (0) target = $region57
  $region56: #{recur_atn_decoder_forward.1} parent=0 // pred_region
    _
  $region57: #{recur_atn_decoder_forward.1} parent=0 // pred_fallthru
    _
  %v47 = vld [vmem:[%s0] sm:$0x3]
  %v48 = vld [vmem:[%s3] sm:$0xff]
  %v49 = vld [vmem:[%s3 + $0x8] sm:$0xff]
  %v50 = vld [vmem:[%s3 + $0x10] sm:$0xff]
  %v51 = vld [vmem:[%s3 + $0x18] sm:$0xff]
  %v52 = vld [vmem:[%s4] sm:$0x1]
  %v54 = vlaneseq
  %v55 = vshrl.u32 %v54, 7
  %v56 = vsub.s32 0, %v55
  %v57 = vrot.slane %v52, %v56
  %vm59 = vcmask 261120
  %v61 = vsel %vm59, %v47, 0
  %63 = vmatprep.subr.mxu0 0.0
  %64 = vmatpush1.msra.mxu0 0.0
  %65 = vmatprep.subr.mxu0 0.0
  %66 = vmatpush1.msra.mxu0 0.0
  %67 = vmatprep.subr.mxu0 0.0
  %68 = vmatpush1.msra.mxu0 0.0
  %69 = vmatprep.subr.mxu0 0.0
  %70 = vmatpush1.msra.mxu0 0.0
  %71 = vmatprep.subr.mxu0 0.0
  %72 = vmatpush1.msra.mxu0 0.0
  %73 = vmatprep.subr.mxu0 0.0
  %74 = vmatpush1.msra.mxu0 0.0
  %75 = vmatprep.subr.mxu0 0.0
  %76 = vmatpush1.msra.mxu0 0.0
  %77 = vmatprep.subr.mxu0 0.0
  %78 = vmatpush1.msra.mxu0 0.0
  %79 = vmatprep.subr.mxu0 0.0
  %80 = vmatpush1.msra.mxu0 0.0
  %81 = vmatprep.subr.mxu0 0.0
  %82 = vmatpush1.msra.mxu0 0.0
  %83 = vmatprep.subr.mxu0 0.0
  %84 = vmatpush1.msra.mxu0 0.0
  %85 = vmatprep.subr.mxu0 0.0
  %86 = vmatpush1.msra.mxu0 0.0
  %87 = vmatprep.subr.mxu0 0.0
  %88 = vmatpush1.msra.mxu0 %v51
  %89 = vmatprep.subr.mxu0 0.0
  %90 = vmatpush1.msra.mxu0 %v50
  %91 = vmatprep.subr.mxu0 0.0
  %92 = vmatpush1.msra.mxu0 %v49
  %93 = vmatprep.subr.mxu0 0.0
  %94 = vmatpush1.msra.mxu0 %v48
  %95 = vmatprep.subr.mxu0 0.0
  %96 = vmatpush2.msra.mxu0 0.0
  %97 = vmatprep.subr.mxu0 0.0
  %98 = vmatpush2.msra.mxu0 0.0
  %99 = vmatprep.subr.mxu0 0.0
  %100 = vmatpush2.msra.mxu0 0.0
  %101 = vmatprep.subr.mxu0 0.0
  %102 = vmatpush2.msra.mxu0 0.0
  %103 = vmatprep.subr.mxu0 0.0
  %104 = vmatpush2.msra.mxu0 0.0
  %105 = vmatprep.subr.mxu0 0.0
  %106 = vmatpush2.msra.mxu0 0.0
  %107 = vmatprep.subr.mxu0 0.0
  %108 = vmatpush2.msra.mxu0 0.0
  %109 = vmatprep.subr.mxu0 0.0
  %110 = vmatpush2.msra.mxu0 0.0
  %111 = vmatprep.subr.mxu0 0.0
  %112 = vmatpush2.msra.mxu0 0.0
  %113 = vmatprep.subr.mxu0 0.0
  %114 = vmatpush2.msra.mxu0 0.0
  %115 = vmatprep.subr.mxu0 0.0
  %116 = vmatpush2.msra.mxu0 0.0
  %117 = vmatprep.subr.mxu0 0.0
  %118 = vmatpush2.msra.mxu0 0.0
  %119 = vmatprep.subr.mxu0 0.0
  %120 = vmatpush2.msra.mxu0 0.0
  %121 = vmatprep.subr.mxu0 0.0
  %122 = vmatpush2.msra.mxu0 0.0
  %123 = vmatprep.subr.mxu0 0.0
  %124 = vmatpush2.msra.mxu0 0.0
  %125 = vmatprep.subr.mxu0 0.0
  %126 = vmatpush2.msra.mxu0 0.0
  %127 = vmatprep.mubr.f32.mxu0 0.0
  %128 = vmatmul.mubr.f32.gmra.mxu0 %v61
  %v129 = vpop.f32.mrf.mxu0
  %v130 = vadd.f32 %v57, %v129
  %v131 = vpop.f32.mrf.mxu0
  %132 = vdwg.mxu0
  %vm133 = vcmp.gt.f32.partialorder %v130, 0.0
  %v134 = vmul.f32 %v130, 0.1
  %v135 = vsel %vm133, %v130, %v134
  %v136 = vld [vmem:[%s2] sm:$0xff]
  %v137 = vld [vmem:[%s2 + $0x8] sm:$0xff]
  %v138 = vld [vmem:[%s2 + $0x10] sm:$0xff]
  %v139 = vld [vmem:[%s2 + $0x18] sm:$0xff]
  %v140 = vld [vmem:[%s1] sm:$0xff]
  %v141 = vld [vmem:[%s1 + $0x8] sm:$0xff]
  %v142 = vld [vmem:[%s1 + $0x10] sm:$0xff]
  %v143 = vld [vmem:[%s1 + $0x18] sm:$0xff]
  %v144 = vld [vmem:[%s5] sm:$0xff]
  %v145 = vld [vmem:[%s6] sm:$0x1]
  %v147 = vlaneseq
  %v148 = vshrl.u32 %v147, 7
  %v149 = vsub.s32 0, %v148
  %v150 = vrot.slane %v145, %v149
  %vm152 = vcmask 64512
  %v154 = vsel %vm152, %v140, 0
  %v157 = vsel %vm152, %v141, 0
  %v160 = vsel %vm152, %v142, 0
  %v163 = vsel %vm152, %v143, 0
  %165 = vmatprep.subr.mxu0 0.0
  %166 = vmatpush1.msra.mxu0 0.0
  %167 = vmatprep.subr.mxu0 0.0
  %168 = vmatpush1.msra.mxu0 0.0
  %169 = vmatprep.subr.mxu0 0.0
  %170 = vmatpush1.msra.mxu0 0.0
  %171 = vmatprep.subr.mxu0 0.0
  %172 = vmatpush1.msra.mxu0 0.0
  %173 = vmatprep.subr.mxu0 0.0
  %174 = vmatpush1.msra.mxu0 0.0
  %175 = vmatprep.subr.mxu0 0.0
  %176 = vmatpush1.msra.mxu0 0.0
  %177 = vmatprep.subr.mxu0 0.0
  %178 = vmatpush1.msra.mxu0 0.0
  %179 = vmatprep.subr.mxu0 0.0
  %180 = vmatpush1.msra.mxu0 0.0
  %181 = vmatprep.subr.mxu0 0.0
  %182 = vmatpush1.msra.mxu0 0.0
  %183 = vmatprep.subr.mxu0 0.0
  %184 = vmatpush1.msra.mxu0 0.0
  %185 = vmatprep.subr.mxu0 0.0
  %186 = vmatpush1.msra.mxu0 0.0
  %187 = vmatprep.subr.mxu0 0.0
  %188 = vmatpush1.msra.mxu0 0.0
  %189 = vmatprep.subr.mxu0 0.0
  %190 = vmatpush1.msra.mxu0 0.0
  %191 = vmatprep.subr.mxu0 0.0
  %192 = vmatpush1.msra.mxu0 0.0
  %193 = vmatprep.subr.mxu0 0.0
  %194 = vmatpush1.msra.mxu0 0.0
  %195 = vmatprep.subr.mxu0 0.0
  %196 = vmatpush1.msra.mxu0 %v144
  %197 = vmatprep.subr.mxu0 0.0
  %198 = vmatpush2.msra.mxu0 0.0
  %199 = vmatprep.subr.mxu0 0.0
  %200 = vmatpush2.msra.mxu0 0.0
  %201 = vmatprep.subr.mxu0 0.0
  %202 = vmatpush2.msra.mxu0 0.0
  %203 = vmatprep.subr.mxu0 0.0
  %204 = vmatpush2.msra.mxu0 0.0
  %205 = vmatprep.subr.mxu0 0.0
  %206 = vmatpush2.msra.mxu0 0.0
  %207 = vmatprep.subr.mxu0 0.0
  %208 = vmatpush2.msra.mxu0 0.0
  %209 = vmatprep.subr.mxu0 0.0
  %210 = vmatpush2.msra.mxu0 0.0
  %211 = vmatprep.subr.mxu0 0.0
  %212 = vmatpush2.msra.mxu0 0.0
  %213 = vmatprep.subr.mxu0 0.0
  %214 = vmatpush2.msra.mxu0 0.0
  %215 = vmatprep.subr.mxu0 0.0
  %216 = vmatpush2.msra.mxu0 0.0
  %217 = vmatprep.subr.mxu0 0.0
  %218 = vmatpush2.msra.mxu0 0.0
  %219 = vmatprep.subr.mxu0 0.0
  %220 = vmatpush2.msra.mxu0 0.0
  %221 = vmatprep.subr.mxu0 0.0
  %222 = vmatpush2.msra.mxu0 0.0
  %223 = vmatprep.subr.mxu0 0.0
  %224 = vmatpush2.msra.mxu0 0.0
  %225 = vmatprep.subr.mxu0 0.0
  %226 = vmatpush2.msra.mxu0 0.0
  %227 = vmatprep.subr.mxu0 0.0
  %228 = vmatpush2.msra.mxu0 0.0
  %229 = vmatprep.mubr.f32.mxu0 0.0
  %230 = vmatmul.mubr.f32.gmra.mxu0 %v154
  %v231 = vpop.f32.mrf.mxu0
  %v232 = vadd.f32 %v150, %v231
  %v233 = vpop.f32.mrf.mxu0
  %234 = vmatprep.mubr.f32.mxu0 0.0
  %235 = vmatmul.mubr.f32.gmra.mxu0 %v157
  %v236 = vpop.f32.mrf.mxu0
  %v237 = vadd.f32 %v150, %v236
  %v238 = vpop.f32.mrf.mxu0
  %239 = vmatprep.mubr.f32.mxu0 0.0
  %240 = vmatmul.mubr.f32.gmra.mxu0 %v160
  %v241 = vpop.f32.mrf.mxu0
  %v242 = vadd.f32 %v150, %v241
  %v243 = vpop.f32.mrf.mxu0
  %244 = vmatprep.mubr.f32.mxu0 0.0
  %245 = vmatmul.mubr.f32.gmra.mxu0 %v163
  %v246 = vpop.f32.mrf.mxu0
  %v247 = vadd.f32 %v150, %v246
  %v248 = vpop.f32.mrf.mxu0
  %249 = vdwg.mxu0
  %vm250 = vcmp.gt.f32.partialorder %v232, 0.0
  %vm251 = vcmp.gt.f32.partialorder %v237, 0.0
  %vm252 = vcmp.gt.f32.partialorder %v242, 0.0
  %vm253 = vcmp.gt.f32.partialorder %v247, 0.0
  %v254 = vmul.f32 %v232, 0.1
  %v255 = vmul.f32 %v237, 0.1
  %v256 = vmul.f32 %v242, 0.1
  %v257 = vmul.f32 %v247, 0.1
  %v258 = vsel %vm250, %v232, %v254
  %v259 = vsel %vm251, %v237, %v255
  %v260 = vsel %vm252, %v242, %v256
  %v261 = vsel %vm253, %v247, %v257
  %v263 = vsel %vm59, %v136, 0
  %v266 = vsel %vm59, %v137, 0
  %v269 = vsel %vm59, %v138, 0
  %v272 = vsel %vm59, %v139, 0
  %274 = vmatprep.subr.mxu0 0.0
  %275 = vmatpush1.msra.mxu0 0.0
  %276 = vmatprep.subr.mxu0 0.0
  %277 = vmatpush1.msra.mxu0 0.0
  %278 = vmatprep.subr.mxu0 0.0
  %279 = vmatpush1.msra.mxu0 0.0
  %280 = vmatprep.subr.mxu0 0.0
  %281 = vmatpush1.msra.mxu0 0.0
  %282 = vmatprep.subr.mxu0 0.0
  %283 = vmatpush1.msra.mxu0 0.0
  %284 = vmatprep.subr.mxu0 0.0
  %285 = vmatpush1.msra.mxu0 0.0
  %286 = vmatprep.subr.mxu0 0.0
  %287 = vmatpush1.msra.mxu0 0.0
  %288 = vmatprep.subr.mxu0 0.0
  %289 = vmatpush1.msra.mxu0 0.0
  %290 = vmatprep.subr.mxu0 0.0
  %291 = vmatpush1.msra.mxu0 0.0
  %292 = vmatprep.subr.mxu0 0.0
  %293 = vmatpush1.msra.mxu0 0.0
  %294 = vmatprep.subr.mxu0 0.0
  %295 = vmatpush1.msra.mxu0 0.0
  %296 = vmatprep.subr.mxu0 0.0
  %297 = vmatpush1.msra.mxu0 0.0
  %298 = vmatprep.subr.mxu0 0.0
  %299 = vmatpush1.msra.mxu0 %v261
  %300 = vmatprep.subr.mxu0 0.0
  %301 = vmatpush1.msra.mxu0 %v260
  %302 = vmatprep.subr.mxu0 0.0
  %303 = vmatpush1.msra.mxu0 %v259
  %304 = vmatprep.subr.mxu0 0.0
  %305 = vmatpush1.msra.mxu0 %v258
  %306 = vmatprep.subr.mxu0 0.0
  %307 = vmatpush2.msra.mxu0 0.0
  %308 = vmatprep.subr.mxu0 0.0
  %309 = vmatpush2.msra.mxu0 0.0
  %310 = vmatprep.subr.mxu0 0.0
  %311 = vmatpush2.msra.mxu0 0.0
  %312 = vmatprep.subr.mxu0 0.0
  %313 = vmatpush2.msra.mxu0 0.0
  %314 = vmatprep.subr.mxu0 0.0
  %315 = vmatpush2.msra.mxu0 0.0
  %316 = vmatprep.subr.mxu0 0.0
  %317 = vmatpush2.msra.mxu0 0.0
  %318 = vmatprep.subr.mxu0 0.0
  %319 = vmatpush2.msra.mxu0 0.0
  %320 = vmatprep.subr.mxu0 0.0
  %321 = vmatpush2.msra.mxu0 0.0
  %322 = vmatprep.subr.mxu0 0.0
  %323 = vmatpush2.msra.mxu0 0.0
  %324 = vmatprep.subr.mxu0 0.0
  %325 = vmatpush2.msra.mxu0 0.0
  %326 = vmatprep.subr.mxu0 0.0
  %327 = vmatpush2.msra.mxu0 0.0
  %328 = vmatprep.subr.mxu0 0.0
  %329 = vmatpush2.msra.mxu0 0.0
  %330 = vmatprep.subr.mxu0 0.0
  %331 = vmatpush2.msra.mxu0 0.0
  %332 = vmatprep.subr.mxu0 0.0
  %333 = vmatpush2.msra.mxu0 0.0
  %334 = vmatprep.subr.mxu0 0.0
  %335 = vmatpush2.msra.mxu0 0.0
  %336 = vmatprep.subr.mxu0 0.0
  %337 = vmatpush2.msra.mxu0 0.0
  %338 = vmatprep.mubr.f32.mxu0 0.0
  %339 = vmatmul.mubr.f32.gmra.mxu0 %v263
  %v340 = vpop.f32.mrf.mxu0
  %v341 = vadd.f32 %v258, %v340
  %v342 = vpop.f32.mrf.mxu0
  %343 = vmatprep.mubr.f32.mxu0 0.0
  %344 = vmatmul.mubr.f32.gmra.mxu0 %v266
  %v345 = vpop.f32.mrf.mxu0
  %v346 = vadd.f32 %v259, %v345
  %v347 = vpop.f32.mrf.mxu0
  %348 = vmatprep.mubr.f32.mxu0 0.0
  %349 = vmatmul.mubr.f32.gmra.mxu0 %v269
  %v350 = vpop.f32.mrf.mxu0
  %v351 = vadd.f32 %v260, %v350
  %v352 = vpop.f32.mrf.mxu0
  %353 = vmatprep.mubr.f32.mxu0 0.0
  %354 = vmatmul.mubr.f32.gmra.mxu0 %v272
  %v355 = vpop.f32.mrf.mxu0
  %v356 = vadd.f32 %v261, %v355
  %v357 = vpop.f32.mrf.mxu0
  %358 = vdwg.mxu0
  %v359 = vld [vmem:[%s8] sm:$0xff]
  %v360 = vld [vmem:[%s8 + $0x8] sm:$0xff]
  %v361 = vld [vmem:[%s8 + $0x10] sm:$0xff]
  %v362 = vld [vmem:[%s8 + $0x18] sm:$0xff]
  %v364 = vsel %vm59, %v135, 0
  %366 = vmatprep.subr.mxu0 0.0
  %367 = vmatpush1.msra.mxu0 0.0
  %368 = vmatprep.subr.mxu0 0.0
  %369 = vmatpush1.msra.mxu0 0.0
  %370 = vmatprep.subr.mxu0 0.0
  %371 = vmatpush1.msra.mxu0 0.0
  %372 = vmatprep.subr.mxu0 0.0
  %373 = vmatpush1.msra.mxu0 0.0
  %374 = vmatprep.subr.mxu0 0.0
  %375 = vmatpush1.msra.mxu0 0.0
  %376 = vmatprep.subr.mxu0 0.0
  %377 = vmatpush1.msra.mxu0 0.0
  %378 = vmatprep.subr.mxu0 0.0
  %379 = vmatpush1.msra.mxu0 0.0
  %380 = vmatprep.subr.mxu0 0.0
  %381 = vmatpush1.msra.mxu0 0.0
  %382 = vmatprep.subr.mxu0 0.0
  %383 = vmatpush1.msra.mxu0 0.0
  %384 = vmatprep.subr.mxu0 0.0
  %385 = vmatpush1.msra.mxu0 0.0
  %386 = vmatprep.subr.mxu0 0.0
  %387 = vmatpush1.msra.mxu0 0.0
  %388 = vmatprep.subr.mxu0 0.0
  %389 = vmatpush1.msra.mxu0 0.0
  %390 = vmatprep.subr.mxu0 0.0
  %391 = vmatpush1.msra.mxu0 %v362
  %392 = vmatprep.subr.mxu0 0.0
  %393 = vmatpush1.msra.mxu0 %v361
  %394 = vmatprep.subr.mxu0 0.0
  %395 = vmatpush1.msra.mxu0 %v360
  %396 = vmatprep.subr.mxu0 0.0
  %397 = vmatpush1.msra.mxu0 %v359
  %398 = vmatprep.subr.mxu0 0.0
  %399 = vmatpush2.msra.mxu0 0.0
  %400 = vmatprep.subr.mxu0 0.0
  %401 = vmatpush2.msra.mxu0 0.0
  %402 = vmatprep.subr.mxu0 0.0
  %403 = vmatpush2.msra.mxu0 0.0
  %404 = vmatprep.subr.mxu0 0.0
  %405 = vmatpush2.msra.mxu0 0.0
  %406 = vmatprep.subr.mxu0 0.0
  %407 = vmatpush2.msra.mxu0 0.0
  %408 = vmatprep.subr.mxu0 0.0
  %409 = vmatpush2.msra.mxu0 0.0
  %410 = vmatprep.subr.mxu0 0.0
  %411 = vmatpush2.msra.mxu0 0.0
  %412 = vmatprep.subr.mxu0 0.0
  %413 = vmatpush2.msra.mxu0 0.0
  %414 = vmatprep.subr.mxu0 0.0
  %415 = vmatpush2.msra.mxu0 0.0
  %416 = vmatprep.subr.mxu0 0.0
  %417 = vmatpush2.msra.mxu0 0.0
  %418 = vmatprep.subr.mxu0 0.0
  %419 = vmatpush2.msra.mxu0 0.0
  %420 = vmatprep.subr.mxu0 0.0
  %421 = vmatpush2.msra.mxu0 0.0
  %422 = vmatprep.subr.mxu0 0.0
  %423 = vmatpush2.msra.mxu0 0.0
  %424 = vmatprep.subr.mxu0 0.0
  %425 = vmatpush2.msra.mxu0 0.0
  %426 = vmatprep.subr.mxu0 0.0
  %427 = vmatpush2.msra.mxu0 0.0
  %428 = vmatprep.subr.mxu0 0.0
  %429 = vmatpush2.msra.mxu0 0.0
  %430 = vmatprep.mubr.f32.mxu0 0.0
  %431 = vmatmul.mubr.f32.gmra.mxu0 %v364
  %v432 = vpop.f32.mrf.mxu0
  %v433 = vadd.f32 0.0, %v432
  %v434 = vpop.f32.mrf.mxu0
  %435 = vdwg.mxu0
  %v436 = vlaneseq
  %v437 = vshrl.u32 %v436, 7
  %v438 = vadd.s32 %v437, 8
  %v439 = vadd.s32 %v437, 16
  %v440 = vadd.s32 %v437, 24
  %v441 = vlaneseq
  %v442 = vand.u32 %v441, 127
  %vm443 = vcmp.lt.s32.totalorder %v437, 0
  %v444 = vsub.s32 0, %v437
  %v445 = vsel %vm443, %v444, %v437
  %v446 = vshrl.u32 %v445, 1
  %v447 = vand.u32 %v445, 1
  %v448 = vsub.s32 0, %v447
  %v449 = vsel %vm443, %v448, %v447
  %vm450 = vcmp.lt.s32.totalorder %v438, 0
  %v451 = vsub.s32 0, %v438
  %v452 = vsel %vm450, %v451, %v438
  %v453 = vshrl.u32 %v452, 1
  %v454 = vand.u32 %v452, 1
  %v455 = vsub.s32 0, %v454
  %v456 = vsel %vm450, %v455, %v454
  %vm457 = vcmp.lt.s32.totalorder %v439, 0
  %v458 = vsub.s32 0, %v439
  %v459 = vsel %vm457, %v458, %v439
  %v460 = vshrl.u32 %v459, 1
  %v461 = vand.u32 %v459, 1
  %v462 = vsub.s32 0, %v461
  %v463 = vsel %vm457, %v462, %v461
  %vm464 = vcmp.lt.s32.totalorder %v440, 0
  %v465 = vsub.s32 0, %v440
  %v466 = vsel %vm464, %v465, %v440
  %v467 = vshrl.u32 %v466, 1
  %v468 = vand.u32 %v466, 1
  %v469 = vsub.s32 0, %v468
  %v470 = vsel %vm464, %v469, %v468
  %vm471 = vcmp.ne.s32.totalorder %v449, 0
  %vm472 = vcmp.ne.s32.totalorder %v456, 0
  %vm473 = vcmp.ne.s32.totalorder %v463, 0
  %vm474 = vcmp.ne.s32.totalorder %v470, 0
  %vm475 = vcmp.lt.s32.totalorder %v449, 0
  %vm476 = vcmp.lt.s32.totalorder %v456, 0
  %vm477 = vcmp.lt.s32.totalorder %v463, 0
  %vm478 = vcmp.lt.s32.totalorder %v470, 0
  %vm479 = vmand %vm475, %vm471
  %vm480 = vmand %vm476, %vm472
  %vm481 = vmand %vm477, %vm473
  %vm482 = vmand %vm478, %vm474
  %v483 = vadd.s32 %v449, 2
  %v484 = vadd.s32 %v456, 2
  %v485 = vadd.s32 %v463, 2
  %v486 = vadd.s32 %v470, 2
  %v487 = vsel %vm479, %v483, %v449
  %v488 = vsel %vm480, %v484, %v456
  %v489 = vsel %vm481, %v485, %v463
  %v490 = vsel %vm482, %v486, %v470
  %vm491 = vcmp.eq.s32.totalorder %v487, %v442
  %vm492 = vcmp.eq.s32.totalorder %v488, %v442
  %vm493 = vcmp.eq.s32.totalorder %v489, %v442
  %vm494 = vcmp.eq.s32.totalorder %v490, %v442
  %v495 = vsel %vm491, 1, 0
  %v496 = vsel %vm492, 1, 0
  %v497 = vsel %vm493, 1, 0
  %v498 = vsel %vm494, 1, 0
  %v499 = vcvt.s32.f32 %v495
  %v500 = vcvt.s32.f32 %v496
  %v501 = vcvt.s32.f32 %v497
  %v502 = vcvt.s32.f32 %v498
  %vm503 = vcmask 15360
  %v505 = vsel %vm503, %v499, 0
  %v508 = vsel %vm503, %v500, 0
  %v511 = vsel %vm503, %v501, 0
  %v514 = vsel %vm503, %v502, 0
  %vm516 = vcmask 1041408
  %v518 = vsel %vm516, %v433, 0
  %520 = vmatprep.subr.mxu0 0.0
  %521 = vmatpush1.msra.mxu0 0.0
  %522 = vmatprep.subr.mxu0 0.0
  %523 = vmatpush1.msra.mxu0 0.0
  %524 = vmatprep.subr.mxu0 0.0
  %525 = vmatpush1.msra.mxu0 0.0
  %526 = vmatprep.subr.mxu0 0.0
  %527 = vmatpush1.msra.mxu0 0.0
  %528 = vmatprep.subr.mxu0 0.0
  %529 = vmatpush1.msra.mxu0 0.0
  %530 = vmatprep.subr.mxu0 0.0
  %531 = vmatpush1.msra.mxu0 0.0
  %532 = vmatprep.subr.mxu0 0.0
  %533 = vmatpush1.msra.mxu0 0.0
  %534 = vmatprep.subr.mxu0 0.0
  %535 = vmatpush1.msra.mxu0 0.0
  %536 = vmatprep.subr.mxu0 0.0
  %537 = vmatpush1.msra.mxu0 0.0
  %538 = vmatprep.subr.mxu0 0.0
  %539 = vmatpush1.msra.mxu0 0.0
  %540 = vmatprep.subr.mxu0 0.0
  %541 = vmatpush1.msra.mxu0 0.0
  %542 = vmatprep.subr.mxu0 0.0
  %543 = vmatpush1.msra.mxu0 0.0
  %544 = vmatprep.subr.mxu0 0.0
  %545 = vmatpush1.msra.mxu0 0.0
  %546 = vmatprep.subr.mxu0 0.0
  %547 = vmatpush1.msra.mxu0 0.0
  %548 = vmatprep.subr.mxu0 0.0
  %549 = vmatpush1.msra.mxu0 0.0
  %550 = vmatprep.subr.mxu0 0.0
  %551 = vmatpush1.msra.mxu0 %v518
  %552 = vmatprep.subr.mxu0 0.0
  %553 = vmatpush2.msra.mxu0 0.0
  %554 = vmatprep.subr.mxu0 0.0
  %555 = vmatpush2.msra.mxu0 0.0
  %556 = vmatprep.subr.mxu0 0.0
  %557 = vmatpush2.msra.mxu0 0.0
  %558 = vmatprep.subr.mxu0 0.0
  %559 = vmatpush2.msra.mxu0 0.0
  %560 = vmatprep.subr.mxu0 0.0
  %561 = vmatpush2.msra.mxu0 0.0
  %562 = vmatprep.subr.mxu0 0.0
  %563 = vmatpush2.msra.mxu0 0.0
  %564 = vmatprep.subr.mxu0 0.0
  %565 = vmatpush2.msra.mxu0 0.0
  %566 = vmatprep.subr.mxu0 0.0
  %567 = vmatpush2.msra.mxu0 0.0
  %568 = vmatprep.subr.mxu0 0.0
  %569 = vmatpush2.msra.mxu0 0.0
  %570 = vmatprep.subr.mxu0 0.0
  %571 = vmatpush2.msra.mxu0 0.0
  %572 = vmatprep.subr.mxu0 0.0
  %573 = vmatpush2.msra.mxu0 0.0
  %574 = vmatprep.subr.mxu0 0.0
  %575 = vmatpush2.msra.mxu0 0.0
  %576 = vmatprep.subr.mxu0 0.0
  %577 = vmatpush2.msra.mxu0 0.0
  %578 = vmatprep.subr.mxu0 0.0
  %579 = vmatpush2.msra.mxu0 0.0
  %580 = vmatprep.subr.mxu0 0.0
  %581 = vmatpush2.msra.mxu0 0.0
  %582 = vmatprep.subr.mxu0 0.0
  %583 = vmatpush2.msra.mxu0 0.0
  %584 = vmatprep.mubr.f32.mxu0 0.0
  %585 = vmatmul.mubr.f32.gmra.mxu0 %v505
  %v586 = vpop.f32.mrf.mxu0
  %v587 = vadd.f32 0.0, %v586
  %v588 = vpop.f32.mrf.mxu0
  %589 = vmatprep.mubr.f32.mxu0 0.0
  %590 = vmatmul.mubr.f32.gmra.mxu0 %v508
  %v591 = vpop.f32.mrf.mxu0
  %v592 = vadd.f32 0.0, %v591
  %v593 = vpop.f32.mrf.mxu0
  %594 = vmatprep.mubr.f32.mxu0 0.0
  %595 = vmatmul.mubr.f32.gmra.mxu0 %v511
  %v596 = vpop.f32.mrf.mxu0
  %v597 = vadd.f32 0.0, %v596
  %v598 = vpop.f32.mrf.mxu0
  %599 = vmatprep.mubr.f32.mxu0 0.0
  %600 = vmatmul.mubr.f32.gmra.mxu0 %v514
  %v601 = vpop.f32.mrf.mxu0
  %v602 = vadd.f32 0.0, %v601
  %v603 = vpop.f32.mrf.mxu0
  %604 = vdwg.mxu0
  %v605 = vld [vmem:[%s7] sm:$0xff]
  %v606 = vld [vmem:[%s7 + $0x8] sm:$0xff]
  %v607 = vld [vmem:[%s7 + $0x10] sm:$0xff]
  %v608 = vld [vmem:[%s7 + $0x18] sm:$0xff]
  %v610 = vsel %vm59, %v341, 0
  %v613 = vsel %vm59, %v346, 0
  %v616 = vsel %vm59, %v351, 0
  %v619 = vsel %vm59, %v356, 0
  %621 = vmatprep.subr.mxu0 0.0
  %622 = vmatpush1.msra.mxu0 0.0
  %623 = vmatprep.subr.mxu0 0.0
  %624 = vmatpush1.msra.mxu0 0.0
  %625 = vmatprep.subr.mxu0 0.0
  %626 = vmatpush1.msra.mxu0 0.0
  %627 = vmatprep.subr.mxu0 0.0
  %628 = vmatpush1.msra.mxu0 0.0
  %629 = vmatprep.subr.mxu0 0.0
  %630 = vmatpush1.msra.mxu0 0.0
  %631 = vmatprep.subr.mxu0 0.0
  %632 = vmatpush1.msra.mxu0 0.0
  %633 = vmatprep.subr.mxu0 0.0
  %634 = vmatpush1.msra.mxu0 0.0
  %635 = vmatprep.subr.mxu0 0.0
  %636 = vmatpush1.msra.mxu0 0.0
  %637 = vmatprep.subr.mxu0 0.0
  %638 = vmatpush1.msra.mxu0 0.0
  %639 = vmatprep.subr.mxu0 0.0
  %640 = vmatpush1.msra.mxu0 0.0
  %641 = vmatprep.subr.mxu0 0.0
  %642 = vmatpush1.msra.mxu0 0.0
  %643 = vmatprep.subr.mxu0 0.0
  %644 = vmatpush1.msra.mxu0 0.0
  %645 = vmatprep.subr.mxu0 0.0
  %646 = vmatpush1.msra.mxu0 %v608
  %647 = vmatprep.subr.mxu0 0.0
  %648 = vmatpush1.msra.mxu0 %v607
  %649 = vmatprep.subr.mxu0 0.0
  %650 = vmatpush1.msra.mxu0 %v606
  %651 = vmatprep.subr.mxu0 0.0
  %652 = vmatpush1.msra.mxu0 %v605
  %653 = vmatprep.subr.mxu0 0.0
  %654 = vmatpush2.msra.mxu0 0.0
  %655 = vmatprep.subr.mxu0 0.0
  %656 = vmatpush2.msra.mxu0 0.0
  %657 = vmatprep.subr.mxu0 0.0
  %658 = vmatpush2.msra.mxu0 0.0
  %659 = vmatprep.subr.mxu0 0.0
  %660 = vmatpush2.msra.mxu0 0.0
  %661 = vmatprep.subr.mxu0 0.0
  %662 = vmatpush2.msra.mxu0 0.0
  %663 = vmatprep.subr.mxu0 0.0
  %664 = vmatpush2.msra.mxu0 0.0
  %665 = vmatprep.subr.mxu0 0.0
  %666 = vmatpush2.msra.mxu0 0.0
  %667 = vmatprep.subr.mxu0 0.0
  %668 = vmatpush2.msra.mxu0 0.0
  %669 = vmatprep.subr.mxu0 0.0
  %670 = vmatpush2.msra.mxu0 0.0
  %671 = vmatprep.subr.mxu0 0.0
  %672 = vmatpush2.msra.mxu0 0.0
  %673 = vmatprep.subr.mxu0 0.0
  %674 = vmatpush2.msra.mxu0 0.0
  %675 = vmatprep.subr.mxu0 0.0
  %676 = vmatpush2.msra.mxu0 0.0
  %677 = vmatprep.subr.mxu0 0.0
  %678 = vmatpush2.msra.mxu0 0.0
  %679 = vmatprep.subr.mxu0 0.0
  %680 = vmatpush2.msra.mxu0 0.0
  %681 = vmatprep.subr.mxu0 0.0
  %682 = vmatpush2.msra.mxu0 0.0
  %683 = vmatprep.subr.mxu0 0.0
  %684 = vmatpush2.msra.mxu0 0.0
  %685 = vmatprep.mubr.f32.mxu0 0.0
  %686 = vmatmul.mubr.f32.gmra.mxu0 %v610
  %v687 = vpop.f32.mrf.mxu0
  %v688 = vadd.f32 %v587, %v687
  %v689 = vpop.f32.mrf.mxu0
  %690 = vmatprep.mubr.f32.mxu0 0.0
  %691 = vmatmul.mubr.f32.gmra.mxu0 %v613
  %v692 = vpop.f32.mrf.mxu0
  %v693 = vadd.f32 %v592, %v692
  %v694 = vpop.f32.mrf.mxu0
  %695 = vmatprep.mubr.f32.mxu0 0.0
  %696 = vmatmul.mubr.f32.gmra.mxu0 %v616
  %v697 = vpop.f32.mrf.mxu0
  %v698 = vadd.f32 %v597, %v697
  %v699 = vpop.f32.mrf.mxu0
  %700 = vmatprep.mubr.f32.mxu0 0.0
  %701 = vmatmul.mubr.f32.gmra.mxu0 %v619
  %v702 = vpop.f32.mrf.mxu0
  %v703 = vadd.f32 %v602, %v702
  %v704 = vpop.f32.mrf.mxu0
  %705 = vdwg.mxu0
  %v706 = vld [vmem:[%s9] sm:$0x1]
  %v708 = vlaneseq
  %v709 = vshrl.u32 %v708, 7
  %v710 = vsub.s32 0, %v709
  %v711 = vrot.slane %v706, %v710
  %v713 = vadd.f32 %v688, %v711
  %v714 = vadd.f32 %v693, %v711
  %v715 = vadd.f32 %v698, %v711
  %v716 = vadd.f32 %v703, %v711
  %vm717 = vcmp.gt.f32.partialorder %v713, 0.0
  %vm718 = vcmp.gt.f32.partialorder %v714, 0.0
  %vm719 = vcmp.gt.f32.partialorder %v715, 0.0
  %vm720 = vcmp.gt.f32.partialorder %v716, 0.0
  %v721 = vmul.f32 %v713, 0.1
  %v722 = vmul.f32 %v714, 0.1
  %v723 = vmul.f32 %v715, 0.1
  %v724 = vmul.f32 %v716, 0.1
  %v725 = vsel %vm717, %v713, %v721
  %v726 = vsel %vm718, %v714, %v722
  %v727 = vsel %vm719, %v715, %v723
  %v728 = vsel %vm720, %v716, %v724
  %729 = vmatprep.subr.mxu0 0.0
  %730 = vmatpush1.msra.mxu0 0.0
  %731 = vmatprep.subr.mxu0 0.0
  %732 = vmatpush1.msra.mxu0 0.0
  %733 = vmatprep.subr.mxu0 0.0
  %734 = vmatpush1.msra.mxu0 0.0
  %735 = vmatprep.subr.mxu0 0.0
  %736 = vmatpush1.msra.mxu0 0.0
  %737 = vmatprep.subr.mxu0 0.0
  %738 = vmatpush1.msra.mxu0 0.0
  %739 = vmatprep.subr.mxu0 0.0
  %740 = vmatpush1.msra.mxu0 0.0
  %741 = vmatprep.subr.mxu0 0.0
  %742 = vmatpush1.msra.mxu0 0.0
  %743 = vmatprep.subr.mxu0 0.0
  %744 = vmatpush1.msra.mxu0 0.0
  %745 = vmatprep.subr.mxu0 0.0
  %746 = vmatpush1.msra.mxu0 0.0
  %747 = vmatprep.subr.mxu0 0.0
  %748 = vmatpush1.msra.mxu0 0.0
  %749 = vmatprep.subr.mxu0 0.0
  %750 = vmatpush1.msra.mxu0 0.0
  %751 = vmatprep.subr.mxu0 0.0
  %752 = vmatpush1.msra.mxu0 0.0
  %753 = vmatprep.subr.mxu0 0.0
  %754 = vmatpush1.msra.mxu0 %v728
  %755 = vmatprep.subr.mxu0 0.0
  %756 = vmatpush1.msra.mxu0 %v727
  %757 = vmatprep.subr.mxu0 0.0
  %758 = vmatpush1.msra.mxu0 %v726
  %759 = vmatprep.subr.mxu0 0.0
  %760 = vmatpush1.msra.mxu0 %v725
  %761 = vmatprep.subr.mxu0 0.0
  %762 = vmatpush2.msra.mxu0 0.0
  %763 = vmatprep.subr.mxu0 0.0
  %764 = vmatpush2.msra.mxu0 0.0
  %765 = vmatprep.subr.mxu0 0.0
  %766 = vmatpush2.msra.mxu0 0.0
  %767 = vmatprep.subr.mxu0 0.0
  %768 = vmatpush2.msra.mxu0 0.0
  %769 = vmatprep.subr.mxu0 0.0
  %770 = vmatpush2.msra.mxu0 0.0
  %771 = vmatprep.subr.mxu0 0.0
  %772 = vmatpush2.msra.mxu0 0.0
  %773 = vmatprep.subr.mxu0 0.0
  %774 = vmatpush2.msra.mxu0 0.0
  %775 = vmatprep.subr.mxu0 0.0
  %776 = vmatpush2.msra.mxu0 0.0
  %777 = vmatprep.subr.mxu0 0.0
  %778 = vmatpush2.msra.mxu0 0.0
  %779 = vmatprep.subr.mxu0 0.0
  %780 = vmatpush2.msra.mxu0 0.0
  %781 = vmatprep.subr.mxu0 0.0
  %782 = vmatpush2.msra.mxu0 0.0
  %783 = vmatprep.subr.mxu0 0.0
  %784 = vmatpush2.msra.mxu0 0.0
  %785 = vmatprep.subr.mxu0 0.0
  %786 = vmatpush2.msra.mxu0 0.0
  %787 = vmatprep.subr.mxu0 0.0
  %788 = vmatpush2.msra.mxu0 0.0
  %789 = vmatprep.subr.mxu0 0.0
  %790 = vmatpush2.msra.mxu0 0.0
  %791 = vmatprep.subr.mxu0 0.0
  %792 = vmatpush2.msra.mxu0 0.0
  %793 = vmatprep.mubr.f32.mxu0 0.0
  %794 = vmatmul.mubr.f32.gmra.mxu0 %v263
  %v795 = vpop.f32.mrf.mxu0
  %v796 = vadd.f32 %v725, %v795
  %v797 = vpop.f32.mrf.mxu0
  %798 = vmatprep.mubr.f32.mxu0 0.0
  %799 = vmatmul.mubr.f32.gmra.mxu0 %v266
  %v800 = vpop.f32.mrf.mxu0
  %v801 = vadd.f32 %v726, %v800
  %v802 = vpop.f32.mrf.mxu0
  %803 = vmatprep.mubr.f32.mxu0 0.0
  %804 = vmatmul.mubr.f32.gmra.mxu0 %v269
  %v805 = vpop.f32.mrf.mxu0
  %v806 = vadd.f32 %v727, %v805
  %v807 = vpop.f32.mrf.mxu0
  %808 = vmatprep.mubr.f32.mxu0 0.0
  %809 = vmatmul.mubr.f32.gmra.mxu0 %v272
  %v810 = vpop.f32.mrf.mxu0
  %v811 = vadd.f32 %v728, %v810
  %v812 = vpop.f32.mrf.mxu0
  %813 = vdwg.mxu0
  %v814 = vld [vmem:[%s10] sm:$0xff]
  %v815 = vld [vmem:[%s10 + $0x8] sm:$0xff]
  %v816 = vld [vmem:[%s10 + $0x10] sm:$0xff]
  %v817 = vld [vmem:[%s10 + $0x18] sm:$0xff]
  %v818 = vld [vmem:[%s11] sm:$0x1]
  %v820 = vlaneseq
  %v821 = vshrl.u32 %v820, 7
  %v822 = vsub.s32 0, %v821
  %v823 = vrot.slane %v818, %v822
  %v826 = vsel %vm59, %v796, 0
  %v829 = vsel %vm59, %v801, 0
  %v832 = vsel %vm59, %v806, 0
  %v835 = vsel %vm59, %v811, 0
  %837 = vmatprep.subr.mxu0 0.0
  %838 = vmatpush1.msra.mxu0 0.0
  %839 = vmatprep.subr.mxu0 0.0
  %840 = vmatpush1.msra.mxu0 0.0
  %841 = vmatprep.subr.mxu0 0.0
  %842 = vmatpush1.msra.mxu0 0.0
  %843 = vmatprep.subr.mxu0 0.0
  %844 = vmatpush1.msra.mxu0 0.0
  %845 = vmatprep.subr.mxu0 0.0
  %846 = vmatpush1.msra.mxu0 0.0
  %847 = vmatprep.subr.mxu0 0.0
  %848 = vmatpush1.msra.mxu0 0.0
  %849 = vmatprep.subr.mxu0 0.0
  %850 = vmatpush1.msra.mxu0 0.0
  %851 = vmatprep.subr.mxu0 0.0
  %852 = vmatpush1.msra.mxu0 0.0
  %853 = vmatprep.subr.mxu0 0.0
  %854 = vmatpush1.msra.mxu0 0.0
  %855 = vmatprep.subr.mxu0 0.0
  %856 = vmatpush1.msra.mxu0 0.0
  %857 = vmatprep.subr.mxu0 0.0
  %858 = vmatpush1.msra.mxu0 0.0
  %859 = vmatprep.subr.mxu0 0.0
  %860 = vmatpush1.msra.mxu0 0.0
  %861 = vmatprep.subr.mxu0 0.0
  %862 = vmatpush1.msra.mxu0 %v817
  %863 = vmatprep.subr.mxu0 0.0
  %864 = vmatpush1.msra.mxu0 %v816
  %865 = vmatprep.subr.mxu0 0.0
  %866 = vmatpush1.msra.mxu0 %v815
  %867 = vmatprep.subr.mxu0 0.0
  %868 = vmatpush1.msra.mxu0 %v814
  %869 = vmatprep.subr.mxu0 0.0
  %870 = vmatpush2.msra.mxu0 0.0
  %871 = vmatprep.subr.mxu0 0.0
  %872 = vmatpush2.msra.mxu0 0.0
  %873 = vmatprep.subr.mxu0 0.0
  %874 = vmatpush2.msra.mxu0 0.0
  %875 = vmatprep.subr.mxu0 0.0
  %876 = vmatpush2.msra.mxu0 0.0
  %877 = vmatprep.subr.mxu0 0.0
  %878 = vmatpush2.msra.mxu0 0.0
  %879 = vmatprep.subr.mxu0 0.0
  %880 = vmatpush2.msra.mxu0 0.0
  %881 = vmatprep.subr.mxu0 0.0
  %882 = vmatpush2.msra.mxu0 0.0
  %883 = vmatprep.subr.mxu0 0.0
  %884 = vmatpush2.msra.mxu0 0.0
  %885 = vmatprep.subr.mxu0 0.0
  %886 = vmatpush2.msra.mxu0 0.0
  %887 = vmatprep.subr.mxu0 0.0
  %888 = vmatpush2.msra.mxu0 0.0
  %889 = vmatprep.subr.mxu0 0.0
  %890 = vmatpush2.msra.mxu0 0.0
  %891 = vmatprep.subr.mxu0 0.0
  %892 = vmatpush2.msra.mxu0 0.0
  %893 = vmatprep.subr.mxu0 0.0
  %894 = vmatpush2.msra.mxu0 0.0
  %895 = vmatprep.subr.mxu0 0.0
  %896 = vmatpush2.msra.mxu0 0.0
  %897 = vmatprep.subr.mxu0 0.0
  %898 = vmatpush2.msra.mxu0 0.0
  %899 = vmatprep.subr.mxu0 0.0
  %900 = vmatpush2.msra.mxu0 0.0
  %901 = vmatprep.mubr.f32.mxu0 0.0
  %902 = vmatmul.mubr.f32.gmra.mxu0 %v826
  %v903 = vpop.f32.mrf.mxu0
  %v904 = vadd.f32 %v823, %v903
  %v905 = vpop.f32.mrf.mxu0
  %906 = vmatprep.mubr.f32.mxu0 0.0
  %907 = vmatmul.mubr.f32.gmra.mxu0 %v829
  %v908 = vpop.f32.mrf.mxu0
  %v909 = vadd.f32 %v823, %v908
  %v910 = vpop.f32.mrf.mxu0
  %911 = vmatprep.mubr.f32.mxu0 0.0
  %912 = vmatmul.mubr.f32.gmra.mxu0 %v832
  %v913 = vpop.f32.mrf.mxu0
  %v914 = vadd.f32 %v823, %v913
  %v915 = vpop.f32.mrf.mxu0
  %916 = vmatprep.mubr.f32.mxu0 0.0
  %917 = vmatmul.mubr.f32.gmra.mxu0 %v835
  %v918 = vpop.f32.mrf.mxu0
  %v919 = vadd.f32 %v823, %v918
  %v920 = vpop.f32.mrf.mxu0
  %921 = vdwg.mxu0
  %v922 = vld [vmem:[%s12] sm:$0xff]
  %v923 = vld [vmem:[%s12 + $0x8] sm:$0xff]
  %v924 = vld [vmem:[%s13] sm:$0x1]
  %v926 = vlaneseq
  %v927 = vshrl.u32 %v926, 7
  %v928 = vsub.s32 0, %v927
  %v929 = vrot.slane %v924, %v928
  %930 = vrot.lane.b32.xlu0 %v929, 104
  %v931 = vpop.permute.xlu0 %930
  %v933 = vadd.f32 %v904, %v931
  %v934 = vxor.u32 %v933, 2147483648
  %v935 = vmul.f32 %v934, 1.442695
  %v936 = vpow.pop %v935
  %v937 = vadd.f32 %v936, 1.0
  %v938 = vrcp.pop %v937
  %v939 = vmul.f32 1.0, %v938
  %940 = vrot.lane.b32.xlu0 %v929, 88
  %v941 = vpop.permute.xlu0 %940
  %v943 = vmul.f32 %v939, %v941
  %945 = vrot.lane.b32.xlu0 %v943, 16
  %v946 = vpop.permute.xlu0 %945
  %v948 = vadd.f32 %v904, %v946
  %v949 = vtanh.pop %v948
  %v950 = vsub.f32 1.0, %v939
  %952 = vrot.lane.b32.xlu0 %v949, 120
  %v953 = vpop.permute.xlu0 %952
  %v955 = vmul.f32 %v950, %v953
  %v956 = vmul.f32 %v939, 0.0
  %v957 = vadd.f32 %v955, %v956
  %959 = vrot.lane.b32.xlu0 %v957, 120
  %v960 = vpop.permute.xlu0 %959
  %v962 = vsel %vm152, %v960, 0.0
  %vm964 = vcmask 130048
  %v966 = vsel %vm964, %v962, 0
  %968 = vmatprep.subr.mxu0 0.0
  %969 = vmatpush1.msra.mxu0 0.0
  %970 = vmatprep.subr.mxu0 0.0
  %971 = vmatpush1.msra.mxu0 0.0
  %972 = vmatprep.subr.mxu0 0.0
  %973 = vmatpush1.msra.mxu0 0.0
  %974 = vmatprep.subr.mxu0 0.0
  %975 = vmatpush1.msra.mxu0 0.0
  %976 = vmatprep.subr.mxu0 0.0
  %977 = vmatpush1.msra.mxu0 0.0
  %978 = vmatprep.subr.mxu0 0.0
  %979 = vmatpush1.msra.mxu0 0.0
  %980 = vmatprep.subr.mxu0 0.0
  %981 = vmatpush1.msra.mxu0 0.0
  %982 = vmatprep.subr.mxu0 0.0
  %983 = vmatpush1.msra.mxu0 0.0
  %984 = vmatprep.subr.mxu0 0.0
  %985 = vmatpush1.msra.mxu0 0.0
  %986 = vmatprep.subr.mxu0 0.0
  %987 = vmatpush1.msra.mxu0 0.0
  %988 = vmatprep.subr.mxu0 0.0
  %989 = vmatpush1.msra.mxu0 0.0
  %990 = vmatprep.subr.mxu0 0.0
  %991 = vmatpush1.msra.mxu0 0.0
  %992 = vmatprep.subr.mxu0 0.0
  %993 = vmatpush1.msra.mxu0 0.0
  %994 = vmatprep.subr.mxu0 0.0
  %995 = vmatpush1.msra.mxu0 0.0
  %996 = vmatprep.subr.mxu0 0.0
  %997 = vmatpush1.msra.mxu0 %v923
  %998 = vmatprep.subr.mxu0 0.0
  %999 = vmatpush1.msra.mxu0 %v922
  %1000 = vmatprep.subr.mxu0 0.0
  %1001 = vmatpush2.msra.mxu0 0.0
  %1002 = vmatprep.subr.mxu0 0.0
  %1003 = vmatpush2.msra.mxu0 0.0
  %1004 = vmatprep.subr.mxu0 0.0
  %1005 = vmatpush2.msra.mxu0 0.0
  %1006 = vmatprep.subr.mxu0 0.0
  %1007 = vmatpush2.msra.mxu0 0.0
  %1008 = vmatprep.subr.mxu0 0.0
  %1009 = vmatpush2.msra.mxu0 0.0
  %1010 = vmatprep.subr.mxu0 0.0
  %1011 = vmatpush2.msra.mxu0 0.0
  %1012 = vmatprep.subr.mxu0 0.0
  %1013 = vmatpush2.msra.mxu0 0.0
  %1014 = vmatprep.subr.mxu0 0.0
  %1015 = vmatpush2.msra.mxu0 0.0
  %1016 = vmatprep.subr.mxu0 0.0
  %1017 = vmatpush2.msra.mxu0 0.0
  %1018 = vmatprep.subr.mxu0 0.0
  %1019 = vmatpush2.msra.mxu0 0.0
  %1020 = vmatprep.subr.mxu0 0.0
  %1021 = vmatpush2.msra.mxu0 0.0
  %1022 = vmatprep.subr.mxu0 0.0
  %1023 = vmatpush2.msra.mxu0 0.0
  %1024 = vmatprep.subr.mxu0 0.0
  %1025 = vmatpush2.msra.mxu0 0.0
  %1026 = vmatprep.subr.mxu0 0.0
  %1027 = vmatpush2.msra.mxu0 0.0
  %1028 = vmatprep.subr.mxu0 0.0
  %1029 = vmatpush2.msra.mxu0 0.0
  %1030 = vmatprep.subr.mxu0 0.0
  %1031 = vmatpush2.msra.mxu0 0.0
  %1032 = vmatprep.mubr.f32.mxu0 0.0
  %1033 = vmatmul.mubr.f32.gmra.mxu0 %v966
  %v1034 = vpop.f32.mrf.mxu0
  %v1035 = vadd.f32 %v929, %v1034
  %v1036 = vpop.f32.mrf.mxu0
  %1037 = vdwg.mxu0
  %1039 = vrot.lane.b32.xlu0 %v1035, 80
  %v1040 = vpop.permute.xlu0 %1039
  %v1042 = vadd.f32 %v1035, %v1040
  %v1043 = vxor.u32 %v1042, 2147483648
  %v1044 = vmul.f32 %v1043, 1.442695
  %v1045 = vpow.pop %v1044
  %v1046 = vadd.f32 %v1045, 1.0
  %v1047 = vrcp.pop %v1046
  %v1048 = vmul.f32 1.0, %v1047
  %1049 = vrot.lane.b32.xlu0 %v1035, 64
  %v1050 = vpop.permute.xlu0 %1049
  %v1052 = vmul.f32 %v1048, %v1050
  %1054 = vrot.lane.b32.xlu0 %v1052, 16
  %v1055 = vpop.permute.xlu0 %1054
  %v1057 = vadd.f32 %v1035, %v1055
  %v1058 = vtanh.pop %v1057
  %v1059 = vsub.f32 1.0, %v1048
  %1061 = vrot.lane.b32.xlu0 %v1058, 120
  %v1062 = vpop.permute.xlu0 %1061
  %v1064 = vmul.f32 %v1059, %v1062
  %v1065 = vmul.f32 %v1048, 0.0
  %v1066 = vadd.f32 %v1064, %v1065
  %1068 = vrot.lane.b32.xlu0 %v1066, 120
  %v1069 = vpop.permute.xlu0 %1068
  %vm1071 = vcmask 58368
  %1072 = vst.msk [vmem:[%s14] sm:$0x3] %vm1071, %v1069
  %v1073 = vrot.slane %v1035, 6
  %1074 = vrot.lane.b32.xlu0 %v1073, 104
  %v1075 = vpop.permute.xlu0 %1074
  %v1077 = vadd.f32 %v904, %v1075
  %v1078 = vxor.u32 %v1077, 2147483648
  %v1079 = vmul.f32 %v1078, 1.442695
  %v1080 = vpow.pop %v1079
  %v1081 = vadd.f32 %v1080, 1.0
  %v1082 = vrcp.pop %v1081
  %v1083 = vmul.f32 1.0, %v1082
  %1084 = vrot.lane.b32.xlu0 %v1073, 88
  %v1085 = vpop.permute.xlu0 %1084
  %v1087 = vmul.f32 %v1083, %v1085
  %1089 = vrot.lane.b32.xlu0 %v1087, 16
  %v1090 = vpop.permute.xlu0 %1089
  %v1092 = vadd.f32 %v904, %v1090
  %v1093 = vtanh.pop %v1092
  %v1094 = vsub.f32 1.0, %v1083
  %1096 = vrot.lane.b32.xlu0 %v1093, 120
  %v1097 = vpop.permute.xlu0 %1096
  %v1099 = vmul.f32 %v1094, %v1097
  %v1100 = vrot.slane %v957, 6
  %v1102 = vmul.f32 %v1083, %v1100
  %v1103 = vadd.f32 %v1099, %v1102
  %1105 = vrot.lane.b32.xlu0 %v1103, 120
  %v1106 = vpop.permute.xlu0 %1105
  %v1108 = vrot.slane %v1066, 6
  %v1110 = vsel %vm152, %v1106, %v1108
  %v1112 = vrot.slane %v1110, 2
  %v1113 = vsel %vm964, %v1112, 0
  %1115 = vmatprep.subr.mxu0 0.0
  %1116 = vmatpush1.msra.mxu0 0.0
  %1117 = vmatprep.subr.mxu0 0.0
  %1118 = vmatpush1.msra.mxu0 0.0
  %1119 = vmatprep.subr.mxu0 0.0
  %1120 = vmatpush1.msra.mxu0 0.0
  %1121 = vmatprep.subr.mxu0 0.0
  %1122 = vmatpush1.msra.mxu0 0.0
  %1123 = vmatprep.subr.mxu0 0.0
  %1124 = vmatpush1.msra.mxu0 0.0
  %1125 = vmatprep.subr.mxu0 0.0
  %1126 = vmatpush1.msra.mxu0 0.0
  %1127 = vmatprep.subr.mxu0 0.0
  %1128 = vmatpush1.msra.mxu0 0.0
  %1129 = vmatprep.subr.mxu0 0.0
  %1130 = vmatpush1.msra.mxu0 0.0
  %1131 = vmatprep.subr.mxu0 0.0
  %1132 = vmatpush1.msra.mxu0 0.0
  %1133 = vmatprep.subr.mxu0 0.0
  %1134 = vmatpush1.msra.mxu0 0.0
  %1135 = vmatprep.subr.mxu0 0.0
  %1136 = vmatpush1.msra.mxu0 0.0
  %1137 = vmatprep.subr.mxu0 0.0
  %1138 = vmatpush1.msra.mxu0 0.0
  %1139 = vmatprep.subr.mxu0 0.0
  %1140 = vmatpush1.msra.mxu0 0.0
  %1141 = vmatprep.subr.mxu0 0.0
  %1142 = vmatpush1.msra.mxu0 0.0
  %1143 = vmatprep.subr.mxu0 0.0
  %1144 = vmatpush1.msra.mxu0 %v923
  %1145 = vmatprep.subr.mxu0 0.0
  %1146 = vmatpush1.msra.mxu0 %v922
  %1147 = vmatprep.subr.mxu0 0.0
  %1148 = vmatpush2.msra.mxu0 0.0
  %1149 = vmatprep.subr.mxu0 0.0
  %1150 = vmatpush2.msra.mxu0 0.0
  %1151 = vmatprep.subr.mxu0 0.0
  %1152 = vmatpush2.msra.mxu0 0.0
  %1153 = vmatprep.subr.mxu0 0.0
  %1154 = vmatpush2.msra.mxu0 0.0
  %1155 = vmatprep.subr.mxu0 0.0
  %1156 = vmatpush2.msra.mxu0 0.0
  %1157 = vmatprep.subr.mxu0 0.0
  %1158 = vmatpush2.msra.mxu0 0.0
  %1159 = vmatprep.subr.mxu0 0.0
  %1160 = vmatpush2.msra.mxu0 0.0
  %1161 = vmatprep.subr.mxu0 0.0
  %1162 = vmatpush2.msra.mxu0 0.0
  %1163 = vmatprep.subr.mxu0 0.0
  %1164 = vmatpush2.msra.mxu0 0.0
  %1165 = vmatprep.subr.mxu0 0.0
  %1166 = vmatpush2.msra.mxu0 0.0
  %1167 = vmatprep.subr.mxu0 0.0
  %1168 = vmatpush2.msra.mxu0 0.0
  %1169 = vmatprep.subr.mxu0 0.0
  %1170 = vmatpush2.msra.mxu0 0.0
  %1171 = vmatprep.subr.mxu0 0.0
  %1172 = vmatpush2.msra.mxu0 0.0
  %1173 = vmatprep.subr.mxu0 0.0
  %1174 = vmatpush2.msra.mxu0 0.0
  %1175 = vmatprep.subr.mxu0 0.0
  %1176 = vmatpush2.msra.mxu0 0.0
  %1177 = vmatprep.subr.mxu0 0.0
  %1178 = vmatpush2.msra.mxu0 0.0
  %1179 = vmatprep.mubr.f32.mxu0 0.0
  %1180 = vmatmul.mubr.f32.gmra.mxu0 %v1113
  %v1181 = vpop.f32.mrf.mxu0
  %v1182 = vadd.f32 %v929, %v1181
  %v1183 = vpop.f32.mrf.mxu0
  %1184 = vdwg.mxu0
  %1186 = vrot.lane.b32.xlu0 %v1182, 80
  %v1187 = vpop.permute.xlu0 %1186
  %v1189 = vadd.f32 %v1182, %v1187
  %v1190 = vxor.u32 %v1189, 2147483648
  %v1191 = vmul.f32 %v1190, 1.442695
  %v1192 = vpow.pop %v1191
  %v1193 = vadd.f32 %v1192, 1.0
  %v1194 = vrcp.pop %v1193
  %v1195 = vmul.f32 1.0, %v1194
  %1196 = vrot.lane.b32.xlu0 %v1182, 64
  %v1197 = vpop.permute.xlu0 %1196
  %v1199 = vmul.f32 %v1195, %v1197
  %1201 = vrot.lane.b32.xlu0 %v1199, 16
  %v1202 = vpop.permute.xlu0 %1201
  %v1204 = vadd.f32 %v1182, %v1202
  %v1205 = vtanh.pop %v1204
  %v1206 = vsub.f32 1.0, %v1195
  %1208 = vrot.lane.b32.xlu0 %v1205, 120
  %v1209 = vpop.permute.xlu0 %1208
  %v1211 = vmul.f32 %v1206, %v1209
  %v1212 = vmul.f32 %v1195, %v1066
  %v1213 = vadd.f32 %v1211, %v1212
  %vm1214 = vcmask 123968
  %1215 = vst.msk [vmem:[%s14] sm:$0x3] %vm1214, %v1213
  %v1216 = vrot.slane %v1182, 4
  %1217 = vrot.lane.b32.xlu0 %v1216, 104
  %v1218 = vpop.permute.xlu0 %1217
  %v1220 = vadd.f32 %v904, %v1218
  %v1221 = vxor.u32 %v1220, 2147483648
  %v1222 = vmul.f32 %v1221, 1.442695
  %v1223 = vpow.pop %v1222
  %v1224 = vadd.f32 %v1223, 1.0
  %v1225 = vrcp.pop %v1224
  %v1226 = vmul.f32 1.0, %v1225
  %1227 = vrot.lane.b32.xlu0 %v1216, 88
  %v1228 = vpop.permute.xlu0 %1227
  %v1230 = vmul.f32 %v1226, %v1228
  %1232 = vrot.lane.b32.xlu0 %v1230, 16
  %v1233 = vpop.permute.xlu0 %1232
  %v1235 = vadd.f32 %v904, %v1233
  %v1236 = vtanh.pop %v1235
  %v1237 = vsub.f32 1.0, %v1226
  %1239 = vrot.lane.b32.xlu0 %v1236, 120
  %v1240 = vpop.permute.xlu0 %1239
  %v1242 = vmul.f32 %v1237, %v1240
  %v1243 = vrot.slane %v1103, 6
  %v1245 = vmul.f32 %v1226, %v1243
  %v1246 = vadd.f32 %v1242, %v1245
  %1248 = vrot.lane.b32.xlu0 %v1246, 120
  %v1249 = vpop.permute.xlu0 %1248
  %v1252 = vrot.slane %v1213, 4
  %v1254 = vsel %vm152, %v1249, %v1252
  %v1256 = vrot.slane %v1254, 4
  %v1257 = vsel %vm964, %v1256, 0
  %1259 = vmatprep.subr.mxu0 0.0
  %1260 = vmatpush1.msra.mxu0 0.0
  %1261 = vmatprep.subr.mxu0 0.0
  %1262 = vmatpush1.msra.mxu0 0.0
  %1263 = vmatprep.subr.mxu0 0.0
  %1264 = vmatpush1.msra.mxu0 0.0
  %1265 = vmatprep.subr.mxu0 0.0
  %1266 = vmatpush1.msra.mxu0 0.0
  %1267 = vmatprep.subr.mxu0 0.0
  %1268 = vmatpush1.msra.mxu0 0.0
  %1269 = vmatprep.subr.mxu0 0.0
  %1270 = vmatpush1.msra.mxu0 0.0
  %1271 = vmatprep.subr.mxu0 0.0
  %1272 = vmatpush1.msra.mxu0 0.0
  %1273 = vmatprep.subr.mxu0 0.0
  %1274 = vmatpush1.msra.mxu0 0.0
  %1275 = vmatprep.subr.mxu0 0.0
  %1276 = vmatpush1.msra.mxu0 0.0
  %1277 = vmatprep.subr.mxu0 0.0
  %1278 = vmatpush1.msra.mxu0 0.0
  %1279 = vmatprep.subr.mxu0 0.0
  %1280 = vmatpush1.msra.mxu0 0.0
  %1281 = vmatprep.subr.mxu0 0.0
  %1282 = vmatpush1.msra.mxu0 0.0
  %1283 = vmatprep.subr.mxu0 0.0
  %1284 = vmatpush1.msra.mxu0 0.0
  %1285 = vmatprep.subr.mxu0 0.0
  %1286 = vmatpush1.msra.mxu0 0.0
  %1287 = vmatprep.subr.mxu0 0.0
  %1288 = vmatpush1.msra.mxu0 %v923
  %1289 = vmatprep.subr.mxu0 0.0
  %1290 = vmatpush1.msra.mxu0 %v922
  %1291 = vmatprep.subr.mxu0 0.0
  %1292 = vmatpush2.msra.mxu0 0.0
  %1293 = vmatprep.subr.mxu0 0.0
  %1294 = vmatpush2.msra.mxu0 0.0
  %1295 = vmatprep.subr.mxu0 0.0
  %1296 = vmatpush2.msra.mxu0 0.0
  %1297 = vmatprep.subr.mxu0 0.0
  %1298 = vmatpush2.msra.mxu0 0.0
  %1299 = vmatprep.subr.mxu0 0.0
  %1300 = vmatpush2.msra.mxu0 0.0
  %1301 = vmatprep.subr.mxu0 0.0
  %1302 = vmatpush2.msra.mxu0 0.0
  %1303 = vmatprep.subr.mxu0 0.0
  %1304 = vmatpush2.msra.mxu0 0.0
  %1305 = vmatprep.subr.mxu0 0.0
  %1306 = vmatpush2.msra.mxu0 0.0
  %1307 = vmatprep.subr.mxu0 0.0
  %1308 = vmatpush2.msra.mxu0 0.0
  %1309 = vmatprep.subr.mxu0 0.0
  %1310 = vmatpush2.msra.mxu0 0.0
  %1311 = vmatprep.subr.mxu0 0.0
  %1312 = vmatpush2.msra.mxu0 0.0
  %1313 = vmatprep.subr.mxu0 0.0
  %1314 = vmatpush2.msra.mxu0 0.0
  %1315 = vmatprep.subr.mxu0 0.0
  %1316 = vmatpush2.msra.mxu0 0.0
  %1317 = vmatprep.subr.mxu0 0.0
  %1318 = vmatpush2.msra.mxu0 0.0
  %1319 = vmatprep.subr.mxu0 0.0
  %1320 = vmatpush2.msra.mxu0 0.0
  %1321 = vmatprep.subr.mxu0 0.0
  %1322 = vmatpush2.msra.mxu0 0.0
  %1323 = vmatprep.mubr.f32.mxu0 0.0
  %1324 = vmatmul.mubr.f32.gmra.mxu0 %v1257
  %v1325 = vpop.f32.mrf.mxu0
  %v1326 = vadd.f32 %v929, %v1325
  %v1327 = vpop.f32.mrf.mxu0
  %1328 = vdwg.mxu0
  %1330 = vrot.lane.b32.xlu0 %v1326, 80
  %v1331 = vpop.permute.xlu0 %1330
  %v1333 = vadd.f32 %v1326, %v1331
  %v1334 = vxor.u32 %v1333, 2147483648
  %v1335 = vmul.f32 %v1334, 1.442695
  %v1336 = vpow.pop %v1335
  %v1337 = vadd.f32 %v1336, 1.0
  %v1338 = vrcp.pop %v1337
  %v1339 = vmul.f32 1.0, %v1338
  %1340 = vrot.lane.b32.xlu0 %v1326, 64
  %v1341 = vpop.permute.xlu0 %1340
  %v1343 = vmul.f32 %v1339, %v1341
  %1345 = vrot.lane.b32.xlu0 %v1343, 16
  %v1346 = vpop.permute.xlu0 %1345
  %v1348 = vadd.f32 %v1326, %v1346
  %v1349 = vtanh.pop %v1348
  %v1350 = vsub.f32 1.0, %v1339
  %1352 = vrot.lane.b32.xlu0 %v1349, 120
  %v1353 = vpop.permute.xlu0 %1352
  %v1355 = vmul.f32 %v1350, %v1353
  %v1356 = vmul.f32 %v1339, %v1213
  %v1357 = vadd.f32 %v1355, %v1356
  %1359 = vrot.lane.b32.xlu0 %v1357, 8
  %v1360 = vpop.permute.xlu0 %1359
  %vm1362 = vcmask 189568
  %1363 = vst.msk [vmem:[%s14] sm:$0x3] %vm1362, %v1360
  %v1364 = vrot.slane %v1326, 2
  %1365 = vrot.lane.b32.xlu0 %v1364, 104
  %v1366 = vpop.permute.xlu0 %1365
  %v1368 = vadd.f32 %v904, %v1366
  %v1369 = vxor.u32 %v1368, 2147483648
  %v1370 = vmul.f32 %v1369, 1.442695
  %v1371 = vpow.pop %v1370
  %v1372 = vadd.f32 %v1371, 1.0
  %v1373 = vrcp.pop %v1372
  %v1374 = vmul.f32 1.0, %v1373
  %1375 = vrot.lane.b32.xlu0 %v1364, 88
  %v1376 = vpop.permute.xlu0 %1375
  %v1378 = vmul.f32 %v1374, %v1376
  %1380 = vrot.lane.b32.xlu0 %v1378, 16
  %v1381 = vpop.permute.xlu0 %1380
  %v1383 = vadd.f32 %v904, %v1381
  %v1384 = vtanh.pop %v1383
  %v1385 = vsub.f32 1.0, %v1374
  %1387 = vrot.lane.b32.xlu0 %v1384, 120
  %v1388 = vpop.permute.xlu0 %1387
  %v1390 = vmul.f32 %v1385, %v1388
  %v1391 = vrot.slane %v1246, 6
  %v1393 = vmul.f32 %v1374, %v1391
  %v1394 = vadd.f32 %v1390, %v1393
  %1396 = vrot.lane.b32.xlu0 %v1394, 120
  %v1397 = vpop.permute.xlu0 %1396
  %v1399 = vrot.slane %v1357, 2
  %v1401 = vsel %vm152, %v1397, %v1399
  %v1403 = vrot.slane %v1401, 6
  %v1404 = vsel %vm964, %v1403, 0
  %1406 = vmatprep.subr.mxu0 0.0
  %1407 = vmatpush1.msra.mxu0 0.0
  %1408 = vmatprep.subr.mxu0 0.0
  %1409 = vmatpush1.msra.mxu0 0.0
  %1410 = vmatprep.subr.mxu0 0.0
  %1411 = vmatpush1.msra.mxu0 0.0
  %1412 = vmatprep.subr.mxu0 0.0
  %1413 = vmatpush1.msra.mxu0 0.0
  %1414 = vmatprep.subr.mxu0 0.0
  %1415 = vmatpush1.msra.mxu0 0.0
  %1416 = vmatprep.subr.mxu0 0.0
  %1417 = vmatpush1.msra.mxu0 0.0
  %1418 = vmatprep.subr.mxu0 0.0
  %1419 = vmatpush1.msra.mxu0 0.0
  %1420 = vmatprep.subr.mxu0 0.0
  %1421 = vmatpush1.msra.mxu0 0.0
  %1422 = vmatprep.subr.mxu0 0.0
  %1423 = vmatpush1.msra.mxu0 0.0
  %1424 = vmatprep.subr.mxu0 0.0
  %1425 = vmatpush1.msra.mxu0 0.0
  %1426 = vmatprep.subr.mxu0 0.0
  %1427 = vmatpush1.msra.mxu0 0.0
  %1428 = vmatprep.subr.mxu0 0.0
  %1429 = vmatpush1.msra.mxu0 0.0
  %1430 = vmatprep.subr.mxu0 0.0
  %1431 = vmatpush1.msra.mxu0 0.0
  %1432 = vmatprep.subr.mxu0 0.0
  %1433 = vmatpush1.msra.mxu0 0.0
  %1434 = vmatprep.subr.mxu0 0.0
  %1435 = vmatpush1.msra.mxu0 %v923
  %1436 = vmatprep.subr.mxu0 0.0
  %1437 = vmatpush1.msra.mxu0 %v922
  %1438 = vmatprep.subr.mxu0 0.0
  %1439 = vmatpush2.msra.mxu0 0.0
  %1440 = vmatprep.subr.mxu0 0.0
  %1441 = vmatpush2.msra.mxu0 0.0
  %1442 = vmatprep.subr.mxu0 0.0
  %1443 = vmatpush2.msra.mxu0 0.0
  %1444 = vmatprep.subr.mxu0 0.0
  %1445 = vmatpush2.msra.mxu0 0.0
  %1446 = vmatprep.subr.mxu0 0.0
  %1447 = vmatpush2.msra.mxu0 0.0
  %1448 = vmatprep.subr.mxu0 0.0
  %1449 = vmatpush2.msra.mxu0 0.0
  %1450 = vmatprep.subr.mxu0 0.0
  %1451 = vmatpush2.msra.mxu0 0.0
  %1452 = vmatprep.subr.mxu0 0.0
  %1453 = vmatpush2.msra.mxu0 0.0
  %1454 = vmatprep.subr.mxu0 0.0
  %1455 = vmatpush2.msra.mxu0 0.0
  %1456 = vmatprep.subr.mxu0 0.0
  %1457 = vmatpush2.msra.mxu0 0.0
  %1458 = vmatprep.subr.mxu0 0.0
  %1459 = vmatpush2.msra.mxu0 0.0
  %1460 = vmatprep.subr.mxu0 0.0
  %1461 = vmatpush2.msra.mxu0 0.0
  %1462 = vmatprep.subr.mxu0 0.0
  %1463 = vmatpush2.msra.mxu0 0.0
  %1464 = vmatprep.subr.mxu0 0.0
  %1465 = vmatpush2.msra.mxu0 0.0
  %1466 = vmatprep.subr.mxu0 0.0
  %1467 = vmatpush2.msra.mxu0 0.0
  %1468 = vmatprep.subr.mxu0 0.0
  %1469 = vmatpush2.msra.mxu0 0.0
  %1470 = vmatprep.mubr.f32.mxu0 0.0
  %1471 = vmatmul.mubr.f32.gmra.mxu0 %v1404
  %v1472 = vpop.f32.mrf.mxu0
  %v1473 = vadd.f32 %v929, %v1472
  %v1474 = vpop.f32.mrf.mxu0
  %1475 = vdwg.mxu0
  %1477 = vrot.lane.b32.xlu0 %v1473, 80
  %v1478 = vpop.permute.xlu0 %1477
  %v1480 = vadd.f32 %v1473, %v1478
  %v1481 = vxor.u32 %v1480, 2147483648
  %v1482 = vmul.f32 %v1481, 1.442695
  %v1483 = vpow.pop %v1482
  %v1484 = vadd.f32 %v1483, 1.0
  %v1485 = vrcp.pop %v1484
  %v1486 = vmul.f32 1.0, %v1485
  %1487 = vrot.lane.b32.xlu0 %v1473, 64
  %v1488 = vpop.permute.xlu0 %1487
  %v1490 = vmul.f32 %v1486, %v1488
  %1492 = vrot.lane.b32.xlu0 %v1490, 16
  %v1493 = vpop.permute.xlu0 %1492
  %v1495 = vadd.f32 %v1473, %v1493
  %v1496 = vtanh.pop %v1495
  %v1497 = vsub.f32 1.0, %v1486
  %1499 = vrot.lane.b32.xlu0 %v1496, 120
  %v1500 = vpop.permute.xlu0 %1499
  %v1502 = vmul.f32 %v1497, %v1500
  %v1503 = vmul.f32 %v1486, %v1357
  %v1504 = vadd.f32 %v1502, %v1503
  %1506 = vrot.lane.b32.xlu0 %v1504, 16
  %v1507 = vpop.permute.xlu0 %1506
  %vm1509 = vcmask 255168
  %1510 = vst.msk [vmem:[%s14] sm:$0x3] %vm1509, %v1507
  %1511 = vrot.lane.b32.xlu0 %v1473, 104
  %v1512 = vpop.permute.xlu0 %1511
  %v1514 = vadd.f32 %v909, %v1512
  %v1515 = vxor.u32 %v1514, 2147483648
  %v1516 = vmul.f32 %v1515, 1.442695
  %v1517 = vpow.pop %v1516
  %v1518 = vadd.f32 %v1517, 1.0
  %v1519 = vrcp.pop %v1518
  %v1520 = vmul.f32 1.0, %v1519
  %1521 = vrot.lane.b32.xlu0 %v1473, 88
  %v1522 = vpop.permute.xlu0 %1521
  %v1524 = vmul.f32 %v1520, %v1522
  %1526 = vrot.lane.b32.xlu0 %v1524, 16
  %v1527 = vpop.permute.xlu0 %1526
  %v1529 = vadd.f32 %v909, %v1527
  %v1530 = vtanh.pop %v1529
  %v1531 = vsub.f32 1.0, %v1520
  %1533 = vrot.lane.b32.xlu0 %v1530, 120
  %v1534 = vpop.permute.xlu0 %1533
  %v1536 = vmul.f32 %v1531, %v1534
  %v1537 = vrot.slane %v1394, 6
  %v1539 = vmul.f32 %v1520, %v1537
  %v1540 = vadd.f32 %v1536, %v1539
  %1542 = vrot.lane.b32.xlu0 %v1540, 120
  %v1543 = vpop.permute.xlu0 %1542
  %v1545 = vsel %vm152, %v1543, %v1504
  %v1547 = vsel %vm964, %v1545, 0
  %1549 = vmatprep.subr.mxu0 0.0
  %1550 = vmatpush1.msra.mxu0 0.0
  %1551 = vmatprep.subr.mxu0 0.0
  %1552 = vmatpush1.msra.mxu0 0.0
  %1553 = vmatprep.subr.mxu0 0.0
  %1554 = vmatpush1.msra.mxu0 0.0
  %1555 = vmatprep.subr.mxu0 0.0
  %1556 = vmatpush1.msra.mxu0 0.0
  %1557 = vmatprep.subr.mxu0 0.0
  %1558 = vmatpush1.msra.mxu0 0.0
  %1559 = vmatprep.subr.mxu0 0.0
  %1560 = vmatpush1.msra.mxu0 0.0
  %1561 = vmatprep.subr.mxu0 0.0
  %1562 = vmatpush1.msra.mxu0 0.0
  %1563 = vmatprep.subr.mxu0 0.0
  %1564 = vmatpush1.msra.mxu0 0.0
  %1565 = vmatprep.subr.mxu0 0.0
  %1566 = vmatpush1.msra.mxu0 0.0
  %1567 = vmatprep.subr.mxu0 0.0
  %1568 = vmatpush1.msra.mxu0 0.0
  %1569 = vmatprep.subr.mxu0 0.0
  %1570 = vmatpush1.msra.mxu0 0.0
  %1571 = vmatprep.subr.mxu0 0.0
  %1572 = vmatpush1.msra.mxu0 0.0
  %1573 = vmatprep.subr.mxu0 0.0
  %1574 = vmatpush1.msra.mxu0 0.0
  %1575 = vmatprep.subr.mxu0 0.0
  %1576 = vmatpush1.msra.mxu0 0.0
  %1577 = vmatprep.subr.mxu0 0.0
  %1578 = vmatpush1.msra.mxu0 %v923
  %1579 = vmatprep.subr.mxu0 0.0
  %1580 = vmatpush1.msra.mxu0 %v922
  %1581 = vmatprep.subr.mxu0 0.0
  %1582 = vmatpush2.msra.mxu0 0.0
  %1583 = vmatprep.subr.mxu0 0.0
  %1584 = vmatpush2.msra.mxu0 0.0
  %1585 = vmatprep.subr.mxu0 0.0
  %1586 = vmatpush2.msra.mxu0 0.0
  %1587 = vmatprep.subr.mxu0 0.0
  %1588 = vmatpush2.msra.mxu0 0.0
  %1589 = vmatprep.subr.mxu0 0.0
  %1590 = vmatpush2.msra.mxu0 0.0
  %1591 = vmatprep.subr.mxu0 0.0
  %1592 = vmatpush2.msra.mxu0 0.0
  %1593 = vmatprep.subr.mxu0 0.0
  %1594 = vmatpush2.msra.mxu0 0.0
  %1595 = vmatprep.subr.mxu0 0.0
  %1596 = vmatpush2.msra.mxu0 0.0
  %1597 = vmatprep.subr.mxu0 0.0
  %1598 = vmatpush2.msra.mxu0 0.0
  %1599 = vmatprep.subr.mxu0 0.0
  %1600 = vmatpush2.msra.mxu0 0.0
  %1601 = vmatprep.subr.mxu0 0.0
  %1602 = vmatpush2.msra.mxu0 0.0
  %1603 = vmatprep.subr.mxu0 0.0
  %1604 = vmatpush2.msra.mxu0 0.0
  %1605 = vmatprep.subr.mxu0 0.0
  %1606 = vmatpush2.msra.mxu0 0.0
  %1607 = vmatprep.subr.mxu0 0.0
  %1608 = vmatpush2.msra.mxu0 0.0
  %1609 = vmatprep.subr.mxu0 0.0
  %1610 = vmatpush2.msra.mxu0 0.0
  %1611 = vmatprep.subr.mxu0 0.0
  %1612 = vmatpush2.msra.mxu0 0.0
  %1613 = vmatprep.mubr.f32.mxu0 0.0
  %1614 = vmatmul.mubr.f32.gmra.mxu0 %v1547
  %v1615 = vpop.f32.mrf.mxu0
  %v1616 = vadd.f32 %v929, %v1615
  %v1617 = vpop.f32.mrf.mxu0
  %1618 = vdwg.mxu0
  %1620 = vrot.lane.b32.xlu0 %v1616, 80
  %v1621 = vpop.permute.xlu0 %1620
  %v1623 = vadd.f32 %v1616, %v1621
  %v1624 = vxor.u32 %v1623, 2147483648
  %v1625 = vmul.f32 %v1624, 1.442695
  %v1626 = vpow.pop %v1625
  %v1627 = vadd.f32 %v1626, 1.0
  %v1628 = vrcp.pop %v1627
  %v1629 = vmul.f32 1.0, %v1628
  %1630 = vrot.lane.b32.xlu0 %v1616, 64
  %v1631 = vpop.permute.xlu0 %1630
  %v1633 = vmul.f32 %v1629, %v1631
  %1635 = vrot.lane.b32.xlu0 %v1633, 16
  %v1636 = vpop.permute.xlu0 %1635
  %v1638 = vadd.f32 %v1616, %v1636
  %v1639 = vtanh.pop %v1638
  %v1640 = vsub.f32 1.0, %v1629
  %1642 = vrot.lane.b32.xlu0 %v1639, 120
  %v1643 = vpop.permute.xlu0 %1642
  %v1645 = vmul.f32 %v1640, %v1643
  %v1646 = vmul.f32 %v1629, %v1504
  %v1647 = vadd.f32 %v1645, %v1646
  %1649 = vrot.lane.b32.xlu0 %v1647, 24
  %v1650 = vpop.permute.xlu0 %1649
  %vm1652 = vcmask 320768
  %1653 = vst.msk [vmem:[%s14] sm:$0x3] %vm1652, %v1650
  %v1654 = vrot.slane %v1616, 6
  %1655 = vrot.lane.b32.xlu0 %v1654, 104
  %v1656 = vpop.permute.xlu0 %1655
  %v1658 = vadd.f32 %v909, %v1656
  %v1659 = vxor.u32 %v1658, 2147483648
  %v1660 = vmul.f32 %v1659, 1.442695
  %v1661 = vpow.pop %v1660
  %v1662 = vadd.f32 %v1661, 1.0
  %v1663 = vrcp.pop %v1662
  %v1664 = vmul.f32 1.0, %v1663
  %1665 = vrot.lane.b32.xlu0 %v1654, 88
  %v1666 = vpop.permute.xlu0 %1665
  %v1668 = vmul.f32 %v1664, %v1666
  %1670 = vrot.lane.b32.xlu0 %v1668, 16
  %v1671 = vpop.permute.xlu0 %1670
  %v1673 = vadd.f32 %v909, %v1671
  %v1674 = vtanh.pop %v1673
  %v1675 = vsub.f32 1.0, %v1664
  %1677 = vrot.lane.b32.xlu0 %v1674, 120
  %v1678 = vpop.permute.xlu0 %1677
  %v1680 = vmul.f32 %v1675, %v1678
  %v1681 = vrot.slane %v1540, 6
  %v1683 = vmul.f32 %v1664, %v1681
  %v1684 = vadd.f32 %v1680, %v1683
  %1686 = vrot.lane.b32.xlu0 %v1684, 120
  %v1687 = vpop.permute.xlu0 %1686
  %v1689 = vrot.slane %v1647, 6
  %v1691 = vsel %vm152, %v1687, %v1689
  %v1693 = vrot.slane %v1691, 2
  %v1694 = vsel %vm964, %v1693, 0
  %1696 = vmatprep.subr.mxu0 0.0
  %1697 = vmatpush1.msra.mxu0 0.0
  %1698 = vmatprep.subr.mxu0 0.0
  %1699 = vmatpush1.msra.mxu0 0.0
  %1700 = vmatprep.subr.mxu0 0.0
  %1701 = vmatpush1.msra.mxu0 0.0
  %1702 = vmatprep.subr.mxu0 0.0
  %1703 = vmatpush1.msra.mxu0 0.0
  %1704 = vmatprep.subr.mxu0 0.0
  %1705 = vmatpush1.msra.mxu0 0.0
  %1706 = vmatprep.subr.mxu0 0.0
  %1707 = vmatpush1.msra.mxu0 0.0
  %1708 = vmatprep.subr.mxu0 0.0
  %1709 = vmatpush1.msra.mxu0 0.0
  %1710 = vmatprep.subr.mxu0 0.0
  %1711 = vmatpush1.msra.mxu0 0.0
  %1712 = vmatprep.subr.mxu0 0.0
  %1713 = vmatpush1.msra.mxu0 0.0
  %1714 = vmatprep.subr.mxu0 0.0
  %1715 = vmatpush1.msra.mxu0 0.0
  %1716 = vmatprep.subr.mxu0 0.0
  %1717 = vmatpush1.msra.mxu0 0.0
  %1718 = vmatprep.subr.mxu0 0.0
  %1719 = vmatpush1.msra.mxu0 0.0
  %1720 = vmatprep.subr.mxu0 0.0
  %1721 = vmatpush1.msra.mxu0 0.0
  %1722 = vmatprep.subr.mxu0 0.0
  %1723 = vmatpush1.msra.mxu0 0.0
  %1724 = vmatprep.subr.mxu0 0.0
  %1725 = vmatpush1.msra.mxu0 %v923
  %1726 = vmatprep.subr.mxu0 0.0
  %1727 = vmatpush1.msra.mxu0 %v922
  %1728 = vmatprep.subr.mxu0 0.0
  %1729 = vmatpush2.msra.mxu0 0.0
  %1730 = vmatprep.subr.mxu0 0.0
  %1731 = vmatpush2.msra.mxu0 0.0
  %1732 = vmatprep.subr.mxu0 0.0
  %1733 = vmatpush2.msra.mxu0 0.0
  %1734 = vmatprep.subr.mxu0 0.0
  %1735 = vmatpush2.msra.mxu0 0.0
  %1736 = vmatprep.subr.mxu0 0.0
  %1737 = vmatpush2.msra.mxu0 0.0
  %1738 = vmatprep.subr.mxu0 0.0
  %1739 = vmatpush2.msra.mxu0 0.0
  %1740 = vmatprep.subr.mxu0 0.0
  %1741 = vmatpush2.msra.mxu0 0.0
  %1742 = vmatprep.subr.mxu0 0.0
  %1743 = vmatpush2.msra.mxu0 0.0
  %1744 = vmatprep.subr.mxu0 0.0
  %1745 = vmatpush2.msra.mxu0 0.0
  %1746 = vmatprep.subr.mxu0 0.0
  %1747 = vmatpush2.msra.mxu0 0.0
  %1748 = vmatprep.subr.mxu0 0.0
  %1749 = vmatpush2.msra.mxu0 0.0
  %1750 = vmatprep.subr.mxu0 0.0
  %1751 = vmatpush2.msra.mxu0 0.0
  %1752 = vmatprep.subr.mxu0 0.0
  %1753 = vmatpush2.msra.mxu0 0.0
  %1754 = vmatprep.subr.mxu0 0.0
  %1755 = vmatpush2.msra.mxu0 0.0
  %1756 = vmatprep.subr.mxu0 0.0
  %1757 = vmatpush2.msra.mxu0 0.0
  %1758 = vmatprep.subr.mxu0 0.0
  %1759 = vmatpush2.msra.mxu0 0.0
  %1760 = vmatprep.mubr.f32.mxu0 0.0
  %1761 = vmatmul.mubr.f32.gmra.mxu0 %v1694
  %v1762 = vpop.f32.mrf.mxu0
  %v1763 = vadd.f32 %v929, %v1762
  %v1764 = vpop.f32.mrf.mxu0
  %1765 = vdwg.mxu0
  %1767 = vrot.lane.b32.xlu0 %v1763, 80
  %v1768 = vpop.permute.xlu0 %1767
  %v1770 = vadd.f32 %v1763, %v1768
  %v1771 = vxor.u32 %v1770, 2147483648
  %v1772 = vmul.f32 %v1771, 1.442695
  %v1773 = vpow.pop %v1772
  %v1774 = vadd.f32 %v1773, 1.0
  %v1775 = vrcp.pop %v1774
  %v1776 = vmul.f32 1.0, %v1775
  %1777 = vrot.lane.b32.xlu0 %v1763, 64
  %v1778 = vpop.permute.xlu0 %1777
  %v1780 = vmul.f32 %v1776, %v1778
  %1782 = vrot.lane.b32.xlu0 %v1780, 16
  %v1783 = vpop.permute.xlu0 %1782
  %v1785 = vadd.f32 %v1763, %v1783
  %v1786 = vtanh.pop %v1785
  %v1787 = vsub.f32 1.0, %v1776
  %1789 = vrot.lane.b32.xlu0 %v1786, 120
  %v1790 = vpop.permute.xlu0 %1789
  %v1792 = vmul.f32 %v1787, %v1790
  %v1793 = vmul.f32 %v1776, %v1647
  %v1794 = vadd.f32 %v1792, %v1793
  %1796 = vrot.lane.b32.xlu0 %v1794, 32
  %v1797 = vpop.permute.xlu0 %1796
  %vm1799 = vcmask 386368
  %1800 = vst.msk [vmem:[%s14] sm:$0x3] %vm1799, %v1797
  %v1801 = vrot.slane %v1763, 4
  %1802 = vrot.lane.b32.xlu0 %v1801, 104
  %v1803 = vpop.permute.xlu0 %1802
  %v1805 = vadd.f32 %v909, %v1803
  %v1806 = vxor.u32 %v1805, 2147483648
  %v1807 = vmul.f32 %v1806, 1.442695
  %v1808 = vpow.pop %v1807
  %v1809 = vadd.f32 %v1808, 1.0
  %v1810 = vrcp.pop %v1809
  %v1811 = vmul.f32 1.0, %v1810
  %1812 = vrot.lane.b32.xlu0 %v1801, 88
  %v1813 = vpop.permute.xlu0 %1812
  %v1815 = vmul.f32 %v1811, %v1813
  %1817 = vrot.lane.b32.xlu0 %v1815, 16
  %v1818 = vpop.permute.xlu0 %1817
  %v1820 = vadd.f32 %v909, %v1818
  %v1821 = vtanh.pop %v1820
  %v1822 = vsub.f32 1.0, %v1811
  %1824 = vrot.lane.b32.xlu0 %v1821, 120
  %v1825 = vpop.permute.xlu0 %1824
  %v1827 = vmul.f32 %v1822, %v1825
  %v1828 = vrot.slane %v1684, 6
  %v1830 = vmul.f32 %v1811, %v1828
  %v1831 = vadd.f32 %v1827, %v1830
  %1833 = vrot.lane.b32.xlu0 %v1831, 120
  %v1834 = vpop.permute.xlu0 %1833
  %v1836 = vrot.slane %v1794, 4
  %v1838 = vsel %vm152, %v1834, %v1836
  %v1840 = vrot.slane %v1838, 4
  %v1841 = vsel %vm964, %v1840, 0
  %1843 = vmatprep.subr.mxu0 0.0
  %1844 = vmatpush1.msra.mxu0 0.0
  %1845 = vmatprep.subr.mxu0 0.0
  %1846 = vmatpush1.msra.mxu0 0.0
  %1847 = vmatprep.subr.mxu0 0.0
  %1848 = vmatpush1.msra.mxu0 0.0
  %1849 = vmatprep.subr.mxu0 0.0
  %1850 = vmatpush1.msra.mxu0 0.0
  %1851 = vmatprep.subr.mxu0 0.0
  %1852 = vmatpush1.msra.mxu0 0.0
  %1853 = vmatprep.subr.mxu0 0.0
  %1854 = vmatpush1.msra.mxu0 0.0
  %1855 = vmatprep.subr.mxu0 0.0
  %1856 = vmatpush1.msra.mxu0 0.0
  %1857 = vmatprep.subr.mxu0 0.0
  %1858 = vmatpush1.msra.mxu0 0.0
  %1859 = vmatprep.subr.mxu0 0.0
  %1860 = vmatpush1.msra.mxu0 0.0
  %1861 = vmatprep.subr.mxu0 0.0
  %1862 = vmatpush1.msra.mxu0 0.0
  %1863 = vmatprep.subr.mxu0 0.0
  %1864 = vmatpush1.msra.mxu0 0.0
  %1865 = vmatprep.subr.mxu0 0.0
  %1866 = vmatpush1.msra.mxu0 0.0
  %1867 = vmatprep.subr.mxu0 0.0
  %1868 = vmatpush1.msra.mxu0 0.0
  %1869 = vmatprep.subr.mxu0 0.0
  %1870 = vmatpush1.msra.mxu0 0.0
  %1871 = vmatprep.subr.mxu0 0.0
  %1872 = vmatpush1.msra.mxu0 %v923
  %1873 = vmatprep.subr.mxu0 0.0
  %1874 = vmatpush1.msra.mxu0 %v922
  %1875 = vmatprep.subr.mxu0 0.0
  %1876 = vmatpush2.msra.mxu0 0.0
  %1877 = vmatprep.subr.mxu0 0.0
  %1878 = vmatpush2.msra.mxu0 0.0
  %1879 = vmatprep.subr.mxu0 0.0
  %1880 = vmatpush2.msra.mxu0 0.0
  %1881 = vmatprep.subr.mxu0 0.0
  %1882 = vmatpush2.msra.mxu0 0.0
  %1883 = vmatprep.subr.mxu0 0.0
  %1884 = vmatpush2.msra.mxu0 0.0
  %1885 = vmatprep.subr.mxu0 0.0
  %1886 = vmatpush2.msra.mxu0 0.0
  %1887 = vmatprep.subr.mxu0 0.0
  %1888 = vmatpush2.msra.mxu0 0.0
  %1889 = vmatprep.subr.mxu0 0.0
  %1890 = vmatpush2.msra.mxu0 0.0
  %1891 = vmatprep.subr.mxu0 0.0
  %1892 = vmatpush2.msra.mxu0 0.0
  %1893 = vmatprep.subr.mxu0 0.0
  %1894 = vmatpush2.msra.mxu0 0.0
  %1895 = vmatprep.subr.mxu0 0.0
  %1896 = vmatpush2.msra.mxu0 0.0
  %1897 = vmatprep.subr.mxu0 0.0
  %1898 = vmatpush2.msra.mxu0 0.0
  %1899 = vmatprep.subr.mxu0 0.0
  %1900 = vmatpush2.msra.mxu0 0.0
  %1901 = vmatprep.subr.mxu0 0.0
  %1902 = vmatpush2.msra.mxu0 0.0
  %1903 = vmatprep.subr.mxu0 0.0
  %1904 = vmatpush2.msra.mxu0 0.0
  %1905 = vmatprep.subr.mxu0 0.0
  %1906 = vmatpush2.msra.mxu0 0.0
  %1907 = vmatprep.mubr.f32.mxu0 0.0
  %1908 = vmatmul.mubr.f32.gmra.mxu0 %v1841
  %v1909 = vpop.f32.mrf.mxu0
  %v1910 = vadd.f32 %v929, %v1909
  %v1911 = vpop.f32.mrf.mxu0
  %1912 = vdwg.mxu0
  %1914 = vrot.lane.b32.xlu0 %v1910, 80
  %v1915 = vpop.permute.xlu0 %1914
  %v1917 = vadd.f32 %v1910, %v1915
  %v1918 = vxor.u32 %v1917, 2147483648
  %v1919 = vmul.f32 %v1918, 1.442695
  %v1920 = vpow.pop %v1919
  %v1921 = vadd.f32 %v1920, 1.0
  %v1922 = vrcp.pop %v1921
  %v1923 = vmul.f32 1.0, %v1922
  %1924 = vrot.lane.b32.xlu0 %v1910, 64
  %v1925 = vpop.permute.xlu0 %1924
  %v1927 = vmul.f32 %v1923, %v1925
  %1929 = vrot.lane.b32.xlu0 %v1927, 16
  %v1930 = vpop.permute.xlu0 %1929
  %v1932 = vadd.f32 %v1910, %v1930
  %v1933 = vtanh.pop %v1932
  %v1934 = vsub.f32 1.0, %v1923
  %1936 = vrot.lane.b32.xlu0 %v1933, 120
  %v1937 = vpop.permute.xlu0 %1936
  %v1939 = vmul.f32 %v1934, %v1937
  %v1940 = vmul.f32 %v1923, %v1794
  %v1941 = vadd.f32 %v1939, %v1940
  %1943 = vrot.lane.b32.xlu0 %v1941, 40
  %v1944 = vpop.permute.xlu0 %1943
  %vm1946 = vcmask 451968
  %1947 = vst.msk [vmem:[%s14] sm:$0x3] %vm1946, %v1944
  %v1948 = vrot.slane %v1910, 2
  %1949 = vrot.lane.b32.xlu0 %v1948, 104
  %v1950 = vpop.permute.xlu0 %1949
  %v1952 = vadd.f32 %v909, %v1950
  %v1953 = vxor.u32 %v1952, 2147483648
  %v1954 = vmul.f32 %v1953, 1.442695
  %v1955 = vpow.pop %v1954
  %v1956 = vadd.f32 %v1955, 1.0
  %v1957 = vrcp.pop %v1956
  %v1958 = vmul.f32 1.0, %v1957
  %1959 = vrot.lane.b32.xlu0 %v1948, 88
  %v1960 = vpop.permute.xlu0 %1959
  %v1962 = vmul.f32 %v1958, %v1960
  %1964 = vrot.lane.b32.xlu0 %v1962, 16
  %v1965 = vpop.permute.xlu0 %1964
  %v1967 = vadd.f32 %v909, %v1965
  %v1968 = vtanh.pop %v1967
  %v1969 = vsub.f32 1.0, %v1958
  %1971 = vrot.lane.b32.xlu0 %v1968, 120
  %v1972 = vpop.permute.xlu0 %1971
  %v1974 = vmul.f32 %v1969, %v1972
  %v1975 = vrot.slane %v1831, 6
  %v1977 = vmul.f32 %v1958, %v1975
  %v1978 = vadd.f32 %v1974, %v1977
  %1980 = vrot.lane.b32.xlu0 %v1978, 120
  %v1981 = vpop.permute.xlu0 %1980
  %v1983 = vrot.slane %v1941, 2
  %v1985 = vsel %vm152, %v1981, %v1983
  %v1987 = vrot.slane %v1985, 6
  %v1988 = vsel %vm964, %v1987, 0
  %1990 = vmatprep.subr.mxu0 0.0
  %1991 = vmatpush1.msra.mxu0 0.0
  %1992 = vmatprep.subr.mxu0 0.0
  %1993 = vmatpush1.msra.mxu0 0.0
  %1994 = vmatprep.subr.mxu0 0.0
  %1995 = vmatpush1.msra.mxu0 0.0
  %1996 = vmatprep.subr.mxu0 0.0
  %1997 = vmatpush1.msra.mxu0 0.0
  %1998 = vmatprep.subr.mxu0 0.0
  %1999 = vmatpush1.msra.mxu0 0.0
  %2000 = vmatprep.subr.mxu0 0.0
  %2001 = vmatpush1.msra.mxu0 0.0
  %2002 = vmatprep.subr.mxu0 0.0
  %2003 = vmatpush1.msra.mxu0 0.0
  %2004 = vmatprep.subr.mxu0 0.0
  %2005 = vmatpush1.msra.mxu0 0.0
  %2006 = vmatprep.subr.mxu0 0.0
  %2007 = vmatpush1.msra.mxu0 0.0
  %2008 = vmatprep.subr.mxu0 0.0
  %2009 = vmatpush1.msra.mxu0 0.0
  %2010 = vmatprep.subr.mxu0 0.0
  %2011 = vmatpush1.msra.mxu0 0.0
  %2012 = vmatprep.subr.mxu0 0.0
  %2013 = vmatpush1.msra.mxu0 0.0
  %2014 = vmatprep.subr.mxu0 0.0
  %2015 = vmatpush1.msra.mxu0 0.0
  %2016 = vmatprep.subr.mxu0 0.0
  %2017 = vmatpush1.msra.mxu0 0.0
  %2018 = vmatprep.subr.mxu0 0.0
  %2019 = vmatpush1.msra.mxu0 %v923
  %2020 = vmatprep.subr.mxu0 0.0
  %2021 = vmatpush1.msra.mxu0 %v922
  %2022 = vmatprep.subr.mxu0 0.0
  %2023 = vmatpush2.msra.mxu0 0.0
  %2024 = vmatprep.subr.mxu0 0.0
  %2025 = vmatpush2.msra.mxu0 0.0
  %2026 = vmatprep.subr.mxu0 0.0
  %2027 = vmatpush2.msra.mxu0 0.0
  %2028 = vmatprep.subr.mxu0 0.0
  %2029 = vmatpush2.msra.mxu0 0.0
  %2030 = vmatprep.subr.mxu0 0.0
  %2031 = vmatpush2.msra.mxu0 0.0
  %2032 = vmatprep.subr.mxu0 0.0
  %2033 = vmatpush2.msra.mxu0 0.0
  %2034 = vmatprep.subr.mxu0 0.0
  %2035 = vmatpush2.msra.mxu0 0.0
  %2036 = vmatprep.subr.mxu0 0.0
  %2037 = vmatpush2.msra.mxu0 0.0
  %2038 = vmatprep.subr.mxu0 0.0
  %2039 = vmatpush2.msra.mxu0 0.0
  %2040 = vmatprep.subr.mxu0 0.0
  %2041 = vmatpush2.msra.mxu0 0.0
  %2042 = vmatprep.subr.mxu0 0.0
  %2043 = vmatpush2.msra.mxu0 0.0
  %2044 = vmatprep.subr.mxu0 0.0
  %2045 = vmatpush2.msra.mxu0 0.0
  %2046 = vmatprep.subr.mxu0 0.0
  %2047 = vmatpush2.msra.mxu0 0.0
  %2048 = vmatprep.subr.mxu0 0.0
  %2049 = vmatpush2.msra.mxu0 0.0
  %2050 = vmatprep.subr.mxu0 0.0
  %2051 = vmatpush2.msra.mxu0 0.0
  %2052 = vmatprep.subr.mxu0 0.0
  %2053 = vmatpush2.msra.mxu0 0.0
  %2054 = vmatprep.mubr.f32.mxu0 0.0
  %2055 = vmatmul.mubr.f32.gmra.mxu0 %v1988
  %v2056 = vpop.f32.mrf.mxu0
  %v2057 = vadd.f32 %v929, %v2056
  %v2058 = vpop.f32.mrf.mxu0
  %2059 = vdwg.mxu0
  %2061 = vrot.lane.b32.xlu0 %v2057, 80
  %v2062 = vpop.permute.xlu0 %2061
  %v2064 = vadd.f32 %v2057, %v2062
  %v2065 = vxor.u32 %v2064, 2147483648
  %v2066 = vmul.f32 %v2065, 1.442695
  %v2067 = vpow.pop %v2066
  %v2068 = vadd.f32 %v2067, 1.0
  %v2069 = vrcp.pop %v2068
  %v2070 = vmul.f32 1.0, %v2069
  %2071 = vrot.lane.b32.xlu0 %v2057, 64
  %v2072 = vpop.permute.xlu0 %2071
  %v2074 = vmul.f32 %v2070, %v2072
  %2076 = vrot.lane.b32.xlu0 %v2074, 16
  %v2077 = vpop.permute.xlu0 %2076
  %v2079 = vadd.f32 %v2057, %v2077
  %v2080 = vtanh.pop %v2079
  %v2081 = vsub.f32 1.0, %v2070
  %2083 = vrot.lane.b32.xlu0 %v2080, 120
  %v2084 = vpop.permute.xlu0 %2083
  %v2086 = vmul.f32 %v2081, %v2084
  %v2087 = vmul.f32 %v2070, %v1941
  %v2088 = vadd.f32 %v2086, %v2087
  %2090 = vrot.lane.b32.xlu0 %v2088, 48
  %v2091 = vpop.permute.xlu0 %2090
  %vm2093 = vcmask 517568
  %2094 = vst.msk [vmem:[%s14] sm:$0x3] %vm2093, %v2091
  %2095 = vrot.lane.b32.xlu0 %v2057, 104
  %v2096 = vpop.permute.xlu0 %2095
  %v2098 = vadd.f32 %v914, %v2096
  %v2099 = vxor.u32 %v2098, 2147483648
  %v2100 = vmul.f32 %v2099, 1.442695
  %v2101 = vpow.pop %v2100
  %v2102 = vadd.f32 %v2101, 1.0
  %v2103 = vrcp.pop %v2102
  %v2104 = vmul.f32 1.0, %v2103
  %2105 = vrot.lane.b32.xlu0 %v2057, 88
  %v2106 = vpop.permute.xlu0 %2105
  %v2108 = vmul.f32 %v2104, %v2106
  %2110 = vrot.lane.b32.xlu0 %v2108, 16
  %v2111 = vpop.permute.xlu0 %2110
  %v2113 = vadd.f32 %v914, %v2111
  %v2114 = vtanh.pop %v2113
  %v2115 = vsub.f32 1.0, %v2104
  %2117 = vrot.lane.b32.xlu0 %v2114, 120
  %v2118 = vpop.permute.xlu0 %2117
  %v2120 = vmul.f32 %v2115, %v2118
  %v2121 = vrot.slane %v1978, 6
  %v2123 = vmul.f32 %v2104, %v2121
  %v2124 = vadd.f32 %v2120, %v2123
  %2126 = vrot.lane.b32.xlu0 %v2124, 120
  %v2127 = vpop.permute.xlu0 %2126
  %v2129 = vsel %vm152, %v2127, %v2088
  %v2131 = vsel %vm964, %v2129, 0
  %2133 = vmatprep.subr.mxu0 0.0
  %2134 = vmatpush1.msra.mxu0 0.0
  %2135 = vmatprep.subr.mxu0 0.0
  %2136 = vmatpush1.msra.mxu0 0.0
  %2137 = vmatprep.subr.mxu0 0.0
  %2138 = vmatpush1.msra.mxu0 0.0
  %2139 = vmatprep.subr.mxu0 0.0
  %2140 = vmatpush1.msra.mxu0 0.0
  %2141 = vmatprep.subr.mxu0 0.0
  %2142 = vmatpush1.msra.mxu0 0.0
  %2143 = vmatprep.subr.mxu0 0.0
  %2144 = vmatpush1.msra.mxu0 0.0
  %2145 = vmatprep.subr.mxu0 0.0
  %2146 = vmatpush1.msra.mxu0 0.0
  %2147 = vmatprep.subr.mxu0 0.0
  %2148 = vmatpush1.msra.mxu0 0.0
  %2149 = vmatprep.subr.mxu0 0.0
  %2150 = vmatpush1.msra.mxu0 0.0
  %2151 = vmatprep.subr.mxu0 0.0
  %2152 = vmatpush1.msra.mxu0 0.0
  %2153 = vmatprep.subr.mxu0 0.0
  %2154 = vmatpush1.msra.mxu0 0.0
  %2155 = vmatprep.subr.mxu0 0.0
  %2156 = vmatpush1.msra.mxu0 0.0
  %2157 = vmatprep.subr.mxu0 0.0
  %2158 = vmatpush1.msra.mxu0 0.0
  %2159 = vmatprep.subr.mxu0 0.0
  %2160 = vmatpush1.msra.mxu0 0.0
  %2161 = vmatprep.subr.mxu0 0.0
  %2162 = vmatpush1.msra.mxu0 %v923
  %2163 = vmatprep.subr.mxu0 0.0
  %2164 = vmatpush1.msra.mxu0 %v922
  %2165 = vmatprep.subr.mxu0 0.0
  %2166 = vmatpush2.msra.mxu0 0.0
  %2167 = vmatprep.subr.mxu0 0.0
  %2168 = vmatpush2.msra.mxu0 0.0
  %2169 = vmatprep.subr.mxu0 0.0
  %2170 = vmatpush2.msra.mxu0 0.0
  %2171 = vmatprep.subr.mxu0 0.0
  %2172 = vmatpush2.msra.mxu0 0.0
  %2173 = vmatprep.subr.mxu0 0.0
  %2174 = vmatpush2.msra.mxu0 0.0
  %2175 = vmatprep.subr.mxu0 0.0
  %2176 = vmatpush2.msra.mxu0 0.0
  %2177 = vmatprep.subr.mxu0 0.0
  %2178 = vmatpush2.msra.mxu0 0.0
  %2179 = vmatprep.subr.mxu0 0.0
  %2180 = vmatpush2.msra.mxu0 0.0
  %2181 = vmatprep.subr.mxu0 0.0
  %2182 = vmatpush2.msra.mxu0 0.0
  %2183 = vmatprep.subr.mxu0 0.0
  %2184 = vmatpush2.msra.mxu0 0.0
  %2185 = vmatprep.subr.mxu0 0.0
  %2186 = vmatpush2.msra.mxu0 0.0
  %2187 = vmatprep.subr.mxu0 0.0
  %2188 = vmatpush2.msra.mxu0 0.0
  %2189 = vmatprep.subr.mxu0 0.0
  %2190 = vmatpush2.msra.mxu0 0.0
  %2191 = vmatprep.subr.mxu0 0.0
  %2192 = vmatpush2.msra.mxu0 0.0
  %2193 = vmatprep.subr.mxu0 0.0
  %2194 = vmatpush2.msra.mxu0 0.0
  %2195 = vmatprep.subr.mxu0 0.0
  %2196 = vmatpush2.msra.mxu0 0.0
  %2197 = vmatprep.mubr.f32.mxu0 0.0
  %2198 = vmatmul.mubr.f32.gmra.mxu0 %v2131
  %v2199 = vpop.f32.mrf.mxu0
  %v2200 = vadd.f32 %v929, %v2199
  %v2201 = vpop.f32.mrf.mxu0
  %2202 = vdwg.mxu0
  %2204 = vrot.lane.b32.xlu0 %v2200, 80
  %v2205 = vpop.permute.xlu0 %2204
  %v2207 = vadd.f32 %v2200, %v2205
  %v2208 = vxor.u32 %v2207, 2147483648
  %v2209 = vmul.f32 %v2208, 1.442695
  %v2210 = vpow.pop %v2209
  %v2211 = vadd.f32 %v2210, 1.0
  %v2212 = vrcp.pop %v2211
  %v2213 = vmul.f32 1.0, %v2212
  %2214 = vrot.lane.b32.xlu0 %v2200, 64
  %v2215 = vpop.permute.xlu0 %2214
  %v2217 = vmul.f32 %v2213, %v2215
  %2219 = vrot.lane.b32.xlu0 %v2217, 16
  %v2220 = vpop.permute.xlu0 %2219
  %v2222 = vadd.f32 %v2200, %v2220
  %v2223 = vtanh.pop %v2222
  %v2224 = vsub.f32 1.0, %v2213
  %2226 = vrot.lane.b32.xlu0 %v2223, 120
  %v2227 = vpop.permute.xlu0 %2226
  %v2229 = vmul.f32 %v2224, %v2227
  %v2230 = vmul.f32 %v2213, %v2088
  %v2231 = vadd.f32 %v2229, %v2230
  %2233 = vrot.lane.b32.xlu0 %v2231, 56
  %v2234 = vpop.permute.xlu0 %2233
  %vm2236 = vcmask 583168
  %2237 = vst.msk [vmem:[%s14] sm:$0x3] %vm2236, %v2234
  %v2238 = vrot.slane %v2200, 6
  %2239 = vrot.lane.b32.xlu0 %v2238, 104
  %v2240 = vpop.permute.xlu0 %2239
  %v2242 = vadd.f32 %v914, %v2240
  %v2243 = vxor.u32 %v2242, 2147483648
  %v2244 = vmul.f32 %v2243, 1.442695
  %v2245 = vpow.pop %v2244
  %v2246 = vadd.f32 %v2245, 1.0
  %v2247 = vrcp.pop %v2246
  %v2248 = vmul.f32 1.0, %v2247
  %2249 = vrot.lane.b32.xlu0 %v2238, 88
  %v2250 = vpop.permute.xlu0 %2249
  %v2252 = vmul.f32 %v2248, %v2250
  %2254 = vrot.lane.b32.xlu0 %v2252, 16
  %v2255 = vpop.permute.xlu0 %2254
  %v2257 = vadd.f32 %v914, %v2255
  %v2258 = vtanh.pop %v2257
  %v2259 = vsub.f32 1.0, %v2248
  %2261 = vrot.lane.b32.xlu0 %v2258, 120
  %v2262 = vpop.permute.xlu0 %2261
  %v2264 = vmul.f32 %v2259, %v2262
  %v2265 = vrot.slane %v2124, 6
  %v2267 = vmul.f32 %v2248, %v2265
  %v2268 = vadd.f32 %v2264, %v2267
  %2270 = vrot.lane.b32.xlu0 %v2268, 120
  %v2271 = vpop.permute.xlu0 %2270
  %v2273 = vrot.slane %v2231, 6
  %v2275 = vsel %vm152, %v2271, %v2273
  %v2277 = vrot.slane %v2275, 2
  %v2278 = vsel %vm964, %v2277, 0
  %2280 = vmatprep.subr.mxu0 0.0
  %2281 = vmatpush1.msra.mxu0 0.0
  %2282 = vmatprep.subr.mxu0 0.0
  %2283 = vmatpush1.msra.mxu0 0.0
  %2284 = vmatprep.subr.mxu0 0.0
  %2285 = vmatpush1.msra.mxu0 0.0
  %2286 = vmatprep.subr.mxu0 0.0
  %2287 = vmatpush1.msra.mxu0 0.0
  %2288 = vmatprep.subr.mxu0 0.0
  %2289 = vmatpush1.msra.mxu0 0.0
  %2290 = vmatprep.subr.mxu0 0.0
  %2291 = vmatpush1.msra.mxu0 0.0
  %2292 = vmatprep.subr.mxu0 0.0
  %2293 = vmatpush1.msra.mxu0 0.0
  %2294 = vmatprep.subr.mxu0 0.0
  %2295 = vmatpush1.msra.mxu0 0.0
  %2296 = vmatprep.subr.mxu0 0.0
  %2297 = vmatpush1.msra.mxu0 0.0
  %2298 = vmatprep.subr.mxu0 0.0
  %2299 = vmatpush1.msra.mxu0 0.0
  %2300 = vmatprep.subr.mxu0 0.0
  %2301 = vmatpush1.msra.mxu0 0.0
  %2302 = vmatprep.subr.mxu0 0.0
  %2303 = vmatpush1.msra.mxu0 0.0
  %2304 = vmatprep.subr.mxu0 0.0
  %2305 = vmatpush1.msra.mxu0 0.0
  %2306 = vmatprep.subr.mxu0 0.0
  %2307 = vmatpush1.msra.mxu0 0.0
  %2308 = vmatprep.subr.mxu0 0.0
  %2309 = vmatpush1.msra.mxu0 %v923
  %2310 = vmatprep.subr.mxu0 0.0
  %2311 = vmatpush1.msra.mxu0 %v922
  %2312 = vmatprep.subr.mxu0 0.0
  %2313 = vmatpush2.msra.mxu0 0.0
  %2314 = vmatprep.subr.mxu0 0.0
  %2315 = vmatpush2.msra.mxu0 0.0
  %2316 = vmatprep.subr.mxu0 0.0
  %2317 = vmatpush2.msra.mxu0 0.0
  %2318 = vmatprep.subr.mxu0 0.0
  %2319 = vmatpush2.msra.mxu0 0.0
  %2320 = vmatprep.subr.mxu0 0.0
  %2321 = vmatpush2.msra.mxu0 0.0
  %2322 = vmatprep.subr.mxu0 0.0
  %2323 = vmatpush2.msra.mxu0 0.0
  %2324 = vmatprep.subr.mxu0 0.0
  %2325 = vmatpush2.msra.mxu0 0.0
  %2326 = vmatprep.subr.mxu0 0.0
  %2327 = vmatpush2.msra.mxu0 0.0
  %2328 = vmatprep.subr.mxu0 0.0
  %2329 = vmatpush2.msra.mxu0 0.0
  %2330 = vmatprep.subr.mxu0 0.0
  %2331 = vmatpush2.msra.mxu0 0.0
  %2332 = vmatprep.subr.mxu0 0.0
  %2333 = vmatpush2.msra.mxu0 0.0
  %2334 = vmatprep.subr.mxu0 0.0
  %2335 = vmatpush2.msra.mxu0 0.0
  %2336 = vmatprep.subr.mxu0 0.0
  %2337 = vmatpush2.msra.mxu0 0.0
  %2338 = vmatprep.subr.mxu0 0.0
  %2339 = vmatpush2.msra.mxu0 0.0
  %2340 = vmatprep.subr.mxu0 0.0
  %2341 = vmatpush2.msra.mxu0 0.0
  %2342 = vmatprep.subr.mxu0 0.0
  %2343 = vmatpush2.msra.mxu0 0.0
  %2344 = vmatprep.mubr.f32.mxu0 0.0
  %2345 = vmatmul.mubr.f32.gmra.mxu0 %v2278
  %v2346 = vpop.f32.mrf.mxu0
  %v2347 = vadd.f32 %v929, %v2346
  %v2348 = vpop.f32.mrf.mxu0
  %2349 = vdwg.mxu0
  %2351 = vrot.lane.b32.xlu0 %v2347, 80
  %v2352 = vpop.permute.xlu0 %2351
  %v2354 = vadd.f32 %v2347, %v2352
  %v2355 = vxor.u32 %v2354, 2147483648
  %v2356 = vmul.f32 %v2355, 1.442695
  %v2357 = vpow.pop %v2356
  %v2358 = vadd.f32 %v2357, 1.0
  %v2359 = vrcp.pop %v2358
  %v2360 = vmul.f32 1.0, %v2359
  %2361 = vrot.lane.b32.xlu0 %v2347, 64
  %v2362 = vpop.permute.xlu0 %2361
  %v2364 = vmul.f32 %v2360, %v2362
  %2366 = vrot.lane.b32.xlu0 %v2364, 16
  %v2367 = vpop.permute.xlu0 %2366
  %v2369 = vadd.f32 %v2347, %v2367
  %v2370 = vtanh.pop %v2369
  %v2371 = vsub.f32 1.0, %v2360
  %2373 = vrot.lane.b32.xlu0 %v2370, 120
  %v2374 = vpop.permute.xlu0 %2373
  %v2376 = vmul.f32 %v2371, %v2374
  %v2377 = vmul.f32 %v2360, %v2231
  %v2378 = vadd.f32 %v2376, %v2377
  %2380 = vrot.lane.b32.xlu0 %v2378, 64
  %v2381 = vpop.permute.xlu0 %2380
  %vm2383 = vcmask 648768
  %2384 = vst.msk [vmem:[%s14] sm:$0x3] %vm2383, %v2381
  %v2385 = vrot.slane %v2347, 4
  %2386 = vrot.lane.b32.xlu0 %v2385, 104
  %v2387 = vpop.permute.xlu0 %2386
  %v2389 = vadd.f32 %v914, %v2387
  %v2390 = vxor.u32 %v2389, 2147483648
  %v2391 = vmul.f32 %v2390, 1.442695
  %v2392 = vpow.pop %v2391
  %v2393 = vadd.f32 %v2392, 1.0
  %v2394 = vrcp.pop %v2393
  %v2395 = vmul.f32 1.0, %v2394
  %2396 = vrot.lane.b32.xlu0 %v2385, 88
  %v2397 = vpop.permute.xlu0 %2396
  %v2399 = vmul.f32 %v2395, %v2397
  %2401 = vrot.lane.b32.xlu0 %v2399, 16
  %v2402 = vpop.permute.xlu0 %2401
  %v2404 = vadd.f32 %v914, %v2402
  %v2405 = vtanh.pop %v2404
  %v2406 = vsub.f32 1.0, %v2395
  %2408 = vrot.lane.b32.xlu0 %v2405, 120
  %v2409 = vpop.permute.xlu0 %2408
  %v2411 = vmul.f32 %v2406, %v2409
  %v2412 = vrot.slane %v2268, 6
  %v2414 = vmul.f32 %v2395, %v2412
  %v2415 = vadd.f32 %v2411, %v2414
  %2417 = vrot.lane.b32.xlu0 %v2415, 120
  %v2418 = vpop.permute.xlu0 %2417
  %v2420 = vrot.slane %v2378, 4
  %v2422 = vsel %vm152, %v2418, %v2420
  %v2424 = vrot.slane %v2422, 4
  %v2425 = vsel %vm964, %v2424, 0
  %2427 = vmatprep.subr.mxu0 0.0
  %2428 = vmatpush1.msra.mxu0 0.0
  %2429 = vmatprep.subr.mxu0 0.0
  %2430 = vmatpush1.msra.mxu0 0.0
  %2431 = vmatprep.subr.mxu0 0.0
  %2432 = vmatpush1.msra.mxu0 0.0
  %2433 = vmatprep.subr.mxu0 0.0
  %2434 = vmatpush1.msra.mxu0 0.0
  %2435 = vmatprep.subr.mxu0 0.0
  %2436 = vmatpush1.msra.mxu0 0.0
  %2437 = vmatprep.subr.mxu0 0.0
  %2438 = vmatpush1.msra.mxu0 0.0
  %2439 = vmatprep.subr.mxu0 0.0
  %2440 = vmatpush1.msra.mxu0 0.0
  %2441 = vmatprep.subr.mxu0 0.0
  %2442 = vmatpush1.msra.mxu0 0.0
  %2443 = vmatprep.subr.mxu0 0.0
  %2444 = vmatpush1.msra.mxu0 0.0
  %2445 = vmatprep.subr.mxu0 0.0
  %2446 = vmatpush1.msra.mxu0 0.0
  %2447 = vmatprep.subr.mxu0 0.0
  %2448 = vmatpush1.msra.mxu0 0.0
  %2449 = vmatprep.subr.mxu0 0.0
  %2450 = vmatpush1.msra.mxu0 0.0
  %2451 = vmatprep.subr.mxu0 0.0
  %2452 = vmatpush1.msra.mxu0 0.0
  %2453 = vmatprep.subr.mxu0 0.0
  %2454 = vmatpush1.msra.mxu0 0.0
  %2455 = vmatprep.subr.mxu0 0.0
  %2456 = vmatpush1.msra.mxu0 %v923
  %2457 = vmatprep.subr.mxu0 0.0
  %2458 = vmatpush1.msra.mxu0 %v922
  %2459 = vmatprep.subr.mxu0 0.0
  %2460 = vmatpush2.msra.mxu0 0.0
  %2461 = vmatprep.subr.mxu0 0.0
  %2462 = vmatpush2.msra.mxu0 0.0
  %2463 = vmatprep.subr.mxu0 0.0
  %2464 = vmatpush2.msra.mxu0 0.0
  %2465 = vmatprep.subr.mxu0 0.0
  %2466 = vmatpush2.msra.mxu0 0.0
  %2467 = vmatprep.subr.mxu0 0.0
  %2468 = vmatpush2.msra.mxu0 0.0
  %2469 = vmatprep.subr.mxu0 0.0
  %2470 = vmatpush2.msra.mxu0 0.0
  %2471 = vmatprep.subr.mxu0 0.0
  %2472 = vmatpush2.msra.mxu0 0.0
  %2473 = vmatprep.subr.mxu0 0.0
  %2474 = vmatpush2.msra.mxu0 0.0
  %2475 = vmatprep.subr.mxu0 0.0
  %2476 = vmatpush2.msra.mxu0 0.0
  %2477 = vmatprep.subr.mxu0 0.0
  %2478 = vmatpush2.msra.mxu0 0.0
  %2479 = vmatprep.subr.mxu0 0.0
  %2480 = vmatpush2.msra.mxu0 0.0
  %2481 = vmatprep.subr.mxu0 0.0
  %2482 = vmatpush2.msra.mxu0 0.0
  %2483 = vmatprep.subr.mxu0 0.0
  %2484 = vmatpush2.msra.mxu0 0.0
  %2485 = vmatprep.subr.mxu0 0.0
  %2486 = vmatpush2.msra.mxu0 0.0
  %2487 = vmatprep.subr.mxu0 0.0
  %2488 = vmatpush2.msra.mxu0 0.0
  %2489 = vmatprep.subr.mxu0 0.0
  %2490 = vmatpush2.msra.mxu0 0.0
  %2491 = vmatprep.mubr.f32.mxu0 0.0
  %2492 = vmatmul.mubr.f32.gmra.mxu0 %v2425
  %v2493 = vpop.f32.mrf.mxu0
  %v2494 = vadd.f32 %v929, %v2493
  %v2495 = vpop.f32.mrf.mxu0
  %2496 = vdwg.mxu0
  %2498 = vrot.lane.b32.xlu0 %v2494, 80
  %v2499 = vpop.permute.xlu0 %2498
  %v2501 = vadd.f32 %v2494, %v2499
  %v2502 = vxor.u32 %v2501, 2147483648
  %v2503 = vmul.f32 %v2502, 1.442695
  %v2504 = vpow.pop %v2503
  %v2505 = vadd.f32 %v2504, 1.0
  %v2506 = vrcp.pop %v2505
  %v2507 = vmul.f32 1.0, %v2506
  %2508 = vrot.lane.b32.xlu0 %v2494, 64
  %v2509 = vpop.permute.xlu0 %2508
  %v2511 = vmul.f32 %v2507, %v2509
  %2513 = vrot.lane.b32.xlu0 %v2511, 16
  %v2514 = vpop.permute.xlu0 %2513
  %v2516 = vadd.f32 %v2494, %v2514
  %v2517 = vtanh.pop %v2516
  %v2518 = vsub.f32 1.0, %v2507
  %2520 = vrot.lane.b32.xlu0 %v2517, 120
  %v2521 = vpop.permute.xlu0 %2520
  %v2523 = vmul.f32 %v2518, %v2521
  %v2524 = vmul.f32 %v2507, %v2378
  %v2525 = vadd.f32 %v2523, %v2524
  %2527 = vrot.lane.b32.xlu0 %v2525, 72
  %v2528 = vpop.permute.xlu0 %2527
  %vm2530 = vcmask 714368
  %2531 = vst.msk [vmem:[%s14] sm:$0x3] %vm2530, %v2528
  %v2532 = vrot.slane %v2494, 2
  %2533 = vrot.lane.b32.xlu0 %v2532, 104
  %v2534 = vpop.permute.xlu0 %2533
  %v2536 = vadd.f32 %v914, %v2534
  %v2537 = vxor.u32 %v2536, 2147483648
  %v2538 = vmul.f32 %v2537, 1.442695
  %v2539 = vpow.pop %v2538
  %v2540 = vadd.f32 %v2539, 1.0
  %v2541 = vrcp.pop %v2540
  %v2542 = vmul.f32 1.0, %v2541
  %2543 = vrot.lane.b32.xlu0 %v2532, 88
  %v2544 = vpop.permute.xlu0 %2543
  %v2546 = vmul.f32 %v2542, %v2544
  %2548 = vrot.lane.b32.xlu0 %v2546, 16
  %v2549 = vpop.permute.xlu0 %2548
  %v2551 = vadd.f32 %v914, %v2549
  %v2552 = vtanh.pop %v2551
  %v2553 = vsub.f32 1.0, %v2542
  %2555 = vrot.lane.b32.xlu0 %v2552, 120
  %v2556 = vpop.permute.xlu0 %2555
  %v2558 = vmul.f32 %v2553, %v2556
  %v2559 = vrot.slane %v2415, 6
  %v2561 = vmul.f32 %v2542, %v2559
  %v2562 = vadd.f32 %v2558, %v2561
  %2564 = vrot.lane.b32.xlu0 %v2562, 120
  %v2565 = vpop.permute.xlu0 %2564
  %v2567 = vrot.slane %v2525, 2
  %v2569 = vsel %vm152, %v2565, %v2567
  %v2571 = vrot.slane %v2569, 6
  %v2572 = vsel %vm964, %v2571, 0
  %2574 = vmatprep.subr.mxu0 0.0
  %2575 = vmatpush1.msra.mxu0 0.0
  %2576 = vmatprep.subr.mxu0 0.0
  %2577 = vmatpush1.msra.mxu0 0.0
  %2578 = vmatprep.subr.mxu0 0.0
  %2579 = vmatpush1.msra.mxu0 0.0
  %2580 = vmatprep.subr.mxu0 0.0
  %2581 = vmatpush1.msra.mxu0 0.0
  %2582 = vmatprep.subr.mxu0 0.0
  %2583 = vmatpush1.msra.mxu0 0.0
  %2584 = vmatprep.subr.mxu0 0.0
  %2585 = vmatpush1.msra.mxu0 0.0
  %2586 = vmatprep.subr.mxu0 0.0
  %2587 = vmatpush1.msra.mxu0 0.0
  %2588 = vmatprep.subr.mxu0 0.0
  %2589 = vmatpush1.msra.mxu0 0.0
  %2590 = vmatprep.subr.mxu0 0.0
  %2591 = vmatpush1.msra.mxu0 0.0
  %2592 = vmatprep.subr.mxu0 0.0
  %2593 = vmatpush1.msra.mxu0 0.0
  %2594 = vmatprep.subr.mxu0 0.0
  %2595 = vmatpush1.msra.mxu0 0.0
  %2596 = vmatprep.subr.mxu0 0.0
  %2597 = vmatpush1.msra.mxu0 0.0
  %2598 = vmatprep.subr.mxu0 0.0
  %2599 = vmatpush1.msra.mxu0 0.0
  %2600 = vmatprep.subr.mxu0 0.0
  %2601 = vmatpush1.msra.mxu0 0.0
  %2602 = vmatprep.subr.mxu0 0.0
  %2603 = vmatpush1.msra.mxu0 %v923
  %2604 = vmatprep.subr.mxu0 0.0
  %2605 = vmatpush1.msra.mxu0 %v922
  %2606 = vmatprep.subr.mxu0 0.0
  %2607 = vmatpush2.msra.mxu0 0.0
  %2608 = vmatprep.subr.mxu0 0.0
  %2609 = vmatpush2.msra.mxu0 0.0
  %2610 = vmatprep.subr.mxu0 0.0
  %2611 = vmatpush2.msra.mxu0 0.0
  %2612 = vmatprep.subr.mxu0 0.0
  %2613 = vmatpush2.msra.mxu0 0.0
  %2614 = vmatprep.subr.mxu0 0.0
  %2615 = vmatpush2.msra.mxu0 0.0
  %2616 = vmatprep.subr.mxu0 0.0
  %2617 = vmatpush2.msra.mxu0 0.0
  %2618 = vmatprep.subr.mxu0 0.0
  %2619 = vmatpush2.msra.mxu0 0.0
  %2620 = vmatprep.subr.mxu0 0.0
  %2621 = vmatpush2.msra.mxu0 0.0
  %2622 = vmatprep.subr.mxu0 0.0
  %2623 = vmatpush2.msra.mxu0 0.0
  %2624 = vmatprep.subr.mxu0 0.0
  %2625 = vmatpush2.msra.mxu0 0.0
  %2626 = vmatprep.subr.mxu0 0.0
  %2627 = vmatpush2.msra.mxu0 0.0
  %2628 = vmatprep.subr.mxu0 0.0
  %2629 = vmatpush2.msra.mxu0 0.0
  %2630 = vmatprep.subr.mxu0 0.0
  %2631 = vmatpush2.msra.mxu0 0.0
  %2632 = vmatprep.subr.mxu0 0.0
  %2633 = vmatpush2.msra.mxu0 0.0
  %2634 = vmatprep.subr.mxu0 0.0
  %2635 = vmatpush2.msra.mxu0 0.0
  %2636 = vmatprep.subr.mxu0 0.0
  %2637 = vmatpush2.msra.mxu0 0.0
  %2638 = vmatprep.mubr.f32.mxu0 0.0
  %2639 = vmatmul.mubr.f32.gmra.mxu0 %v2572
  %v2640 = vpop.f32.mrf.mxu0
  %v2641 = vadd.f32 %v929, %v2640
  %v2642 = vpop.f32.mrf.mxu0
  %2643 = vdwg.mxu0
  %2645 = vrot.lane.b32.xlu0 %v2641, 80
  %v2646 = vpop.permute.xlu0 %2645
  %v2648 = vadd.f32 %v2641, %v2646
  %v2649 = vxor.u32 %v2648, 2147483648
  %v2650 = vmul.f32 %v2649, 1.442695
  %v2651 = vpow.pop %v2650
  %v2652 = vadd.f32 %v2651, 1.0
  %v2653 = vrcp.pop %v2652
  %v2654 = vmul.f32 1.0, %v2653
  %2655 = vrot.lane.b32.xlu0 %v2641, 64
  %v2656 = vpop.permute.xlu0 %2655
  %v2658 = vmul.f32 %v2654, %v2656
  %2660 = vrot.lane.b32.xlu0 %v2658, 16
  %v2661 = vpop.permute.xlu0 %2660
  %v2663 = vadd.f32 %v2641, %v2661
  %v2664 = vtanh.pop %v2663
  %v2665 = vsub.f32 1.0, %v2654
  %2667 = vrot.lane.b32.xlu0 %v2664, 120
  %v2668 = vpop.permute.xlu0 %2667
  %v2670 = vmul.f32 %v2665, %v2668
  %v2671 = vmul.f32 %v2654, %v2525
  %v2672 = vadd.f32 %v2670, %v2671
  %2674 = vrot.lane.b32.xlu0 %v2672, 80
  %v2675 = vpop.permute.xlu0 %2674
  %vm2677 = vcmask 779968
  %2678 = vst.msk [vmem:[%s14] sm:$0x3] %vm2677, %v2675
  %2679 = vrot.lane.b32.xlu0 %v2641, 104
  %v2680 = vpop.permute.xlu0 %2679
  %v2682 = vadd.f32 %v919, %v2680
  %v2683 = vxor.u32 %v2682, 2147483648
  %v2684 = vmul.f32 %v2683, 1.442695
  %v2685 = vpow.pop %v2684
  %v2686 = vadd.f32 %v2685, 1.0
  %v2687 = vrcp.pop %v2686
  %v2688 = vmul.f32 1.0, %v2687
  %2689 = vrot.lane.b32.xlu0 %v2641, 88
  %v2690 = vpop.permute.xlu0 %2689
  %v2692 = vmul.f32 %v2688, %v2690
  %2694 = vrot.lane.b32.xlu0 %v2692, 16
  %v2695 = vpop.permute.xlu0 %2694
  %v2697 = vadd.f32 %v919, %v2695
  %v2698 = vtanh.pop %v2697
  %v2699 = vsub.f32 1.0, %v2688
  %2701 = vrot.lane.b32.xlu0 %v2698, 120
  %v2702 = vpop.permute.xlu0 %2701
  %v2704 = vmul.f32 %v2699, %v2702
  %v2705 = vrot.slane %v2562, 6
  %v2707 = vmul.f32 %v2688, %v2705
  %v2708 = vadd.f32 %v2704, %v2707
  %2710 = vrot.lane.b32.xlu0 %v2708, 120
  %v2711 = vpop.permute.xlu0 %2710
  %v2713 = vsel %vm152, %v2711, %v2672
  %v2715 = vsel %vm964, %v2713, 0
  %2717 = vmatprep.subr.mxu0 0.0
  %2718 = vmatpush1.msra.mxu0 0.0
  %2719 = vmatprep.subr.mxu0 0.0
  %2720 = vmatpush1.msra.mxu0 0.0
  %2721 = vmatprep.subr.mxu0 0.0
  %2722 = vmatpush1.msra.mxu0 0.0
  %2723 = vmatprep.subr.mxu0 0.0
  %2724 = vmatpush1.msra.mxu0 0.0
  %2725 = vmatprep.subr.mxu0 0.0
  %2726 = vmatpush1.msra.mxu0 0.0
  %2727 = vmatprep.subr.mxu0 0.0
  %2728 = vmatpush1.msra.mxu0 0.0
  %2729 = vmatprep.subr.mxu0 0.0
  %2730 = vmatpush1.msra.mxu0 0.0
  %2731 = vmatprep.subr.mxu0 0.0
  %2732 = vmatpush1.msra.mxu0 0.0
  %2733 = vmatprep.subr.mxu0 0.0
  %2734 = vmatpush1.msra.mxu0 0.0
  %2735 = vmatprep.subr.mxu0 0.0
  %2736 = vmatpush1.msra.mxu0 0.0
  %2737 = vmatprep.subr.mxu0 0.0
  %2738 = vmatpush1.msra.mxu0 0.0
  %2739 = vmatprep.subr.mxu0 0.0
  %2740 = vmatpush1.msra.mxu0 0.0
  %2741 = vmatprep.subr.mxu0 0.0
  %2742 = vmatpush1.msra.mxu0 0.0
  %2743 = vmatprep.subr.mxu0 0.0
  %2744 = vmatpush1.msra.mxu0 0.0
  %2745 = vmatprep.subr.mxu0 0.0
  %2746 = vmatpush1.msra.mxu0 %v923
  %2747 = vmatprep.subr.mxu0 0.0
  %2748 = vmatpush1.msra.mxu0 %v922
  %2749 = vmatprep.subr.mxu0 0.0
  %2750 = vmatpush2.msra.mxu0 0.0
  %2751 = vmatprep.subr.mxu0 0.0
  %2752 = vmatpush2.msra.mxu0 0.0
  %2753 = vmatprep.subr.mxu0 0.0
  %2754 = vmatpush2.msra.mxu0 0.0
  %2755 = vmatprep.subr.mxu0 0.0
  %2756 = vmatpush2.msra.mxu0 0.0
  %2757 = vmatprep.subr.mxu0 0.0
  %2758 = vmatpush2.msra.mxu0 0.0
  %2759 = vmatprep.subr.mxu0 0.0
  %2760 = vmatpush2.msra.mxu0 0.0
  %2761 = vmatprep.subr.mxu0 0.0
  %2762 = vmatpush2.msra.mxu0 0.0
  %2763 = vmatprep.subr.mxu0 0.0
  %2764 = vmatpush2.msra.mxu0 0.0
  %2765 = vmatprep.subr.mxu0 0.0
  %2766 = vmatpush2.msra.mxu0 0.0
  %2767 = vmatprep.subr.mxu0 0.0
  %2768 = vmatpush2.msra.mxu0 0.0
  %2769 = vmatprep.subr.mxu0 0.0
  %2770 = vmatpush2.msra.mxu0 0.0
  %2771 = vmatprep.subr.mxu0 0.0
  %2772 = vmatpush2.msra.mxu0 0.0
  %2773 = vmatprep.subr.mxu0 0.0
  %2774 = vmatpush2.msra.mxu0 0.0
  %2775 = vmatprep.subr.mxu0 0.0
  %2776 = vmatpush2.msra.mxu0 0.0
  %2777 = vmatprep.subr.mxu0 0.0
  %2778 = vmatpush2.msra.mxu0 0.0
  %2779 = vmatprep.subr.mxu0 0.0
  %2780 = vmatpush2.msra.mxu0 0.0
  %2781 = vmatprep.mubr.f32.mxu0 0.0
  %2782 = vmatmul.mubr.f32.gmra.mxu0 %v2715
  %v2783 = vpop.f32.mrf.mxu0
  %v2784 = vadd.f32 %v929, %v2783
  %v2785 = vpop.f32.mrf.mxu0
  %2786 = vdwg.mxu0
  %2788 = vrot.lane.b32.xlu0 %v2784, 80
  %v2789 = vpop.permute.xlu0 %2788
  %v2791 = vadd.f32 %v2784, %v2789
  %v2792 = vxor.u32 %v2791, 2147483648
  %v2793 = vmul.f32 %v2792, 1.442695
  %v2794 = vpow.pop %v2793
  %v2795 = vadd.f32 %v2794, 1.0
  %v2796 = vrcp.pop %v2795
  %v2797 = vmul.f32 1.0, %v2796
  %2798 = vrot.lane.b32.xlu0 %v2784, 64
  %v2799 = vpop.permute.xlu0 %2798
  %v2801 = vmul.f32 %v2797, %v2799
  %2803 = vrot.lane.b32.xlu0 %v2801, 16
  %v2804 = vpop.permute.xlu0 %2803
  %v2806 = vadd.f32 %v2784, %v2804
  %v2807 = vtanh.pop %v2806
  %v2808 = vsub.f32 1.0, %v2797
  %2810 = vrot.lane.b32.xlu0 %v2807, 120
  %v2811 = vpop.permute.xlu0 %2810
  %v2813 = vmul.f32 %v2808, %v2811
  %v2814 = vmul.f32 %v2797, %v2672
  %v2815 = vadd.f32 %v2813, %v2814
  %2817 = vrot.lane.b32.xlu0 %v2815, 88
  %v2818 = vpop.permute.xlu0 %2817
  %vm2820 = vcmask 845568
  %2821 = vst.msk [vmem:[%s14] sm:$0x3] %vm2820, %v2818
  %v2822 = vrot.slane %v2784, 6
  %2823 = vrot.lane.b32.xlu0 %v2822, 104
  %v2824 = vpop.permute.xlu0 %2823
  %v2826 = vadd.f32 %v919, %v2824
  %v2827 = vxor.u32 %v2826, 2147483648
  %v2828 = vmul.f32 %v2827, 1.442695
  %v2829 = vpow.pop %v2828
  %v2830 = vadd.f32 %v2829, 1.0
  %v2831 = vrcp.pop %v2830
  %v2832 = vmul.f32 1.0, %v2831
  %2833 = vrot.lane.b32.xlu0 %v2822, 88
  %v2834 = vpop.permute.xlu0 %2833
  %v2836 = vmul.f32 %v2832, %v2834
  %2838 = vrot.lane.b32.xlu0 %v2836, 16
  %v2839 = vpop.permute.xlu0 %2838
  %v2841 = vadd.f32 %v919, %v2839
  %v2842 = vtanh.pop %v2841
  %v2843 = vsub.f32 1.0, %v2832
  %2845 = vrot.lane.b32.xlu0 %v2842, 120
  %v2846 = vpop.permute.xlu0 %2845
  %v2848 = vmul.f32 %v2843, %v2846
  %v2849 = vrot.slane %v2708, 6
  %v2851 = vmul.f32 %v2832, %v2849
  %v2852 = vadd.f32 %v2848, %v2851
  %2854 = vrot.lane.b32.xlu0 %v2852, 120
  %v2855 = vpop.permute.xlu0 %2854
  %v2857 = vrot.slane %v2815, 6
  %v2859 = vsel %vm152, %v2855, %v2857
  %v2861 = vrot.slane %v2859, 2
  %v2862 = vsel %vm964, %v2861, 0
  %2864 = vmatprep.subr.mxu0 0.0
  %2865 = vmatpush1.msra.mxu0 0.0
  %2866 = vmatprep.subr.mxu0 0.0
  %2867 = vmatpush1.msra.mxu0 0.0
  %2868 = vmatprep.subr.mxu0 0.0
  %2869 = vmatpush1.msra.mxu0 0.0
  %2870 = vmatprep.subr.mxu0 0.0
  %2871 = vmatpush1.msra.mxu0 0.0
  %2872 = vmatprep.subr.mxu0 0.0
  %2873 = vmatpush1.msra.mxu0 0.0
  %2874 = vmatprep.subr.mxu0 0.0
  %2875 = vmatpush1.msra.mxu0 0.0
  %2876 = vmatprep.subr.mxu0 0.0
  %2877 = vmatpush1.msra.mxu0 0.0
  %2878 = vmatprep.subr.mxu0 0.0
  %2879 = vmatpush1.msra.mxu0 0.0
  %2880 = vmatprep.subr.mxu0 0.0
  %2881 = vmatpush1.msra.mxu0 0.0
  %2882 = vmatprep.subr.mxu0 0.0
  %2883 = vmatpush1.msra.mxu0 0.0
  %2884 = vmatprep.subr.mxu0 0.0
  %2885 = vmatpush1.msra.mxu0 0.0
  %2886 = vmatprep.subr.mxu0 0.0
  %2887 = vmatpush1.msra.mxu0 0.0
  %2888 = vmatprep.subr.mxu0 0.0
  %2889 = vmatpush1.msra.mxu0 0.0
  %2890 = vmatprep.subr.mxu0 0.0
  %2891 = vmatpush1.msra.mxu0 0.0
  %2892 = vmatprep.subr.mxu0 0.0
  %2893 = vmatpush1.msra.mxu0 %v923
  %2894 = vmatprep.subr.mxu0 0.0
  %2895 = vmatpush1.msra.mxu0 %v922
  %2896 = vmatprep.subr.mxu0 0.0
  %2897 = vmatpush2.msra.mxu0 0.0
  %2898 = vmatprep.subr.mxu0 0.0
  %2899 = vmatpush2.msra.mxu0 0.0
  %2900 = vmatprep.subr.mxu0 0.0
  %2901 = vmatpush2.msra.mxu0 0.0
  %2902 = vmatprep.subr.mxu0 0.0
  %2903 = vmatpush2.msra.mxu0 0.0
  %2904 = vmatprep.subr.mxu0 0.0
  %2905 = vmatpush2.msra.mxu0 0.0
  %2906 = vmatprep.subr.mxu0 0.0
  %2907 = vmatpush2.msra.mxu0 0.0
  %2908 = vmatprep.subr.mxu0 0.0
  %2909 = vmatpush2.msra.mxu0 0.0
  %2910 = vmatprep.subr.mxu0 0.0
  %2911 = vmatpush2.msra.mxu0 0.0
  %2912 = vmatprep.subr.mxu0 0.0
  %2913 = vmatpush2.msra.mxu0 0.0
  %2914 = vmatprep.subr.mxu0 0.0
  %2915 = vmatpush2.msra.mxu0 0.0
  %2916 = vmatprep.subr.mxu0 0.0
  %2917 = vmatpush2.msra.mxu0 0.0
  %2918 = vmatprep.subr.mxu0 0.0
  %2919 = vmatpush2.msra.mxu0 0.0
  %2920 = vmatprep.subr.mxu0 0.0
  %2921 = vmatpush2.msra.mxu0 0.0
  %2922 = vmatprep.subr.mxu0 0.0
  %2923 = vmatpush2.msra.mxu0 0.0
  %2924 = vmatprep.subr.mxu0 0.0
  %2925 = vmatpush2.msra.mxu0 0.0
  %2926 = vmatprep.subr.mxu0 0.0
  %2927 = vmatpush2.msra.mxu0 0.0
  %2928 = vmatprep.mubr.f32.mxu0 0.0
  %2929 = vmatmul.mubr.f32.gmra.mxu0 %v2862
  %v2930 = vpop.f32.mrf.mxu0
  %v2931 = vadd.f32 %v929, %v2930
  %v2932 = vpop.f32.mrf.mxu0
  %2933 = vdwg.mxu0
  %2935 = vrot.lane.b32.xlu0 %v2931, 80
  %v2936 = vpop.permute.xlu0 %2935
  %v2938 = vadd.f32 %v2931, %v2936
  %v2939 = vxor.u32 %v2938, 2147483648
  %v2940 = vmul.f32 %v2939, 1.442695
  %v2941 = vpow.pop %v2940
  %v2942 = vadd.f32 %v2941, 1.0
  %v2943 = vrcp.pop %v2942
  %v2944 = vmul.f32 1.0, %v2943
  %2945 = vrot.lane.b32.xlu0 %v2931, 64
  %v2946 = vpop.permute.xlu0 %2945
  %v2948 = vmul.f32 %v2944, %v2946
  %2950 = vrot.lane.b32.xlu0 %v2948, 16
  %v2951 = vpop.permute.xlu0 %2950
  %v2953 = vadd.f32 %v2931, %v2951
  %v2954 = vtanh.pop %v2953
  %v2955 = vsub.f32 1.0, %v2944
  %2957 = vrot.lane.b32.xlu0 %v2954, 120
  %v2958 = vpop.permute.xlu0 %2957
  %v2960 = vmul.f32 %v2955, %v2958
  %v2961 = vmul.f32 %v2944, %v2815
  %v2962 = vadd.f32 %v2960, %v2961
  %2964 = vrot.lane.b32.xlu0 %v2962, 96
  %v2965 = vpop.permute.xlu0 %2964
  %vm2967 = vcmask 911168
  %2968 = vst.msk [vmem:[%s14] sm:$0x3] %vm2967, %v2965
  %v2969 = vrot.slane %v2931, 4
  %2970 = vrot.lane.b32.xlu0 %v2969, 104
  %v2971 = vpop.permute.xlu0 %2970
  %v2973 = vadd.f32 %v919, %v2971
  %v2974 = vxor.u32 %v2973, 2147483648
  %v2975 = vmul.f32 %v2974, 1.442695
  %v2976 = vpow.pop %v2975
  %v2977 = vadd.f32 %v2976, 1.0
  %v2978 = vrcp.pop %v2977
  %v2979 = vmul.f32 1.0, %v2978
  %2980 = vrot.lane.b32.xlu0 %v2969, 88
  %v2981 = vpop.permute.xlu0 %2980
  %v2983 = vmul.f32 %v2979, %v2981
  %2985 = vrot.lane.b32.xlu0 %v2983, 16
  %v2986 = vpop.permute.xlu0 %2985
  %v2988 = vadd.f32 %v919, %v2986
  %v2989 = vtanh.pop %v2988
  %v2990 = vsub.f32 1.0, %v2979
  %2992 = vrot.lane.b32.xlu0 %v2989, 120
  %v2993 = vpop.permute.xlu0 %2992
  %v2995 = vmul.f32 %v2990, %v2993
  %v2996 = vrot.slane %v2852, 6
  %v2998 = vmul.f32 %v2979, %v2996
  %v2999 = vadd.f32 %v2995, %v2998
  %3001 = vrot.lane.b32.xlu0 %v2999, 120
  %v3002 = vpop.permute.xlu0 %3001
  %v3004 = vrot.slane %v2962, 4
  %v3006 = vsel %vm152, %v3002, %v3004
  %v3008 = vrot.slane %v3006, 4
  %v3009 = vsel %vm964, %v3008, 0
  %3011 = vmatprep.subr.mxu0 0.0
  %3012 = vmatpush1.msra.mxu0 0.0
  %3013 = vmatprep.subr.mxu0 0.0
  %3014 = vmatpush1.msra.mxu0 0.0
  %3015 = vmatprep.subr.mxu0 0.0
  %3016 = vmatpush1.msra.mxu0 0.0
  %3017 = vmatprep.subr.mxu0 0.0
  %3018 = vmatpush1.msra.mxu0 0.0
  %3019 = vmatprep.subr.mxu0 0.0
  %3020 = vmatpush1.msra.mxu0 0.0
  %3021 = vmatprep.subr.mxu0 0.0
  %3022 = vmatpush1.msra.mxu0 0.0
  %3023 = vmatprep.subr.mxu0 0.0
  %3024 = vmatpush1.msra.mxu0 0.0
  %3025 = vmatprep.subr.mxu0 0.0
  %3026 = vmatpush1.msra.mxu0 0.0
  %3027 = vmatprep.subr.mxu0 0.0
  %3028 = vmatpush1.msra.mxu0 0.0
  %3029 = vmatprep.subr.mxu0 0.0
  %3030 = vmatpush1.msra.mxu0 0.0
  %3031 = vmatprep.subr.mxu0 0.0
  %3032 = vmatpush1.msra.mxu0 0.0
  %3033 = vmatprep.subr.mxu0 0.0
  %3034 = vmatpush1.msra.mxu0 0.0
  %3035 = vmatprep.subr.mxu0 0.0
  %3036 = vmatpush1.msra.mxu0 0.0
  %3037 = vmatprep.subr.mxu0 0.0
  %3038 = vmatpush1.msra.mxu0 0.0
  %3039 = vmatprep.subr.mxu0 0.0
  %3040 = vmatpush1.msra.mxu0 %v923
  %3041 = vmatprep.subr.mxu0 0.0
  %3042 = vmatpush1.msra.mxu0 %v922
  %3043 = vmatprep.subr.mxu0 0.0
  %3044 = vmatpush2.msra.mxu0 0.0
  %3045 = vmatprep.subr.mxu0 0.0
  %3046 = vmatpush2.msra.mxu0 0.0
  %3047 = vmatprep.subr.mxu0 0.0
  %3048 = vmatpush2.msra.mxu0 0.0
  %3049 = vmatprep.subr.mxu0 0.0
  %3050 = vmatpush2.msra.mxu0 0.0
  %3051 = vmatprep.subr.mxu0 0.0
  %3052 = vmatpush2.msra.mxu0 0.0
  %3053 = vmatprep.subr.mxu0 0.0
  %3054 = vmatpush2.msra.mxu0 0.0
  %3055 = vmatprep.subr.mxu0 0.0
  %3056 = vmatpush2.msra.mxu0 0.0
  %3057 = vmatprep.subr.mxu0 0.0
  %3058 = vmatpush2.msra.mxu0 0.0
  %3059 = vmatprep.subr.mxu0 0.0
  %3060 = vmatpush2.msra.mxu0 0.0
  %3061 = vmatprep.subr.mxu0 0.0
  %3062 = vmatpush2.msra.mxu0 0.0
  %3063 = vmatprep.subr.mxu0 0.0
  %3064 = vmatpush2.msra.mxu0 0.0
  %3065 = vmatprep.subr.mxu0 0.0
  %3066 = vmatpush2.msra.mxu0 0.0
  %3067 = vmatprep.subr.mxu0 0.0
  %3068 = vmatpush2.msra.mxu0 0.0
  %3069 = vmatprep.subr.mxu0 0.0
  %3070 = vmatpush2.msra.mxu0 0.0
  %3071 = vmatprep.subr.mxu0 0.0
  %3072 = vmatpush2.msra.mxu0 0.0
  %3073 = vmatprep.subr.mxu0 0.0
  %3074 = vmatpush2.msra.mxu0 0.0
  %3075 = vmatprep.mubr.f32.mxu0 0.0
  %3076 = vmatmul.mubr.f32.gmra.mxu0 %v3009
  %v3077 = vpop.f32.mrf.mxu0
  %v3078 = vadd.f32 %v929, %v3077
  %v3079 = vpop.f32.mrf.mxu0
  %3080 = vdwg.mxu0
  %3082 = vrot.lane.b32.xlu0 %v3078, 80
  %v3083 = vpop.permute.xlu0 %3082
  %v3085 = vadd.f32 %v3078, %v3083
  %v3086 = vxor.u32 %v3085, 2147483648
  %v3087 = vmul.f32 %v3086, 1.442695
  %v3088 = vpow.pop %v3087
  %v3089 = vadd.f32 %v3088, 1.0
  %v3090 = vrcp.pop %v3089
  %v3091 = vmul.f32 1.0, %v3090
  %3092 = vrot.lane.b32.xlu0 %v3078, 64
  %v3093 = vpop.permute.xlu0 %3092
  %v3095 = vmul.f32 %v3091, %v3093
  %3097 = vrot.lane.b32.xlu0 %v3095, 16
  %v3098 = vpop.permute.xlu0 %3097
  %v3100 = vadd.f32 %v3078, %v3098
  %v3101 = vtanh.pop %v3100
  %v3102 = vsub.f32 1.0, %v3091
  %3104 = vrot.lane.b32.xlu0 %v3101, 120
  %v3105 = vpop.permute.xlu0 %3104
  %v3107 = vmul.f32 %v3102, %v3105
  %v3108 = vmul.f32 %v3091, %v2962
  %v3109 = vadd.f32 %v3107, %v3108
  %3111 = vrot.lane.b32.xlu0 %v3109, 104
  %v3112 = vpop.permute.xlu0 %3111
  %vm3114 = vcmask 976768
  %3115 = vst.msk [vmem:[%s14] sm:$0x3] %vm3114, %v3112
  %v3116 = vrot.slane %v3078, 2
  %3117 = vrot.lane.b32.xlu0 %v3116, 104
  %v3118 = vpop.permute.xlu0 %3117
  %v3120 = vadd.f32 %v919, %v3118
  %v3121 = vxor.u32 %v3120, 2147483648
  %v3122 = vmul.f32 %v3121, 1.442695
  %v3123 = vpow.pop %v3122
  %v3124 = vadd.f32 %v3123, 1.0
  %v3125 = vrcp.pop %v3124
  %v3126 = vmul.f32 1.0, %v3125
  %3127 = vrot.lane.b32.xlu0 %v3116, 88
  %v3128 = vpop.permute.xlu0 %3127
  %v3130 = vmul.f32 %v3126, %v3128
  %3132 = vrot.lane.b32.xlu0 %v3130, 16
  %v3133 = vpop.permute.xlu0 %3132
  %v3135 = vadd.f32 %v919, %v3133
  %v3136 = vtanh.pop %v3135
  %v3137 = vsub.f32 1.0, %v3126
  %3139 = vrot.lane.b32.xlu0 %v3136, 120
  %v3140 = vpop.permute.xlu0 %3139
  %v3142 = vmul.f32 %v3137, %v3140
  %v3143 = vrot.slane %v2999, 6
  %v3145 = vmul.f32 %v3126, %v3143
  %v3146 = vadd.f32 %v3142, %v3145
  %3148 = vrot.lane.b32.xlu0 %v3146, 120
  %v3149 = vpop.permute.xlu0 %3148
  %v3151 = vrot.slane %v3109, 2
  %v3153 = vsel %vm152, %v3149, %v3151
  %v3155 = vrot.slane %v3153, 6
  %v3156 = vsel %vm964, %v3155, 0
  %3158 = vmatprep.subr.mxu0 0.0
  %3159 = vmatpush1.msra.mxu0 0.0
  %3160 = vmatprep.subr.mxu0 0.0
  %3161 = vmatpush1.msra.mxu0 0.0
  %3162 = vmatprep.subr.mxu0 0.0
  %3163 = vmatpush1.msra.mxu0 0.0
  %3164 = vmatprep.subr.mxu0 0.0
  %3165 = vmatpush1.msra.mxu0 0.0
  %3166 = vmatprep.subr.mxu0 0.0
  %3167 = vmatpush1.msra.mxu0 0.0
  %3168 = vmatprep.subr.mxu0 0.0
  %3169 = vmatpush1.msra.mxu0 0.0
  %3170 = vmatprep.subr.mxu0 0.0
  %3171 = vmatpush1.msra.mxu0 0.0
  %3172 = vmatprep.subr.mxu0 0.0
  %3173 = vmatpush1.msra.mxu0 0.0
  %3174 = vmatprep.subr.mxu0 0.0
  %3175 = vmatpush1.msra.mxu0 0.0
  %3176 = vmatprep.subr.mxu0 0.0
  %3177 = vmatpush1.msra.mxu0 0.0
  %3178 = vmatprep.subr.mxu0 0.0
  %3179 = vmatpush1.msra.mxu0 0.0
  %3180 = vmatprep.subr.mxu0 0.0
  %3181 = vmatpush1.msra.mxu0 0.0
  %3182 = vmatprep.subr.mxu0 0.0
  %3183 = vmatpush1.msra.mxu0 0.0
  %3184 = vmatprep.subr.mxu0 0.0
  %3185 = vmatpush1.msra.mxu0 0.0
  %3186 = vmatprep.subr.mxu0 0.0
  %3187 = vmatpush1.msra.mxu0 %v923
  %3188 = vmatprep.subr.mxu0 0.0
  %3189 = vmatpush1.msra.mxu0 %v922
  %3190 = vmatprep.subr.mxu0 0.0
  %3191 = vmatpush2.msra.mxu0 0.0
  %3192 = vmatprep.subr.mxu0 0.0
  %3193 = vmatpush2.msra.mxu0 0.0
  %3194 = vmatprep.subr.mxu0 0.0
  %3195 = vmatpush2.msra.mxu0 0.0
  %3196 = vmatprep.subr.mxu0 0.0
  %3197 = vmatpush2.msra.mxu0 0.0
  %3198 = vmatprep.subr.mxu0 0.0
  %3199 = vmatpush2.msra.mxu0 0.0
  %3200 = vmatprep.subr.mxu0 0.0
  %3201 = vmatpush2.msra.mxu0 0.0
  %3202 = vmatprep.subr.mxu0 0.0
  %3203 = vmatpush2.msra.mxu0 0.0
  %3204 = vmatprep.subr.mxu0 0.0
  %3205 = vmatpush2.msra.mxu0 0.0
  %3206 = vmatprep.subr.mxu0 0.0
  %3207 = vmatpush2.msra.mxu0 0.0
  %3208 = vmatprep.subr.mxu0 0.0
  %3209 = vmatpush2.msra.mxu0 0.0
  %3210 = vmatprep.subr.mxu0 0.0
  %3211 = vmatpush2.msra.mxu0 0.0
  %3212 = vmatprep.subr.mxu0 0.0
  %3213 = vmatpush2.msra.mxu0 0.0
  %3214 = vmatprep.subr.mxu0 0.0
  %3215 = vmatpush2.msra.mxu0 0.0
  %3216 = vmatprep.subr.mxu0 0.0
  %3217 = vmatpush2.msra.mxu0 0.0
  %3218 = vmatprep.subr.mxu0 0.0
  %3219 = vmatpush2.msra.mxu0 0.0
  %3220 = vmatprep.subr.mxu0 0.0
  %3221 = vmatpush2.msra.mxu0 0.0
  %3222 = vmatprep.mubr.f32.mxu0 0.0
  %3223 = vmatmul.mubr.f32.gmra.mxu0 %v3156
  %v3224 = vpop.f32.mrf.mxu0
  %v3225 = vadd.f32 %v929, %v3224
  %v3226 = vpop.f32.mrf.mxu0
  %3227 = vdwg.mxu0
  %3229 = vrot.lane.b32.xlu0 %v3225, 80
  %v3230 = vpop.permute.xlu0 %3229
  %v3232 = vadd.f32 %v3225, %v3230
  %v3233 = vxor.u32 %v3232, 2147483648
  %v3234 = vmul.f32 %v3233, 1.442695
  %v3235 = vpow.pop %v3234
  %v3236 = vadd.f32 %v3235, 1.0
  %v3237 = vrcp.pop %v3236
  %v3238 = vmul.f32 1.0, %v3237
  %3239 = vrot.lane.b32.xlu0 %v3225, 64
  %v3240 = vpop.permute.xlu0 %3239
  %v3242 = vmul.f32 %v3238, %v3240
  %3244 = vrot.lane.b32.xlu0 %v3242, 16
  %v3245 = vpop.permute.xlu0 %3244
  %v3247 = vadd.f32 %v3225, %v3245
  %v3248 = vtanh.pop %v3247
  %v3249 = vsub.f32 1.0, %v3238
  %3251 = vrot.lane.b32.xlu0 %v3248, 120
  %v3252 = vpop.permute.xlu0 %3251
  %v3254 = vmul.f32 %v3249, %v3252
  %v3255 = vmul.f32 %v3238, %v3109
  %v3256 = vadd.f32 %v3254, %v3255
  %3258 = vrot.lane.b32.xlu0 %v3256, 112
  %v3259 = vpop.permute.xlu0 %3258
  %vm3261 = vcmask 1042368
  %3262 = vst.msk [vmem:[%s14] sm:$0x3] %vm3261, %v3259
  // Predicated region
  $region58: #{recur_atn_decoder_forward.1} parent=0 // pred_check
    _
  $region59: #{recur_atn_decoder_forward.1} parent=0 // pred_check_branch
    %3264 = sbr.rel (0) target = $region61
  $region60: #{recur_atn_decoder_forward.1} parent=0 // pred_region
    _
  $region61: #{recur_atn_decoder_forward.1} parent=0 // pred_fallthru
    _
  // Predicated region
  $region62: #{recur_atn_decoder_forward.1} parent=0 // pred_check
    _
  $region63: #{recur_atn_decoder_forward.1} parent=0 // pred_check_branch
    %3266 = sbr.rel (0) target = $region65
  $region64: #{recur_atn_decoder_forward.1} parent=0 // pred_region
    _
  $region65: #{recur_atn_decoder_forward.1} parent=0 // pred_fallthru
    _

</llo_original>
